<compile_context>
chip_gen: v5e
topology: v5e:2x2
jax: 0.10.0
libtpu: 0.0.40
codegen_flags: <defaults>
</compile_context>

<pallas_src>
import functools

import jax
import jax.numpy as jnp
from jax import lax
from jax.experimental import pallas as pl
from jax.experimental.pallas import tpu as pltpu

_VMEM_LIMIT = 32 * 1024 * 1024   # fits default/physical VMEM on v5e/v6e/v7x


def _round_up(x, m):
    return ((x + m - 1) // m) * m


def _largest_divisor_leq(n, cap):
    cap = max(1, min(n, cap))
    for d in range(cap, 0, -1):
        if n % d == 0:
            return d
    return 1


def _num_batch_blocks(Bp):
    # v7x megacore: split the independent batch recurrence across 2 cores,
    # but only when each half still feeds the MXU reasonably (>=128 rows).
    return 2 if (Bp % 16 == 0 and Bp >= 256) else 1


# ---------------------------------------------------------------------------
# shared LSTM gate math (PyTorch order: i, f, g, o).
# Whole-vreg sigmoid/tanh (2 EUP passes) then gate slices.
# ---------------------------------------------------------------------------
def _lstm_gates(z, c, H):
    sg = jax.nn.sigmoid(z)
    th = jnp.tanh(z)
    i = sg[:, 0 * H:1 * H]
    f = sg[:, 1 * H:2 * H]
    g = th[:, 2 * H:3 * H]
    o = sg[:, 3 * H:4 * H]
    c_new = f * c + i * g
    h_new = o * jnp.tanh(c_new)
    return h_new, c_new


# ---------------------------------------------------------------------------
# kernel 1: forward LSTM over a time chunk (zero initial state).
# Used for enc0 forward direction and enc1.
# grid = (batch_blocks, time_chunks); time axis is "arbitrary" (carry).
# ---------------------------------------------------------------------------
def _lstm_fwd_chunk_kernel(x_ref, wih_ref, whh_ref, b_ref,
                           hseq_ref, xz_ref, h_sc, c_sc, *, TC, unroll):
    H = whh_ref.shape[0]
    Bb = x_ref.shape[1]
    F = x_ref.shape[2]
    t = pl.program_id(1)

    @pl.when(t == 0)
    def _():
        h_sc[...] = jnp.zeros_like(h_sc)
        c_sc[...] = jnp.zeros_like(c_sc)

    # hoisted input-side gate matmul for this chunk: one MXU matmul.
    x2 = x_ref[...].reshape(TC * Bb, F)
    xz = jnp.dot(x2, wih_ref[...], preferred_element_type=jnp.float32) + b_ref[...]
    xz_ref[...] = xz.reshape(TC, Bb, 4 * H)

    whh = whh_ref[...]

    def step(s, carry):
        h, c = carry
        z = xz_ref[s] + jnp.dot(h, whh, preferred_element_type=jnp.float32)
        h, c = _lstm_gates(z, c, H)
        hseq_ref[s] = h
        return (h, c)

    h, c = lax.fori_loop(0, TC, step, (h_sc[...], c_sc[...]), unroll=unroll)
    h_sc[...] = h
    c_sc[...] = c


def lstm_forward(x_tbf, w_ih, w_hh, b):
    T, Bp, F = x_tbf.shape
    H = w_hh.shape[0]
    NB = _num_batch_blocks(Bp)
    Bb = Bp // NB
    TC = _largest_divisor_leq(T, max(1, 512 // Bb))
    NT = T // TC
    kern = functools.partial(_lstm_fwd_chunk_kernel, TC=TC, unroll=min(TC, 8))
    return pl.pallas_call(
        kern,
        out_shape=jax.ShapeDtypeStruct((T, Bp, H), jnp.float32),
        grid=(NB, NT),
        in_specs=[pl.BlockSpec((TC, Bb, F), lambda b, t: (t, b, 0)),
                  pl.BlockSpec((F, 4 * H), lambda b, t: (0, 0)),
                  pl.BlockSpec((H, 4 * H), lambda b, t: (0, 0)),
                  pl.BlockSpec((1, 4 * H), lambda b, t: (0, 0))],
        out_specs=pl.BlockSpec((TC, Bb, H), lambda b, t: (t, b, 0)),
        scratch_shapes=[pltpu.VMEM((TC, Bb, 4 * H), jnp.float32),
                        pltpu.VMEM((Bb, H), jnp.float32),
                        pltpu.VMEM((Bb, H), jnp.float32)],
        compiler_params=pltpu.CompilerParams(
            dimension_semantics=("parallel", "arbitrary"),
            vmem_limit_bytes=_VMEM_LIMIT),
    )(x_tbf, w_ih, w_hh, b)


# ---------------------------------------------------------------------------
# kernel 2: backward LSTM over a time chunk, fused with the bidirectional sum
# enc_seq_0 = h_fwd + h_bwd.  Also emits the backward-direction final (h, c)
# (== cx_0[0][-1], cx_0[1][-1]).  Time chunks are visited in reverse.
# ---------------------------------------------------------------------------
def _lstm_bwd_add_chunk_kernel(x_ref, hf_ref, wih_ref, whh_ref, b_ref,
                               out_ref, hN_ref, cN_ref,
                               xz_ref, h_sc, c_sc, *, TC, unroll):
    H = whh_ref.shape[0]
    Bb = x_ref.shape[1]
    F = x_ref.shape[2]
    t = pl.program_id(1)

    @pl.when(t == 0)
    def _():
        h_sc[...] = jnp.zeros_like(h_sc)
        c_sc[...] = jnp.zeros_like(c_sc)

    x2 = x_ref[...].reshape(TC * Bb, F)
    xz = jnp.dot(x2, wih_ref[...], preferred_element_type=jnp.float32) + b_ref[...]
    xz_ref[...] = xz.reshape(TC, Bb, 4 * H)

    whh = whh_ref[...]

    def step(k, carry):
        h, c = carry
        s = TC - 1 - k
        z = xz_ref[s] + jnp.dot(h, whh, preferred_element_type=jnp.float32)
        h, c = _lstm_gates(z, c, H)
        out_ref[s] = hf_ref[s] + h
        return (h, c)

    h, c = lax.fori_loop(0, TC, step, (h_sc[...], c_sc[...]), unroll=unroll)
    h_sc[...] = h
    c_sc[...] = c
    hN_ref[...] = h
    cN_ref[...] = c


def lstm_backward_add(x_tbf, hf_tbh, w_ih, w_hh, b):
    T, Bp, F = x_tbf.shape
    H = w_hh.shape[0]
    NB = _num_batch_blocks(Bp)
    Bb = Bp // NB
    TC = _largest_divisor_leq(T, max(1, 512 // Bb))
    NT = T // TC
    kern = functools.partial(_lstm_bwd_add_chunk_kernel, TC=TC, unroll=min(TC, 8))
    rev = lambda b, t: (NT - 1 - t, b, 0)
    bat = lambda b, t: (b, 0)
    return pl.pallas_call(
        kern,
        out_shape=(jax.ShapeDtypeStruct((T, Bp, H), jnp.float32),
                   jax.ShapeDtypeStruct((Bp, H), jnp.float32),
                   jax.ShapeDtypeStruct((Bp, H), jnp.float32)),
        grid=(NB, NT),
        in_specs=[pl.BlockSpec((TC, Bb, F), rev),
                  pl.BlockSpec((TC, Bb, H), rev),
                  pl.BlockSpec((F, 4 * H), lambda b, t: (0, 0)),
                  pl.BlockSpec((H, 4 * H), lambda b, t: (0, 0)),
                  pl.BlockSpec((1, 4 * H), lambda b, t: (0, 0))],
        out_specs=(pl.BlockSpec((TC, Bb, H), rev),
                   pl.BlockSpec((Bb, H), bat),
                   pl.BlockSpec((Bb, H), bat)),
        scratch_shapes=[pltpu.VMEM((TC, Bb, 4 * H), jnp.float32),
                        pltpu.VMEM((Bb, H), jnp.float32),
                        pltpu.VMEM((Bb, H), jnp.float32)],
        compiler_params=pltpu.CompilerParams(
            dimension_semantics=("parallel", "arbitrary"),
            vmem_limit_bytes=_VMEM_LIMIT),
    )(x_tbf, hf_tbh, w_ih, w_hh, b)


# ---------------------------------------------------------------------------
# kernel 3: decoder recurrence (dec0 LSTMCell carrying (h,c), dec1 LSTMCell on
# cat([h1, enc_last2]) with zero state).  Emits h2 per step; the vocab
# projection runs later in a tiled kernel.  Time-chunked like the encoders.
# ---------------------------------------------------------------------------
def _dec_chunk_kernel(x_ref, wih0_ref, whh0_ref, b0_ref,
                      wih1h_ref, wih1e_ref, b1_ref,
                      h0_ref, c0_ref, el2_ref,
                      h2_ref, xz_ref, h_sc, c_sc, e_sc, *, TC, unroll):
    H = whh0_ref.shape[0]
    Bb = x_ref.shape[1]
    E = x_ref.shape[2]
    t = pl.program_id(1)

    @pl.when(t == 0)
    def _():
        h_sc[...] = h0_ref[...]
        c_sc[...] = c0_ref[...]
        e_sc[...] = el2_ref[...]     # dec_start_1(enc_last_1) at step 0

    x2 = x_ref[...].reshape(TC * Bb, E)
    xz = jnp.dot(x2, wih0_ref[...], preferred_element_type=jnp.float32) + b0_ref[...]
    xz_ref[...] = xz.reshape(TC, Bb, 4 * H)

    whh0 = whh0_ref[...]
    wih1h = wih1h_ref[...]
    wih1e = wih1e_ref[...]
    b1 = jnp.broadcast_to(b1_ref[...], (Bb, 4 * H))   # hoisted broadcast

    def step(s, carry):
        h1, c1, el2 = carry
        z0 = xz_ref[s] + jnp.dot(h1, whh0, preferred_element_type=jnp.float32)
        h1, c1 = _lstm_gates(z0, c1, H)
        # dec1 LSTMCell on cat([h1, el2]) with zero (h, c): concat split into
        # two dots; forget gate multiplies a zero cell state -> skipped.
        z1 = (jnp.dot(h1, wih1h, preferred_element_type=jnp.float32)
              + jnp.dot(el2, wih1e, preferred_element_type=jnp.float32) + b1)
        sg = jax.nn.sigmoid(z1)
        th = jnp.tanh(z1)
        i = sg[:, 0 * H:1 * H]
        g = th[:, 2 * H:3 * H]
        o = sg[:, 3 * H:4 * H]
        h2 = o * jnp.tanh(i * g)
        h2_ref[s] = h2
        # next step: enc_last2 <- new_dec_state2 (as returned by decode()).
        return (h1, c1, h2)

    h1, c1, el2 = lax.fori_loop(0, TC, step,
                                (h_sc[...], c_sc[...], e_sc[...]),
                                unroll=unroll)
    h_sc[...] = h1
    c_sc[...] = c1
    e_sc[...] = el2


def decoder(prev_tbe, h0, c0, el2_0, whh0, wih1_h, wih1_e, b1, wih0, b0):
    T, Bp, E = prev_tbe.shape
    H = whh0.shape[0]
    NB = _num_batch_blocks(Bp)
    Bb = Bp // NB
    TC = _largest_divisor_leq(T, max(1, 512 // Bb))
    NT = T // TC
    kern = functools.partial(_dec_chunk_kernel, TC=TC, unroll=min(TC, 8))
    full = lambda b, t: (0, 0)
    bat = lambda b, t: (b, 0)
    return pl.pallas_call(
        kern,
        out_shape=jax.ShapeDtypeStruct((T, Bp, H), jnp.float32),
        grid=(NB, NT),
        in_specs=[pl.BlockSpec((TC, Bb, E), lambda b, t: (t, b, 0)),
                  pl.BlockSpec((E, 4 * H), full),
                  pl.BlockSpec((H, 4 * H), full),
                  pl.BlockSpec((1, 4 * H), full),
                  pl.BlockSpec((H, 4 * H), full),
                  pl.BlockSpec((H, 4 * H), full),
                  pl.BlockSpec((1, 4 * H), full),
                  pl.BlockSpec((Bb, H), bat),
                  pl.BlockSpec((Bb, H), bat),
                  pl.BlockSpec((Bb, H), bat)],
        out_specs=pl.BlockSpec((TC, Bb, H), lambda b, t: (t, b, 0)),
        scratch_shapes=[pltpu.VMEM((TC, Bb, 4 * H), jnp.float32),
                        pltpu.VMEM((Bb, H), jnp.float32),
                        pltpu.VMEM((Bb, H), jnp.float32),
                        pltpu.VMEM((Bb, H), jnp.float32)],
        compiler_params=pltpu.CompilerParams(
            dimension_semantics=("parallel", "arbitrary"),
            vmem_limit_bytes=_VMEM_LIMIT),
    )(prev_tbe, wih0, whh0, b0, wih1_h, wih1_e, b1, h0, c0, el2_0)


# ---------------------------------------------------------------------------
# kernel 4a: vocab-tiled logits (bf16 operands, f32 accumulation) with an
# online running max / logsumexp accumulator over the vocab grid axis.
# kernel 4b: lane-dense logp = logits - lse.
# ---------------------------------------------------------------------------
def _logits_lse_kernel(h_ref, w_ref, b_ref, logits_ref, lse_ref, m_sc, l_sc):
    v = pl.program_id(1)

    @pl.when(v == 0)
    def _():
        m_sc[...] = jnp.full_like(m_sc, -jnp.inf)
        l_sc[...] = jnp.zeros_like(l_sc)

    logits = (jnp.dot(h_ref[...], w_ref[...], preferred_element_type=jnp.float32)
              + b_ref[...])
    logits_ref[...] = logits
    m_blk = jnp.max(logits, axis=-1, keepdims=True)
    m_new = jnp.maximum(m_sc[...], m_blk)
    l_sc[...] = (l_sc[...] * jnp.exp(m_sc[...] - m_new)
                 + jnp.sum(jnp.exp(logits - m_new), axis=-1, keepdims=True))
    m_sc[...] = m_new

    @pl.when(v == pl.num_programs(1) - 1)
    def _():
        lse = m_sc[...] + jnp.log(l_sc[...])
        lse_ref[...] = jnp.broadcast_to(lse, lse_ref.shape)


def _sub_lse_kernel(logits_ref, lse_ref, out_ref):
    out_ref[...] = logits_ref[...] - lse_ref[:, :1]


def logits_log_softmax(h2_2d, w_f32, b_f32):
    M, H = h2_2d.shape
    V = w_f32.shape[1]

    VT = min(2048, _round_up(V, 128))          # lane-dense vocab tile
    Vp = _round_up(V, VT)
    NV = Vp // VT
    ROWS = min(512, _round_up(M, 8))           # pad rows; no divisor heuristic
    Mp = _round_up(M, ROWS)
    NR = Mp // ROWS

    h = h2_2d
    if Mp != M:
        h = jnp.pad(h, ((0, Mp - M), (0, 0)))
    # precision flag: bf16 operands for the big matmul, f32 accumulation; the
    # max / exp / log path stays f32.
    h = h.astype(jnp.bfloat16)
    w = jnp.pad(w_f32, ((0, 0), (0, Vp - V))).astype(jnp.bfloat16)
    b = jnp.pad(b_f32, ((0, 0), (0, Vp - V)), constant_values=-1e30)

    logits, lse = pl.pallas_call(
        _logits_lse_kernel,
        out_shape=(jax.ShapeDtypeStruct((Mp, Vp), jnp.float32),
                   jax.ShapeDtypeStruct((Mp, 128), jnp.float32)),
        grid=(NR, NV),
        in_specs=[pl.BlockSpec((ROWS, H), lambda i, v: (i, 0)),
                  pl.BlockSpec((H, VT), lambda i, v: (0, v)),
                  pl.BlockSpec((1, VT), lambda i, v: (0, v))],
        out_specs=(pl.BlockSpec((ROWS, VT), lambda i, v: (i, v)),
                   pl.BlockSpec((ROWS, 128), lambda i, v: (i, 0))),
        scratch_shapes=[pltpu.VMEM((ROWS, 1), jnp.float32),
                        pltpu.VMEM((ROWS, 1), jnp.float32)],
        compiler_params=pltpu.CompilerParams(
            dimension_semantics=("parallel", "arbitrary"),
            vmem_limit_bytes=_VMEM_LIMIT),
    )(h, w, b)

    logp = pl.pallas_call(
        _sub_lse_kernel,
        out_shape=jax.ShapeDtypeStruct((Mp, Vp), jnp.float32),
        grid=(NR, NV),
        in_specs=[pl.BlockSpec((ROWS, VT), lambda i, v: (i, v)),
                  pl.BlockSpec((ROWS, 128), lambda i, v: (i, 0))],
        out_specs=pl.BlockSpec((ROWS, VT), lambda i, v: (i, v)),
        compiler_params=pltpu.CompilerParams(
            dimension_semantics=("parallel", "parallel"),
            vmem_limit_bytes=_VMEM_LIMIT),
    )(logits, lse)
    return logp[:M, :V]


# ---------------------------------------------------------------------------
# glue: infer_length (mask / cumsum of eos positions), int32 throughout
# ---------------------------------------------------------------------------
def infer_length(seq, eos_ix):
    is_eos = (seq == eos_ix).astype(jnp.int32)
    is_eos = jnp.concatenate([jnp.zeros_like(is_eos[:, :1]), is_eos[:, :-1]], axis=1)
    count_eos = jnp.cumsum(is_eos, axis=1)
    mask = (count_eos == 0).astype(jnp.int32)
    return jnp.sum(mask, axis=1)


# ---------------------------------------------------------------------------
# parameters (deterministic synthetic init; shapes from the module __init__)
# ---------------------------------------------------------------------------
def init_params(key, V_in, V_out, E, H):
    ks = list(jax.random.split(key, 32))

    def w(shape, scale=0.1):
        return jax.random.normal(ks.pop(), shape, jnp.float32) * scale

    p = {}
    p["emb_inp"] = w((V_in, E))
    p["emb_out"] = w((V_out, E))
    for d in ("f", "b"):                         # enc0: bidirectional LSTM
        p[f"enc0_{d}_wih"] = w((E, 4 * H))
        p[f"enc0_{d}_whh"] = w((H, 4 * H))
        p[f"enc0_{d}_b"] = w((1, 4 * H))         # b_ih + b_hh folded together
    p["enc1_wih"] = w((H, 4 * H))
    p["enc1_whh"] = w((H, 4 * H))
    p["enc1_b"] = w((1, 4 * H))
    p["ds0_w"] = w((H, H))
    p["ds0_b"] = w((1, H))
    p["ds1_w"] = w((H, H))
    p["ds1_b"] = w((1, H))
    p["dec0_wih"] = w((E, 4 * H))
    p["dec0_whh"] = w((H, 4 * H))
    p["dec0_b"] = w((1, 4 * H))
    p["dec1_wih"] = w((2 * H, 4 * H))
    p["dec1_b"] = w((1, 4 * H))
    p["logits_w"] = w((H, V_out))
    p["logits_b"] = w((1, V_out))
    return p


# ---------------------------------------------------------------------------
# forward pass
# ---------------------------------------------------------------------------
@functools.partial(jax.jit, static_argnames=("eps",))
def forward(params, inp, out, eos_ix, bos_ix, eps=1e-30):
    B, T_in = inp.shape
    T_out = out.shape[1]
    Tdec = T_out - 1
    H = params["enc1_whh"].shape[0]
    V = params["logits_w"].shape[1]

    # pad batch to a multiple of 8 sublanes (padded rows sliced off at the end)
    Bp = _round_up(B, 8)
    inp_p = jnp.pad(inp, ((0, Bp - B), (0, 0))) if Bp != B else inp
    out_p = jnp.pad(out, ((0, Bp - B), (0, 0))) if Bp != B else out

    # ---- encode ----
    x_tbe = params["emb_inp"][inp_p.T]                      # [T_in, Bp, E], time-major gather

    hseq_f = lstm_forward(x_tbe, params["enc0_f_wih"], params["enc0_f_whh"],
                          params["enc0_f_b"])
    enc_seq_0, hN_b, cN_b = lstm_backward_add(
        x_tbe, hseq_f, params["enc0_b_wih"], params["enc0_b_whh"],
        params["enc0_b_b"])                                 # enc_seq_0 = h_f + h_b
    enc_seq_1 = lstm_forward(enc_seq_0, params["enc1_wih"], params["enc1_whh"],
                             params["enc1_b"])

    end_index = infer_length(inp_p, eos_ix)
    end_index = jnp.minimum(end_index, T_in - 1)
    batch_ar = jnp.arange(Bp)
    enc_last_0 = enc_seq_0[end_index, batch_ar]             # [Bp, H]
    enc_last_1 = enc_seq_1[end_index, batch_ar]

    # dec_start_0 is computed by the reference module but never consumed in decode().
    _dec_start_0 = enc_last_0 @ params["ds0_w"] + params["ds0_b"]
    dec_start_1 = enc_last_1 @ params["ds1_w"] + params["ds1_b"]

    # ---- decode loop ----
    prev_tbe = params["emb_out"][out_p[:, :-1].T]           # [Tdec, Bp, E]
    wih1_h = params["dec1_wih"][:H]                         # h1 half of dec1 W_ih
    wih1_e = params["dec1_wih"][H:]                         # enc_last2 half
    h2 = decoder(prev_tbe, hN_b, cN_b, dec_start_1,
                 params["dec0_whh"], wih1_h, wih1_e, params["dec1_b"],
                 params["dec0_wih"], params["dec0_b"])      # [Tdec, Bp, H]

    # ---- logits projection + log_softmax (tiled rows x vocab, online lse) ----
    logp_2d = logits_log_softmax(h2.reshape(Tdec * Bp, H),
                                 params["logits_w"], params["logits_b"])
    logp_dec = logp_2d.reshape(Tdec, Bp, V)[:, :B, :]
    logp_dec = jnp.transpose(logp_dec, (1, 0, 2))           # [B, Tdec, V]

    # BOS step: log(one_hot + eps) then log_softmax (row-independent, tiny).
    bos_tok = jnp.full((B,), bos_ix, jnp.int32)
    first = jnp.log(jax.nn.one_hot(bos_tok, V, dtype=jnp.float32) + eps)
    first = jax.nn.log_softmax(first, axis=-1)
    return jnp.concatenate([first[:, None, :], logp_dec], axis=1)


class Vocab:
    def __init__(self, n, bos_ix=1, eos_ix=2):
        self.n = n
        self.bos_ix = bos_ix
        self.eos_ix = eos_ix

    def __len__(self):
        return self.n


if __name__ == "__main__":
    B, T_in, T_out, E, H = 2, 8, 8, 32, 32
    inp_voc, out_voc = Vocab(16), Vocab(16)

    key = jax.random.PRNGKey(0)
    k_p, k_i, k_o = jax.random.split(key, 3)
    params = init_params(k_p, len(inp_voc), len(out_voc), E, H)

    inp = jax.random.randint(k_i, (B, T_in), 0, len(inp_voc), dtype=jnp.int32)
    inp = inp.at[:, -2].set(inp_voc.eos_ix)    # make sure an eos token appears
    out = jax.random.randint(k_o, (B, T_out), 0, len(out_voc), dtype=jnp.int32)

    logp = forward(params, inp, out, inp_voc.eos_ix, out_voc.bos_ix)
    jax.block_until_ready(logp)
    assert logp.shape == (B, T_out, len(out_voc))
    assert bool(jnp.all(jnp.isfinite(logp)))
    print("KERNEL_OK")
</pallas_src>

<mosaic_0001>
module attributes {stable_mosaic.version = 11 : i64} {
  func.func @_lstm_fwd_chunk_kernel(%arg0: i32, %arg1: i32, %arg2: memref<8x8x32xf32, #tpu.memory_space<vmem>>, %arg3: memref<32x128xf32, #tpu.memory_space<vmem>>, %arg4: memref<32x128xf32, #tpu.memory_space<vmem>>, %arg5: memref<1x128xf32, #tpu.memory_space<vmem>>, %arg6: memref<8x8x32xf32, #tpu.memory_space<vmem>>, %arg7: memref<8x8x128xf32, #tpu.memory_space<vmem>>, %arg8: memref<8x32xf32, #tpu.memory_space<vmem>>, %arg9: memref<8x32xf32, #tpu.memory_space<vmem>>) attributes {dimension_semantics = [#tpu.dimension_semantics<parallel>, #tpu.dimension_semantics<arbitrary>], iteration_bounds = array<i64: 1, 1>, scalar_prefetch = 0 : i64, scratch_operands = 3 : i64, tpu.core_type = #tpu.core_type<tc>, window_params = [{transform_indices = @transform_0, window_bounds = array<i64: 8, 8, 32>}, {pipeline_mode = #tpu.pipeline_mode<synchronous>, transform_indices = @transform_1, window_bounds = array<i64: 32, 128>}, {pipeline_mode = #tpu.pipeline_mode<synchronous>, transform_indices = @transform_2, window_bounds = array<i64: 32, 128>}, {pipeline_mode = #tpu.pipeline_mode<synchronous>, transform_indices = @transform_3, window_bounds = array<i64: 1, 128>}, {transform_indices = @transform_4, window_bounds = array<i64: 8, 8, 32>}]} {
    %c0_i32 = arith.constant 0 : i32
    %0 = arith.cmpi eq, %arg1, %c0_i32 : i32
    %1 = arith.extui %0 : i1 to i32
    %c0_i32_0 = arith.constant 0 : i32
    %2 = arith.cmpi ne, %1, %c0_i32_0 : i32
    scf.if %2 {
      %cst_69 = arith.constant 0.000000e+00 : f32
      %209 = vector.broadcast %cst_69 : f32 to vector<8x32xf32>
      %c0_70 = arith.constant 0 : index
      %c0_71 = arith.constant 0 : index
      %210 = vector.load %arg8[%c0_70, %c0_71] : memref<8x32xf32, #tpu.memory_space<vmem>>, vector<8x32xf32>
      tpu.vector_store %arg8[%c0_70, %c0_71], %209 {strides = array<i32>} : memref<8x32xf32, #tpu.memory_space<vmem>>, vector<8x32xf32>,
      %cst_72 = arith.constant 0.000000e+00 : f32
      %211 = vector.broadcast %cst_72 : f32 to vector<8x32xf32>
      %c0_73 = arith.constant 0 : index
      %c0_74 = arith.constant 0 : index
      %212 = vector.load %arg9[%c0_73, %c0_74] : memref<8x32xf32, #tpu.memory_space<vmem>>, vector<8x32xf32>
      tpu.vector_store %arg9[%c0_73, %c0_74], %211 {strides = array<i32>} : memref<8x32xf32, #tpu.memory_space<vmem>>, vector<8x32xf32>,
    } else {
    }
    %c0 = arith.constant 0 : index
    %c0_1 = arith.constant 0 : index
    %c0_2 = arith.constant 0 : index
    %3 = vector.load %arg2[%c0, %c0_1, %c0_2] : memref<8x8x32xf32, #tpu.memory_space<vmem>>, vector<8x8x32xf32>
    %4 = vector.shape_cast %3 : vector<8x8x32xf32> to vector<64x32xf32>
    %c0_3 = arith.constant 0 : index
    %c0_4 = arith.constant 0 : index
    %5 = vector.load %arg3[%c0_3, %c0_4] : memref<32x128xf32, #tpu.memory_space<vmem>>, vector<32x128xf32>
    %cst = arith.constant dense<0.000000e+00> : vector<64x128xf32>
    %6 = tpu.matmul %4, %5, %cst {dimension_numbers = #tpu.dot_dimension_numbers<[1], [0], [0], [1], [0, 0, 1, 1], [], []>} : vector<64x32xf32>, vector<32x128xf32>, vector<64x128xf32> -> vector<64x128xf32>
    %c0_5 = arith.constant 0 : index
    %c0_6 = arith.constant 0 : index
    %7 = vector.load %arg5[%c0_5, %c0_6] : memref<1x128xf32, #tpu.memory_space<vmem>>, vector<1x128xf32>
    %8 = vector.broadcast %7 : vector<1x128xf32> to vector<64x128xf32>
    %9 = arith.addf %6, %8 : vector<64x128xf32>
    %10 = vector.shape_cast %9 : vector<64x128xf32> to vector<8x8x128xf32>
    %c0_7 = arith.constant 0 : index
    %c0_8 = arith.constant 0 : index
    %c0_9 = arith.constant 0 : index
    %11 = vector.load %arg7[%c0_7, %c0_8, %c0_9] : memref<8x8x128xf32, #tpu.memory_space<vmem>>, vector<8x8x128xf32>
    tpu.vector_store %arg7[%c0_7, %c0_8, %c0_9], %10 {strides = array<i32>} : memref<8x8x128xf32, #tpu.memory_space<vmem>>, vector<8x8x128xf32>,
    %c0_10 = arith.constant 0 : index
    %c0_11 = arith.constant 0 : index
    %12 = vector.load %arg4[%c0_10, %c0_11] : memref<32x128xf32, #tpu.memory_space<vmem>>, vector<32x128xf32>
    %c0_12 = arith.constant 0 : index
    %c0_13 = arith.constant 0 : index
    %13 = vector.load %arg8[%c0_12, %c0_13] : memref<8x32xf32, #tpu.memory_space<vmem>>, vector<8x32xf32>
    %c0_14 = arith.constant 0 : index
    %c0_15 = arith.constant 0 : index
    %14 = vector.load %arg9[%c0_14, %c0_15] : memref<8x32xf32, #tpu.memory_space<vmem>>, vector<8x32xf32>
    %c0_i32_16 = arith.constant 0 : i32
    %15 = arith.index_cast %c0_i32_16 : i32 to index
    %c0_17 = arith.constant 0 : index
    %c0_18 = arith.constant 0 : index
    %16 = vector.load %arg7[%15, %c0_17, %c0_18] : memref<8x8x128xf32, #tpu.memory_space<vmem>>, vector<1x8x128xf32>
    %17 = vector.shape_cast %16 : vector<1x8x128xf32> to vector<8x128xf32>
    %cst_19 = arith.constant dense<0.000000e+00> : vector<8x128xf32>
    %18 = tpu.matmul %13, %12, %cst_19 {dimension_numbers = #tpu.dot_dimension_numbers<[1], [0], [0], [1], [0, 0, 1, 1], [], []>} : vector<8x32xf32>, vector<32x128xf32>, vector<8x128xf32> -> vector<8x128xf32>
    %19 = arith.addf %17, %18 : vector<8x128xf32>
    %20 = arith.negf %19 : vector<8x128xf32>
    %21 = math.exp %20 : vector<8x128xf32>
    %cst_20 = arith.constant 1.000000e+00 : f32
    %22 = vector.broadcast %cst_20 : f32 to vector<8x128xf32>
    %23 = arith.addf %22, %21 : vector<8x128xf32>
    %24 = arith.divf %22, %23 : vector<8x128xf32>
    %25 = math.tanh %19 : vector<8x128xf32>
    %26 = vector.extract_strided_slice %24 {offsets = [0, 0], sizes = [8, 32], strides = [1, 1]} : vector<8x128xf32> to vector<8x32xf32>
    %27 = vector.extract_strided_slice %24 {offsets = [0, 32], sizes = [8, 32], strides = [1, 1]} : vector<8x128xf32> to vector<8x32xf32>
    %28 = vector.extract_strided_slice %25 {offsets = [0, 64], sizes = [8, 32], strides = [1, 1]} : vector<8x128xf32> to vector<8x32xf32>
    %29 = vector.extract_strided_slice %24 {offsets = [0, 96], sizes = [8, 32], strides = [1, 1]} : vector<8x128xf32> to vector<8x32xf32>
    %30 = arith.mulf %27, %14 : vector<8x32xf32>
    %31 = arith.mulf %26, %28 : vector<8x32xf32>
    %32 = arith.addf %30, %31 : vector<8x32xf32>
    %33 = math.tanh %32 : vector<8x32xf32>
    %34 = arith.mulf %29, %33 : vector<8x32xf32>
    %35 = arith.index_cast %c0_i32_16 : i32 to index
    %c0_21 = arith.constant 0 : index
    %c0_22 = arith.constant 0 : index
    %36 = vector.load %arg6[%35, %c0_21, %c0_22] : memref<8x8x32xf32, #tpu.memory_space<vmem>>, vector<1x8x32xf32>
    %37 = vector.shape_cast %36 : vector<1x8x32xf32> to vector<8x32xf32>
    %38 = vector.shape_cast %34 : vector<8x32xf32> to vector<1x8x32xf32>
    tpu.vector_store %arg6[%35, %c0_21, %c0_22], %38 {strides = array<i32>} : memref<8x8x32xf32, #tpu.memory_space<vmem>>, vector<1x8x32xf32>,
    %c1_i32 = arith.constant 1 : i32
    %39 = arith.index_cast %c1_i32 : i32 to index
    %c0_23 = arith.constant 0 : index
    %c0_24 = arith.constant 0 : index
    %40 = vector.load %arg7[%39, %c0_23, %c0_24] : memref<8x8x128xf32, #tpu.memory_space<vmem>>, vector<1x8x128xf32>
    %41 = vector.shape_cast %40 : vector<1x8x128xf32> to vector<8x128xf32>
    %cst_25 = arith.constant dense<0.000000e+00> : vector<8x128xf32>
    %42 = tpu.matmul %34, %12, %cst_25 {dimension_numbers = #tpu.dot_dimension_numbers<[1], [0], [0], [1], [0, 0, 1, 1], [], []>} : vector<8x32xf32>, vector<32x128xf32>, vector<8x128xf32> -> vector<8x128xf32>
    %43 = arith.addf %41, %42 : vector<8x128xf32>
    %44 = arith.negf %43 : vector<8x128xf32>
    %45 = math.exp %44 : vector<8x128xf32>
    %cst_26 = arith.constant 1.000000e+00 : f32
    %46 = vector.broadcast %cst_26 : f32 to vector<8x128xf32>
    %47 = arith.addf %46, %45 : vector<8x128xf32>
    %48 = arith.divf %46, %47 : vector<8x128xf32>
    %49 = math.tanh %43 : vector<8x128xf32>
    %50 = vector.extract_strided_slice %48 {offsets = [0, 0], sizes = [8, 32], strides = [1, 1]} : vector<8x128xf32> to vector<8x32xf32>
    %51 = vector.extract_strided_slice %48 {offsets = [0, 32], sizes = [8, 32], strides = [1, 1]} : vector<8x128xf32> to vector<8x32xf32>
    %52 = vector.extract_strided_slice %49 {offsets = [0, 64], sizes = [8, 32], strides = [1, 1]} : vector<8x128xf32> to vector<8x32xf32>
    %53 = vector.extract_strided_slice %48 {offsets = [0, 96], sizes = [8, 32], strides = [1, 1]} : vector<8x128xf32> to vector<8x32xf32>
    %54 = arith.mulf %51, %32 : vector<8x32xf32>
    %55 = arith.mulf %50, %52 : vector<8x32xf32>
    %56 = arith.addf %54, %55 : vector<8x32xf32>
    %57 = math.tanh %56 : vector<8x32xf32>
    %58 = arith.mulf %53, %57 : vector<8x32xf32>
    %59 = arith.index_cast %c1_i32 : i32 to index
    %c0_27 = arith.constant 0 : index
    %c0_28 = arith.constant 0 : index
    %60 = vector.load %arg6[%59, %c0_27, %c0_28] : memref<8x8x32xf32, #tpu.memory_space<vmem>>, vector<1x8x32xf32>
    %61 = vector.shape_cast %60 : vector<1x8x32xf32> to vector<8x32xf32>
    %62 = vector.shape_cast %58 : vector<8x32xf32> to vector<1x8x32xf32>
    tpu.vector_store %arg6[%59, %c0_27, %c0_28], %62 {strides = array<i32>} : memref<8x8x32xf32, #tpu.memory_space<vmem>>, vector<1x8x32xf32>,
    %c2_i32 = arith.constant 2 : i32
    %63 = arith.index_cast %c2_i32 : i32 to index
    %c0_29 = arith.constant 0 : index
    %c0_30 = arith.constant 0 : index
    %64 = vector.load %arg7[%63, %c0_29, %c0_30] : memref<8x8x128xf32, #tpu.memory_space<vmem>>, vector<1x8x128xf32>
    %65 = vector.shape_cast %64 : vector<1x8x128xf32> to vector<8x128xf32>
    %cst_31 = arith.constant dense<0.000000e+00> : vector<8x128xf32>
    %66 = tpu.matmul %58, %12, %cst_31 {dimension_numbers = #tpu.dot_dimension_numbers<[1], [0], [0], [1], [0, 0, 1, 1], [], []>} : vector<8x32xf32>, vector<32x128xf32>, vector<8x128xf32> -> vector<8x128xf32>
    %67 = arith.addf %65, %66 : vector<8x128xf32>
    %68 = arith.negf %67 : vector<8x128xf32>
    %69 = math.exp %68 : vector<8x128xf32>
    %cst_32 = arith.constant 1.000000e+00 : f32
    %70 = vector.broadcast %cst_32 : f32 to vector<8x128xf32>
    %71 = arith.addf %70, %69 : vector<8x128xf32>
    %72 = arith.divf %70, %71 : vector<8x128xf32>
    %73 = math.tanh %67 : vector<8x128xf32>
    %74 = vector.extract_strided_slice %72 {offsets = [0, 0], sizes = [8, 32], strides = [1, 1]} : vector<8x128xf32> to vector<8x32xf32>
    %75 = vector.extract_strided_slice %72 {offsets = [0, 32], sizes = [8, 32], strides = [1, 1]} : vector<8x128xf32> to vector<8x32xf32>
    %76 = vector.extract_strided_slice %73 {offsets = [0, 64], sizes = [8, 32], strides = [1, 1]} : vector<8x128xf32> to vector<8x32xf32>
    %77 = vector.extract_strided_slice %72 {offsets = [0, 96], sizes = [8, 32], strides = [1, 1]} : vector<8x128xf32> to vector<8x32xf32>
    %78 = arith.mulf %75, %56 : vector<8x32xf32>
    %79 = arith.mulf %74, %76 : vector<8x32xf32>
    %80 = arith.addf %78, %79 : vector<8x32xf32>
    %81 = math.tanh %80 : vector<8x32xf32>
    %82 = arith.mulf %77, %81 : vector<8x32xf32>
    %83 = arith.index_cast %c2_i32 : i32 to index
    %c0_33 = arith.constant 0 : index
    %c0_34 = arith.constant 0 : index
    %84 = vector.load %arg6[%83, %c0_33, %c0_34] : memref<8x8x32xf32, #tpu.memory_space<vmem>>, vector<1x8x32xf32>
    %85 = vector.shape_cast %84 : vector<1x8x32xf32> to vector<8x32xf32>
    %86 = vector.shape_cast %82 : vector<8x32xf32> to vector<1x8x32xf32>
    tpu.vector_store %arg6[%83, %c0_33, %c0_34], %86 {strides = array<i32>} : memref<8x8x32xf32, #tpu.memory_space<vmem>>, vector<1x8x32xf32>,
    %c3_i32 = arith.constant 3 : i32
    %87 = arith.index_cast %c3_i32 : i32 to index
    %c0_35 = arith.constant 0 : index
    %c0_36 = arith.constant 0 : index
    %88 = vector.load %arg7[%87, %c0_35, %c0_36] : memref<8x8x128xf32, #tpu.memory_space<vmem>>, vector<1x8x128xf32>
    %89 = vector.shape_cast %88 : vector<1x8x128xf32> to vector<8x128xf32>
    %cst_37 = arith.constant dense<0.000000e+00> : vector<8x128xf32>
    %90 = tpu.matmul %82, %12, %cst_37 {dimension_numbers = #tpu.dot_dimension_numbers<[1], [0], [0], [1], [0, 0, 1, 1], [], []>} : vector<8x32xf32>, vector<32x128xf32>, vector<8x128xf32> -> vector<8x128xf32>
    %91 = arith.addf %89, %90 : vector<8x128xf32>
    %92 = arith.negf %91 : vector<8x128xf32>
    %93 = math.exp %92 : vector<8x128xf32>
    %cst_38 = arith.constant 1.000000e+00 : f32
    %94 = vector.broadcast %cst_38 : f32 to vector<8x128xf32>
    %95 = arith.addf %94, %93 : vector<8x128xf32>
    %96 = arith.divf %94, %95 : vector<8x128xf32>
    %97 = math.tanh %91 : vector<8x128xf32>
    %98 = vector.extract_strided_slice %96 {offsets = [0, 0], sizes = [8, 32], strides = [1, 1]} : vector<8x128xf32> to vector<8x32xf32>
    %99 = vector.extract_strided_slice %96 {offsets = [0, 32], sizes = [8, 32], strides = [1, 1]} : vector<8x128xf32> to vector<8x32xf32>
    %100 = vector.extract_strided_slice %97 {offsets = [0, 64], sizes = [8, 32], strides = [1, 1]} : vector<8x128xf32> to vector<8x32xf32>
    %101 = vector.extract_strided_slice %96 {offsets = [0, 96], sizes = [8, 32], strides = [1, 1]} : vector<8x128xf32> to vector<8x32xf32>
    %102 = arith.mulf %99, %80 : vector<8x32xf32>
    %103 = arith.mulf %98, %100 : vector<8x32xf32>
    %104 = arith.addf %102, %103 : vector<8x32xf32>
    %105 = math.tanh %104 : vector<8x32xf32>
    %106 = arith.mulf %101, %105 : vector<8x32xf32>
    %107 = arith.index_cast %c3_i32 : i32 to index
    %c0_39 = arith.constant 0 : index
    %c0_40 = arith.constant 0 : index
    %108 = vector.load %arg6[%107, %c0_39, %c0_40] : memref<8x8x32xf32, #tpu.memory_space<vmem>>, vector<1x8x32xf32>
    %109 = vector.shape_cast %108 : vector<1x8x32xf32> to vector<8x32xf32>
    %110 = vector.shape_cast %106 : vector<8x32xf32> to vector<1x8x32xf32>
    tpu.vector_store %arg6[%107, %c0_39, %c0_40], %110 {strides = array<i32>} : memref<8x8x32xf32, #tpu.memory_space<vmem>>, vector<1x8x32xf32>,
    %c4_i32 = arith.constant 4 : i32
    %111 = arith.index_cast %c4_i32 : i32 to index
    %c0_41 = arith.constant 0 : index
    %c0_42 = arith.constant 0 : index
    %112 = vector.load %arg7[%111, %c0_41, %c0_42] : memref<8x8x128xf32, #tpu.memory_space<vmem>>, vector<1x8x128xf32>
    %113 = vector.shape_cast %112 : vector<1x8x128xf32> to vector<8x128xf32>
    %cst_43 = arith.constant dense<0.000000e+00> : vector<8x128xf32>
    %114 = tpu.matmul %106, %12, %cst_43 {dimension_numbers = #tpu.dot_dimension_numbers<[1], [0], [0], [1], [0, 0, 1, 1], [], []>} : vector<8x32xf32>, vector<32x128xf32>, vector<8x128xf32> -> vector<8x128xf32>
    %115 = arith.addf %113, %114 : vector<8x128xf32>
    %116 = arith.negf %115 : vector<8x128xf32>
    %117 = math.exp %116 : vector<8x128xf32>
    %cst_44 = arith.constant 1.000000e+00 : f32
    %118 = vector.broadcast %cst_44 : f32 to vector<8x128xf32>
    %119 = arith.addf %118, %117 : vector<8x128xf32>
    %120 = arith.divf %118, %119 : vector<8x128xf32>
    %121 = math.tanh %115 : vector<8x128xf32>
    %122 = vector.extract_strided_slice %120 {offsets = [0, 0], sizes = [8, 32], strides = [1, 1]} : vector<8x128xf32> to vector<8x32xf32>
    %123 = vector.extract_strided_slice %120 {offsets = [0, 32], sizes = [8, 32], strides = [1, 1]} : vector<8x128xf32> to vector<8x32xf32>
    %124 = vector.extract_strided_slice %121 {offsets = [0, 64], sizes = [8, 32], strides = [1, 1]} : vector<8x128xf32> to vector<8x32xf32>
    %125 = vector.extract_strided_slice %120 {offsets = [0, 96], sizes = [8, 32], strides = [1, 1]} : vector<8x128xf32> to vector<8x32xf32>
    %126 = arith.mulf %123, %104 : vector<8x32xf32>
    %127 = arith.mulf %122, %124 : vector<8x32xf32>
    %128 = arith.addf %126, %127 : vector<8x32xf32>
    %129 = math.tanh %128 : vector<8x32xf32>
    %130 = arith.mulf %125, %129 : vector<8x32xf32>
    %131 = arith.index_cast %c4_i32 : i32 to index
    %c0_45 = arith.constant 0 : index
    %c0_46 = arith.constant 0 : index
    %132 = vector.load %arg6[%131, %c0_45, %c0_46] : memref<8x8x32xf32, #tpu.memory_space<vmem>>, vector<1x8x32xf32>
    %133 = vector.shape_cast %132 : vector<1x8x32xf32> to vector<8x32xf32>
    %134 = vector.shape_cast %130 : vector<8x32xf32> to vector<1x8x32xf32>
    tpu.vector_store %arg6[%131, %c0_45, %c0_46], %134 {strides = array<i32>} : memref<8x8x32xf32, #tpu.memory_space<vmem>>, vector<1x8x32xf32>,
    %c5_i32 = arith.constant 5 : i32
    %135 = arith.index_cast %c5_i32 : i32 to index
    %c0_47 = arith.constant 0 : index
    %c0_48 = arith.constant 0 : index
    %136 = vector.load %arg7[%135, %c0_47, %c0_48] : memref<8x8x128xf32, #tpu.memory_space<vmem>>, vector<1x8x128xf32>
    %137 = vector.shape_cast %136 : vector<1x8x128xf32> to vector<8x128xf32>
    %cst_49 = arith.constant dense<0.000000e+00> : vector<8x128xf32>
    %138 = tpu.matmul %130, %12, %cst_49 {dimension_numbers = #tpu.dot_dimension_numbers<[1], [0], [0], [1], [0, 0, 1, 1], [], []>} : vector<8x32xf32>, vector<32x128xf32>, vector<8x128xf32> -> vector<8x128xf32>
    %139 = arith.addf %137, %138 : vector<8x128xf32>
    %140 = arith.negf %139 : vector<8x128xf32>
    %141 = math.exp %140 : vector<8x128xf32>
    %cst_50 = arith.constant 1.000000e+00 : f32
    %142 = vector.broadcast %cst_50 : f32 to vector<8x128xf32>
    %143 = arith.addf %142, %141 : vector<8x128xf32>
    %144 = arith.divf %142, %143 : vector<8x128xf32>
    %145 = math.tanh %139 : vector<8x128xf32>
    %146 = vector.extract_strided_slice %144 {offsets = [0, 0], sizes = [8, 32], strides = [1, 1]} : vector<8x128xf32> to vector<8x32xf32>
    %147 = vector.extract_strided_slice %144 {offsets = [0, 32], sizes = [8, 32], strides = [1, 1]} : vector<8x128xf32> to vector<8x32xf32>
    %148 = vector.extract_strided_slice %145 {offsets = [0, 64], sizes = [8, 32], strides = [1, 1]} : vector<8x128xf32> to vector<8x32xf32>
    %149 = vector.extract_strided_slice %144 {offsets = [0, 96], sizes = [8, 32], strides = [1, 1]} : vector<8x128xf32> to vector<8x32xf32>
    %150 = arith.mulf %147, %128 : vector<8x32xf32>
    %151 = arith.mulf %146, %148 : vector<8x32xf32>
    %152 = arith.addf %150, %151 : vector<8x32xf32>
    %153 = math.tanh %152 : vector<8x32xf32>
    %154 = arith.mulf %149, %153 : vector<8x32xf32>
    %155 = arith.index_cast %c5_i32 : i32 to index
    %c0_51 = arith.constant 0 : index
    %c0_52 = arith.constant 0 : index
    %156 = vector.load %arg6[%155, %c0_51, %c0_52] : memref<8x8x32xf32, #tpu.memory_space<vmem>>, vector<1x8x32xf32>
    %157 = vector.shape_cast %156 : vector<1x8x32xf32> to vector<8x32xf32>
    %158 = vector.shape_cast %154 : vector<8x32xf32> to vector<1x8x32xf32>
    tpu.vector_store %arg6[%155, %c0_51, %c0_52], %158 {strides = array<i32>} : memref<8x8x32xf32, #tpu.memory_space<vmem>>, vector<1x8x32xf32>,
    %c6_i32 = arith.constant 6 : i32
    %159 = arith.index_cast %c6_i32 : i32 to index
    %c0_53 = arith.constant 0 : index
    %c0_54 = arith.constant 0 : index
    %160 = vector.load %arg7[%159, %c0_53, %c0_54] : memref<8x8x128xf32, #tpu.memory_space<vmem>>, vector<1x8x128xf32>
    %161 = vector.shape_cast %160 : vector<1x8x128xf32> to vector<8x128xf32>
    %cst_55 = arith.constant dense<0.000000e+00> : vector<8x128xf32>
    %162 = tpu.matmul %154, %12, %cst_55 {dimension_numbers = #tpu.dot_dimension_numbers<[1], [0], [0], [1], [0, 0, 1, 1], [], []>} : vector<8x32xf32>, vector<32x128xf32>, vector<8x128xf32> -> vector<8x128xf32>
    %163 = arith.addf %161, %162 : vector<8x128xf32>
    %164 = arith.negf %163 : vector<8x128xf32>
    %165 = math.exp %164 : vector<8x128xf32>
    %cst_56 = arith.constant 1.000000e+00 : f32
    %166 = vector.broadcast %cst_56 : f32 to vector<8x128xf32>
    %167 = arith.addf %166, %165 : vector<8x128xf32>
    %168 = arith.divf %166, %167 : vector<8x128xf32>
    %169 = math.tanh %163 : vector<8x128xf32>
    %170 = vector.extract_strided_slice %168 {offsets = [0, 0], sizes = [8, 32], strides = [1, 1]} : vector<8x128xf32> to vector<8x32xf32>
    %171 = vector.extract_strided_slice %168 {offsets = [0, 32], sizes = [8, 32], strides = [1, 1]} : vector<8x128xf32> to vector<8x32xf32>
    %172 = vector.extract_strided_slice %169 {offsets = [0, 64], sizes = [8, 32], strides = [1, 1]} : vector<8x128xf32> to vector<8x32xf32>
    %173 = vector.extract_strided_slice %168 {offsets = [0, 96], sizes = [8, 32], strides = [1, 1]} : vector<8x128xf32> to vector<8x32xf32>
    %174 = arith.mulf %171, %152 : vector<8x32xf32>
    %175 = arith.mulf %170, %172 : vector<8x32xf32>
    %176 = arith.addf %174, %175 : vector<8x32xf32>
    %177 = math.tanh %176 : vector<8x32xf32>
    %178 = arith.mulf %173, %177 : vector<8x32xf32>
    %179 = arith.index_cast %c6_i32 : i32 to index
    %c0_57 = arith.constant 0 : index
    %c0_58 = arith.constant 0 : index
    %180 = vector.load %arg6[%179, %c0_57, %c0_58] : memref<8x8x32xf32, #tpu.memory_space<vmem>>, vector<1x8x32xf32>
    %181 = vector.shape_cast %180 : vector<1x8x32xf32> to vector<8x32xf32>
    %182 = vector.shape_cast %178 : vector<8x32xf32> to vector<1x8x32xf32>
    tpu.vector_store %arg6[%179, %c0_57, %c0_58], %182 {strides = array<i32>} : memref<8x8x32xf32, #tpu.memory_space<vmem>>, vector<1x8x32xf32>,
    %c7_i32 = arith.constant 7 : i32
    %183 = arith.index_cast %c7_i32 : i32 to index
    %c0_59 = arith.constant 0 : index
    %c0_60 = arith.constant 0 : index
    %184 = vector.load %arg7[%183, %c0_59, %c0_60] : memref<8x8x128xf32, #tpu.memory_space<vmem>>, vector<1x8x128xf32>
    %185 = vector.shape_cast %184 : vector<1x8x128xf32> to vector<8x128xf32>
    %cst_61 = arith.constant dense<0.000000e+00> : vector<8x128xf32>
    %186 = tpu.matmul %178, %12, %cst_61 {dimension_numbers = #tpu.dot_dimension_numbers<[1], [0], [0], [1], [0, 0, 1, 1], [], []>} : vector<8x32xf32>, vector<32x128xf32>, vector<8x128xf32> -> vector<8x128xf32>
    %187 = arith.addf %185, %186 : vector<8x128xf32>
    %188 = arith.negf %187 : vector<8x128xf32>
    %189 = math.exp %188 : vector<8x128xf32>
    %cst_62 = arith.constant 1.000000e+00 : f32
    %190 = vector.broadcast %cst_62 : f32 to vector<8x128xf32>
    %191 = arith.addf %190, %189 : vector<8x128xf32>
    %192 = arith.divf %190, %191 : vector<8x128xf32>
    %193 = math.tanh %187 : vector<8x128xf32>
    %194 = vector.extract_strided_slice %192 {offsets = [0, 0], sizes = [8, 32], strides = [1, 1]} : vector<8x128xf32> to vector<8x32xf32>
    %195 = vector.extract_strided_slice %192 {offsets = [0, 32], sizes = [8, 32], strides = [1, 1]} : vector<8x128xf32> to vector<8x32xf32>
    %196 = vector.extract_strided_slice %193 {offsets = [0, 64], sizes = [8, 32], strides = [1, 1]} : vector<8x128xf32> to vector<8x32xf32>
    %197 = vector.extract_strided_slice %192 {offsets = [0, 96], sizes = [8, 32], strides = [1, 1]} : vector<8x128xf32> to vector<8x32xf32>
    %198 = arith.mulf %195, %176 : vector<8x32xf32>
    %199 = arith.mulf %194, %196 : vector<8x32xf32>
    %200 = arith.addf %198, %199 : vector<8x32xf32>
    %201 = math.tanh %200 : vector<8x32xf32>
    %202 = arith.mulf %197, %201 : vector<8x32xf32>
    %203 = arith.index_cast %c7_i32 : i32 to index
    %c0_63 = arith.constant 0 : index
    %c0_64 = arith.constant 0 : index
    %204 = vector.load %arg6[%203, %c0_63, %c0_64] : memref<8x8x32xf32, #tpu.memory_space<vmem>>, vector<1x8x32xf32>
    %205 = vector.shape_cast %204 : vector<1x8x32xf32> to vector<8x32xf32>
    %206 = vector.shape_cast %202 : vector<8x32xf32> to vector<1x8x32xf32>
    tpu.vector_store %arg6[%203, %c0_63, %c0_64], %206 {strides = array<i32>} : memref<8x8x32xf32, #tpu.memory_space<vmem>>, vector<1x8x32xf32>,
    %c8_i32 = arith.constant 8 : i32
    %c0_65 = arith.constant 0 : index
    %c0_66 = arith.constant 0 : index
    %207 = vector.load %arg8[%c0_65, %c0_66] : memref<8x32xf32, #tpu.memory_space<vmem>>, vector<8x32xf32>
    tpu.vector_store %arg8[%c0_65, %c0_66], %202 {strides = array<i32>} : memref<8x32xf32, #tpu.memory_space<vmem>>, vector<8x32xf32>,
    %c0_67 = arith.constant 0 : index
    %c0_68 = arith.constant 0 : index
    %208 = vector.load %arg9[%c0_67, %c0_68] : memref<8x32xf32, #tpu.memory_space<vmem>>, vector<8x32xf32>
    tpu.vector_store %arg9[%c0_67, %c0_68], %200 {strides = array<i32>} : memref<8x32xf32, #tpu.memory_space<vmem>>, vector<8x32xf32>,
    return
  }
  func.func @transform_0(%arg0: i32, %arg1: i32) -> (i32, i32, i32) {
    %c0_i32 = arith.constant 0 : i32
    %c0_i32_0 = arith.constant 0 : i32
    return %arg1, %arg0, %c0_i32 : i32, i32, i32
  }
  func.func @transform_1(%arg0: i32, %arg1: i32) -> (i32, i32) {
    %c0_i32 = arith.constant 0 : i32
    %c0_i32_0 = arith.constant 0 : i32
    %c0_i32_1 = arith.constant 0 : i32
    return %c0_i32, %c0_i32_0 : i32, i32
  }
  func.func @transform_2(%arg0: i32, %arg1: i32) -> (i32, i32) {
    %c0_i32 = arith.constant 0 : i32
    %c0_i32_0 = arith.constant 0 : i32
    %c0_i32_1 = arith.constant 0 : i32
    return %c0_i32, %c0_i32_0 : i32, i32
  }
  func.func @transform_3(%arg0: i32, %arg1: i32) -> (i32, i32) {
    %c0_i32 = arith.constant 0 : i32
    %c0_i32_0 = arith.constant 0 : i32
    %c0_i32_1 = arith.constant 0 : i32
    return %c0_i32, %c0_i32_0 : i32, i32
  }
  func.func @transform_4(%arg0: i32, %arg1: i32) -> (i32, i32, i32) {
    %c0_i32 = arith.constant 0 : i32
    %c0_i32_0 = arith.constant 0 : i32
    return %arg1, %arg0, %c0_i32 : i32, i32, i32
  }
}

module attributes {stable_mosaic.version = 11 : i64} {
  func.func @_lstm_bwd_add_chunk_kernel(%arg0: i32, %arg1: i32, %arg2: memref<8x8x32xf32, #tpu.memory_space<vmem>>, %arg3: memref<8x8x32xf32, #tpu.memory_space<vmem>>, %arg4: memref<32x128xf32, #tpu.memory_space<vmem>>, %arg5: memref<32x128xf32, #tpu.memory_space<vmem>>, %arg6: memref<1x128xf32, #tpu.memory_space<vmem>>, %arg7: memref<8x8x32xf32, #tpu.memory_space<vmem>>, %arg8: memref<8x32xf32, #tpu.memory_space<vmem>>, %arg9: memref<8x32xf32, #tpu.memory_space<vmem>>, %arg10: memref<8x8x128xf32, #tpu.memory_space<vmem>>, %arg11: memref<8x32xf32, #tpu.memory_space<vmem>>, %arg12: memref<8x32xf32, #tpu.memory_space<vmem>>) attributes {dimension_semantics = [#tpu.dimension_semantics<parallel>, #tpu.dimension_semantics<arbitrary>], iteration_bounds = array<i64: 1, 1>, scalar_prefetch = 0 : i64, scratch_operands = 3 : i64, tpu.core_type = #tpu.core_type<tc>, window_params = [{transform_indices = @transform_0, window_bounds = array<i64: 8, 8, 32>}, {transform_indices = @transform_1, window_bounds = array<i64: 8, 8, 32>}, {pipeline_mode = #tpu.pipeline_mode<synchronous>, transform_indices = @transform_2, window_bounds = array<i64: 32, 128>}, {pipeline_mode = #tpu.pipeline_mode<synchronous>, transform_indices = @transform_3, window_bounds = array<i64: 32, 128>}, {pipeline_mode = #tpu.pipeline_mode<synchronous>, transform_indices = @transform_4, window_bounds = array<i64: 1, 128>}, {transform_indices = @transform_5, window_bounds = array<i64: 8, 8, 32>}, {transform_indices = @transform_6, window_bounds = array<i64: 8, 32>}, {transform_indices = @transform_7, window_bounds = array<i64: 8, 32>}]} {
    %c0_i32 = arith.constant 0 : i32
    %0 = arith.cmpi eq, %arg1, %c0_i32 : i32
    %1 = arith.extui %0 : i1 to i32
    %c0_i32_0 = arith.constant 0 : i32
    %2 = arith.cmpi ne, %1, %c0_i32_0 : i32
    scf.if %2 {
      %cst_97 = arith.constant 0.000000e+00 : f32
      %251 = vector.broadcast %cst_97 : f32 to vector<8x32xf32>
      %c0_98 = arith.constant 0 : index
      %c0_99 = arith.constant 0 : index
      %252 = vector.load %arg11[%c0_98, %c0_99] : memref<8x32xf32, #tpu.memory_space<vmem>>, vector<8x32xf32>
      tpu.vector_store %arg11[%c0_98, %c0_99], %251 {strides = array<i32>} : memref<8x32xf32, #tpu.memory_space<vmem>>, vector<8x32xf32>,
      %cst_100 = arith.constant 0.000000e+00 : f32
      %253 = vector.broadcast %cst_100 : f32 to vector<8x32xf32>
      %c0_101 = arith.constant 0 : index
      %c0_102 = arith.constant 0 : index
      %254 = vector.load %arg12[%c0_101, %c0_102] : memref<8x32xf32, #tpu.memory_space<vmem>>, vector<8x32xf32>
      tpu.vector_store %arg12[%c0_101, %c0_102], %253 {strides = array<i32>} : memref<8x32xf32, #tpu.memory_space<vmem>>, vector<8x32xf32>,
    } else {
    }
    %c0 = arith.constant 0 : index
    %c0_1 = arith.constant 0 : index
    %c0_2 = arith.constant 0 : index
    %3 = vector.load %arg2[%c0, %c0_1, %c0_2] : memref<8x8x32xf32, #tpu.memory_space<vmem>>, vector<8x8x32xf32>
    %4 = vector.shape_cast %3 : vector<8x8x32xf32> to vector<64x32xf32>
    %c0_3 = arith.constant 0 : index
    %c0_4 = arith.constant 0 : index
    %5 = vector.load %arg4[%c0_3, %c0_4] : memref<32x128xf32, #tpu.memory_space<vmem>>, vector<32x128xf32>
    %cst = arith.constant dense<0.000000e+00> : vector<64x128xf32>
    %6 = tpu.matmul %4, %5, %cst {dimension_numbers = #tpu.dot_dimension_numbers<[1], [0], [0], [1], [0, 0, 1, 1], [], []>} : vector<64x32xf32>, vector<32x128xf32>, vector<64x128xf32> -> vector<64x128xf32>
    %c0_5 = arith.constant 0 : index
    %c0_6 = arith.constant 0 : index
    %7 = vector.load %arg6[%c0_5, %c0_6] : memref<1x128xf32, #tpu.memory_space<vmem>>, vector<1x128xf32>
    %8 = vector.broadcast %7 : vector<1x128xf32> to vector<64x128xf32>
    %9 = arith.addf %6, %8 : vector<64x128xf32>
    %10 = vector.shape_cast %9 : vector<64x128xf32> to vector<8x8x128xf32>
    %c0_7 = arith.constant 0 : index
    %c0_8 = arith.constant 0 : index
    %c0_9 = arith.constant 0 : index
    %11 = vector.load %arg10[%c0_7, %c0_8, %c0_9] : memref<8x8x128xf32, #tpu.memory_space<vmem>>, vector<8x8x128xf32>
    tpu.vector_store %arg10[%c0_7, %c0_8, %c0_9], %10 {strides = array<i32>} : memref<8x8x128xf32, #tpu.memory_space<vmem>>, vector<8x8x128xf32>,
    %c0_10 = arith.constant 0 : index
    %c0_11 = arith.constant 0 : index
    %12 = vector.load %arg5[%c0_10, %c0_11] : memref<32x128xf32, #tpu.memory_space<vmem>>, vector<32x128xf32>
    %c0_12 = arith.constant 0 : index
    %c0_13 = arith.constant 0 : index
    %13 = vector.load %arg11[%c0_12, %c0_13] : memref<8x32xf32, #tpu.memory_space<vmem>>, vector<8x32xf32>
    %c0_14 = arith.constant 0 : index
    %c0_15 = arith.constant 0 : index
    %14 = vector.load %arg12[%c0_14, %c0_15] : memref<8x32xf32, #tpu.memory_space<vmem>>, vector<8x32xf32>
    %c0_i32_16 = arith.constant 0 : i32
    %c7_i32 = arith.constant 7 : i32
    %15 = arith.subi %c7_i32, %c0_i32_16 : i32
    %16 = arith.index_cast %15 : i32 to index
    %c0_17 = arith.constant 0 : index
    %c0_18 = arith.constant 0 : index
    %17 = vector.load %arg10[%16, %c0_17, %c0_18] : memref<8x8x128xf32, #tpu.memory_space<vmem>>, vector<1x8x128xf32>
    %18 = vector.shape_cast %17 : vector<1x8x128xf32> to vector<8x128xf32>
    %cst_19 = arith.constant dense<0.000000e+00> : vector<8x128xf32>
    %19 = tpu.matmul %13, %12, %cst_19 {dimension_numbers = #tpu.dot_dimension_numbers<[1], [0], [0], [1], [0, 0, 1, 1], [], []>} : vector<8x32xf32>, vector<32x128xf32>, vector<8x128xf32> -> vector<8x128xf32>
    %20 = arith.addf %18, %19 : vector<8x128xf32>
    %21 = arith.negf %20 : vector<8x128xf32>
    %22 = math.exp %21 : vector<8x128xf32>
    %cst_20 = arith.constant 1.000000e+00 : f32
    %23 = vector.broadcast %cst_20 : f32 to vector<8x128xf32>
    %24 = arith.addf %23, %22 : vector<8x128xf32>
    %25 = arith.divf %23, %24 : vector<8x128xf32>
    %26 = math.tanh %20 : vector<8x128xf32>
    %27 = vector.extract_strided_slice %25 {offsets = [0, 0], sizes = [8, 32], strides = [1, 1]} : vector<8x128xf32> to vector<8x32xf32>
    %28 = vector.extract_strided_slice %25 {offsets = [0, 32], sizes = [8, 32], strides = [1, 1]} : vector<8x128xf32> to vector<8x32xf32>
    %29 = vector.extract_strided_slice %26 {offsets = [0, 64], sizes = [8, 32], strides = [1, 1]} : vector<8x128xf32> to vector<8x32xf32>
    %30 = vector.extract_strided_slice %25 {offsets = [0, 96], sizes = [8, 32], strides = [1, 1]} : vector<8x128xf32> to vector<8x32xf32>
    %31 = arith.mulf %28, %14 : vector<8x32xf32>
    %32 = arith.mulf %27, %29 : vector<8x32xf32>
    %33 = arith.addf %31, %32 : vector<8x32xf32>
    %34 = math.tanh %33 : vector<8x32xf32>
    %35 = arith.mulf %30, %34 : vector<8x32xf32>
    %36 = arith.index_cast %15 : i32 to index
    %c0_21 = arith.constant 0 : index
    %c0_22 = arith.constant 0 : index
    %37 = vector.load %arg3[%36, %c0_21, %c0_22] : memref<8x8x32xf32, #tpu.memory_space<vmem>>, vector<1x8x32xf32>
    %38 = vector.shape_cast %37 : vector<1x8x32xf32> to vector<8x32xf32>
    %39 = arith.addf %38, %35 : vector<8x32xf32>
    %40 = arith.index_cast %15 : i32 to index
    %c0_23 = arith.constant 0 : index
    %c0_24 = arith.constant 0 : index
    %41 = vector.load %arg7[%40, %c0_23, %c0_24] : memref<8x8x32xf32, #tpu.memory_space<vmem>>, vector<1x8x32xf32>
    %42 = vector.shape_cast %41 : vector<1x8x32xf32> to vector<8x32xf32>
    %43 = vector.shape_cast %39 : vector<8x32xf32> to vector<1x8x32xf32>
    tpu.vector_store %arg7[%40, %c0_23, %c0_24], %43 {strides = array<i32>} : memref<8x8x32xf32, #tpu.memory_space<vmem>>, vector<1x8x32xf32>,
    %c1_i32 = arith.constant 1 : i32
    %c7_i32_25 = arith.constant 7 : i32
    %44 = arith.subi %c7_i32_25, %c1_i32 : i32
    %45 = arith.index_cast %44 : i32 to index
    %c0_26 = arith.constant 0 : index
    %c0_27 = arith.constant 0 : index
    %46 = vector.load %arg10[%45, %c0_26, %c0_27] : memref<8x8x128xf32, #tpu.memory_space<vmem>>, vector<1x8x128xf32>
    %47 = vector.shape_cast %46 : vector<1x8x128xf32> to vector<8x128xf32>
    %cst_28 = arith.constant dense<0.000000e+00> : vector<8x128xf32>
    %48 = tpu.matmul %35, %12, %cst_28 {dimension_numbers = #tpu.dot_dimension_numbers<[1], [0], [0], [1], [0, 0, 1, 1], [], []>} : vector<8x32xf32>, vector<32x128xf32>, vector<8x128xf32> -> vector<8x128xf32>
    %49 = arith.addf %47, %48 : vector<8x128xf32>
    %50 = arith.negf %49 : vector<8x128xf32>
    %51 = math.exp %50 : vector<8x128xf32>
    %cst_29 = arith.constant 1.000000e+00 : f32
    %52 = vector.broadcast %cst_29 : f32 to vector<8x128xf32>
    %53 = arith.addf %52, %51 : vector<8x128xf32>
    %54 = arith.divf %52, %53 : vector<8x128xf32>
    %55 = math.tanh %49 : vector<8x128xf32>
    %56 = vector.extract_strided_slice %54 {offsets = [0, 0], sizes = [8, 32], strides = [1, 1]} : vector<8x128xf32> to vector<8x32xf32>
    %57 = vector.extract_strided_slice %54 {offsets = [0, 32], sizes = [8, 32], strides = [1, 1]} : vector<8x128xf32> to vector<8x32xf32>
    %58 = vector.extract_strided_slice %55 {offsets = [0, 64], sizes = [8, 32], strides = [1, 1]} : vector<8x128xf32> to vector<8x32xf32>
    %59 = vector.extract_strided_slice %54 {offsets = [0, 96], sizes = [8, 32], strides = [1, 1]} : vector<8x128xf32> to vector<8x32xf32>
    %60 = arith.mulf %57, %33 : vector<8x32xf32>
    %61 = arith.mulf %56, %58 : vector<8x32xf32>
    %62 = arith.addf %60, %61 : vector<8x32xf32>
    %63 = math.tanh %62 : vector<8x32xf32>
    %64 = arith.mulf %59, %63 : vector<8x32xf32>
    %65 = arith.index_cast %44 : i32 to index
    %c0_30 = arith.constant 0 : index
    %c0_31 = arith.constant 0 : index
    %66 = vector.load %arg3[%65, %c0_30, %c0_31] : memref<8x8x32xf32, #tpu.memory_space<vmem>>, vector<1x8x32xf32>
    %67 = vector.shape_cast %66 : vector<1x8x32xf32> to vector<8x32xf32>
    %68 = arith.addf %67, %64 : vector<8x32xf32>
    %69 = arith.index_cast %44 : i32 to index
    %c0_32 = arith.constant 0 : index
    %c0_33 = arith.constant 0 : index
    %70 = vector.load %arg7[%69, %c0_32, %c0_33] : memref<8x8x32xf32, #tpu.memory_space<vmem>>, vector<1x8x32xf32>
    %71 = vector.shape_cast %70 : vector<1x8x32xf32> to vector<8x32xf32>
    %72 = vector.shape_cast %68 : vector<8x32xf32> to vector<1x8x32xf32>
    tpu.vector_store %arg7[%69, %c0_32, %c0_33], %72 {strides = array<i32>} : memref<8x8x32xf32, #tpu.memory_space<vmem>>, vector<1x8x32xf32>,
    %c2_i32 = arith.constant 2 : i32
    %c7_i32_34 = arith.constant 7 : i32
    %73 = arith.subi %c7_i32_34, %c2_i32 : i32
    %74 = arith.index_cast %73 : i32 to index
    %c0_35 = arith.constant 0 : index
    %c0_36 = arith.constant 0 : index
    %75 = vector.load %arg10[%74, %c0_35, %c0_36] : memref<8x8x128xf32, #tpu.memory_space<vmem>>, vector<1x8x128xf32>
    %76 = vector.shape_cast %75 : vector<1x8x128xf32> to vector<8x128xf32>
    %cst_37 = arith.constant dense<0.000000e+00> : vector<8x128xf32>
    %77 = tpu.matmul %64, %12, %cst_37 {dimension_numbers = #tpu.dot_dimension_numbers<[1], [0], [0], [1], [0, 0, 1, 1], [], []>} : vector<8x32xf32>, vector<32x128xf32>, vector<8x128xf32> -> vector<8x128xf32>
    %78 = arith.addf %76, %77 : vector<8x128xf32>
    %79 = arith.negf %78 : vector<8x128xf32>
    %80 = math.exp %79 : vector<8x128xf32>
    %cst_38 = arith.constant 1.000000e+00 : f32
    %81 = vector.broadcast %cst_38 : f32 to vector<8x128xf32>
    %82 = arith.addf %81, %80 : vector<8x128xf32>
    %83 = arith.divf %81, %82 : vector<8x128xf32>
    %84 = math.tanh %78 : vector<8x128xf32>
    %85 = vector.extract_strided_slice %83 {offsets = [0, 0], sizes = [8, 32], strides = [1, 1]} : vector<8x128xf32> to vector<8x32xf32>
    %86 = vector.extract_strided_slice %83 {offsets = [0, 32], sizes = [8, 32], strides = [1, 1]} : vector<8x128xf32> to vector<8x32xf32>
    %87 = vector.extract_strided_slice %84 {offsets = [0, 64], sizes = [8, 32], strides = [1, 1]} : vector<8x128xf32> to vector<8x32xf32>
    %88 = vector.extract_strided_slice %83 {offsets = [0, 96], sizes = [8, 32], strides = [1, 1]} : vector<8x128xf32> to vector<8x32xf32>
    %89 = arith.mulf %86, %62 : vector<8x32xf32>
    %90 = arith.mulf %85, %87 : vector<8x32xf32>
    %91 = arith.addf %89, %90 : vector<8x32xf32>
    %92 = math.tanh %91 : vector<8x32xf32>
    %93 = arith.mulf %88, %92 : vector<8x32xf32>
    %94 = arith.index_cast %73 : i32 to index
    %c0_39 = arith.constant 0 : index
    %c0_40 = arith.constant 0 : index
    %95 = vector.load %arg3[%94, %c0_39, %c0_40] : memref<8x8x32xf32, #tpu.memory_space<vmem>>, vector<1x8x32xf32>
    %96 = vector.shape_cast %95 : vector<1x8x32xf32> to vector<8x32xf32>
    %97 = arith.addf %96, %93 : vector<8x32xf32>
    %98 = arith.index_cast %73 : i32 to index
    %c0_41 = arith.constant 0 : index
    %c0_42 = arith.constant 0 : index
    %99 = vector.load %arg7[%98, %c0_41, %c0_42] : memref<8x8x32xf32, #tpu.memory_space<vmem>>, vector<1x8x32xf32>
    %100 = vector.shape_cast %99 : vector<1x8x32xf32> to vector<8x32xf32>
    %101 = vector.shape_cast %97 : vector<8x32xf32> to vector<1x8x32xf32>
    tpu.vector_store %arg7[%98, %c0_41, %c0_42], %101 {strides = array<i32>} : memref<8x8x32xf32, #tpu.memory_space<vmem>>, vector<1x8x32xf32>,
    %c3_i32 = arith.constant 3 : i32
    %c7_i32_43 = arith.constant 7 : i32
    %102 = arith.subi %c7_i32_43, %c3_i32 : i32
    %103 = arith.index_cast %102 : i32 to index
    %c0_44 = arith.constant 0 : index
    %c0_45 = arith.constant 0 : index
    %104 = vector.load %arg10[%103, %c0_44, %c0_45] : memref<8x8x128xf32, #tpu.memory_space<vmem>>, vector<1x8x128xf32>
    %105 = vector.shape_cast %104 : vector<1x8x128xf32> to vector<8x128xf32>
    %cst_46 = arith.constant dense<0.000000e+00> : vector<8x128xf32>
    %106 = tpu.matmul %93, %12, %cst_46 {dimension_numbers = #tpu.dot_dimension_numbers<[1], [0], [0], [1], [0, 0, 1, 1], [], []>} : vector<8x32xf32>, vector<32x128xf32>, vector<8x128xf32> -> vector<8x128xf32>
    %107 = arith.addf %105, %106 : vector<8x128xf32>
    %108 = arith.negf %107 : vector<8x128xf32>
    %109 = math.exp %108 : vector<8x128xf32>
    %cst_47 = arith.constant 1.000000e+00 : f32
    %110 = vector.broadcast %cst_47 : f32 to vector<8x128xf32>
    %111 = arith.addf %110, %109 : vector<8x128xf32>
    %112 = arith.divf %110, %111 : vector<8x128xf32>
    %113 = math.tanh %107 : vector<8x128xf32>
    %114 = vector.extract_strided_slice %112 {offsets = [0, 0], sizes = [8, 32], strides = [1, 1]} : vector<8x128xf32> to vector<8x32xf32>
    %115 = vector.extract_strided_slice %112 {offsets = [0, 32], sizes = [8, 32], strides = [1, 1]} : vector<8x128xf32> to vector<8x32xf32>
    %116 = vector.extract_strided_slice %113 {offsets = [0, 64], sizes = [8, 32], strides = [1, 1]} : vector<8x128xf32> to vector<8x32xf32>
    %117 = vector.extract_strided_slice %112 {offsets = [0, 96], sizes = [8, 32], strides = [1, 1]} : vector<8x128xf32> to vector<8x32xf32>
    %118 = arith.mulf %115, %91 : vector<8x32xf32>
    %119 = arith.mulf %114, %116 : vector<8x32xf32>
    %120 = arith.addf %118, %119 : vector<8x32xf32>
    %121 = math.tanh %120 : vector<8x32xf32>
    %122 = arith.mulf %117, %121 : vector<8x32xf32>
    %123 = arith.index_cast %102 : i32 to index
    %c0_48 = arith.constant 0 : index
    %c0_49 = arith.constant 0 : index
    %124 = vector.load %arg3[%123, %c0_48, %c0_49] : memref<8x8x32xf32, #tpu.memory_space<vmem>>, vector<1x8x32xf32>
    %125 = vector.shape_cast %124 : vector<1x8x32xf32> to vector<8x32xf32>
    %126 = arith.addf %125, %122 : vector<8x32xf32>
    %127 = arith.index_cast %102 : i32 to index
    %c0_50 = arith.constant 0 : index
    %c0_51 = arith.constant 0 : index
    %128 = vector.load %arg7[%127, %c0_50, %c0_51] : memref<8x8x32xf32, #tpu.memory_space<vmem>>, vector<1x8x32xf32>
    %129 = vector.shape_cast %128 : vector<1x8x32xf32> to vector<8x32xf32>
    %130 = vector.shape_cast %126 : vector<8x32xf32> to vector<1x8x32xf32>
    tpu.vector_store %arg7[%127, %c0_50, %c0_51], %130 {strides = array<i32>} : memref<8x8x32xf32, #tpu.memory_space<vmem>>, vector<1x8x32xf32>,
    %c4_i32 = arith.constant 4 : i32
    %c7_i32_52 = arith.constant 7 : i32
    %131 = arith.subi %c7_i32_52, %c4_i32 : i32
    %132 = arith.index_cast %131 : i32 to index
    %c0_53 = arith.constant 0 : index
    %c0_54 = arith.constant 0 : index
    %133 = vector.load %arg10[%132, %c0_53, %c0_54] : memref<8x8x128xf32, #tpu.memory_space<vmem>>, vector<1x8x128xf32>
    %134 = vector.shape_cast %133 : vector<1x8x128xf32> to vector<8x128xf32>
    %cst_55 = arith.constant dense<0.000000e+00> : vector<8x128xf32>
    %135 = tpu.matmul %122, %12, %cst_55 {dimension_numbers = #tpu.dot_dimension_numbers<[1], [0], [0], [1], [0, 0, 1, 1], [], []>} : vector<8x32xf32>, vector<32x128xf32>, vector<8x128xf32> -> vector<8x128xf32>
    %136 = arith.addf %134, %135 : vector<8x128xf32>
    %137 = arith.negf %136 : vector<8x128xf32>
    %138 = math.exp %137 : vector<8x128xf32>
    %cst_56 = arith.constant 1.000000e+00 : f32
    %139 = vector.broadcast %cst_56 : f32 to vector<8x128xf32>
    %140 = arith.addf %139, %138 : vector<8x128xf32>
    %141 = arith.divf %139, %140 : vector<8x128xf32>
    %142 = math.tanh %136 : vector<8x128xf32>
    %143 = vector.extract_strided_slice %141 {offsets = [0, 0], sizes = [8, 32], strides = [1, 1]} : vector<8x128xf32> to vector<8x32xf32>
    %144 = vector.extract_strided_slice %141 {offsets = [0, 32], sizes = [8, 32], strides = [1, 1]} : vector<8x128xf32> to vector<8x32xf32>
    %145 = vector.extract_strided_slice %142 {offsets = [0, 64], sizes = [8, 32], strides = [1, 1]} : vector<8x128xf32> to vector<8x32xf32>
    %146 = vector.extract_strided_slice %141 {offsets = [0, 96], sizes = [8, 32], strides = [1, 1]} : vector<8x128xf32> to vector<8x32xf32>
    %147 = arith.mulf %144, %120 : vector<8x32xf32>
    %148 = arith.mulf %143, %145 : vector<8x32xf32>
    %149 = arith.addf %147, %148 : vector<8x32xf32>
    %150 = math.tanh %149 : vector<8x32xf32>
    %151 = arith.mulf %146, %150 : vector<8x32xf32>
    %152 = arith.index_cast %131 : i32 to index
    %c0_57 = arith.constant 0 : index
    %c0_58 = arith.constant 0 : index
    %153 = vector.load %arg3[%152, %c0_57, %c0_58] : memref<8x8x32xf32, #tpu.memory_space<vmem>>, vector<1x8x32xf32>
    %154 = vector.shape_cast %153 : vector<1x8x32xf32> to vector<8x32xf32>
    %155 = arith.addf %154, %151 : vector<8x32xf32>
    %156 = arith.index_cast %131 : i32 to index
    %c0_59 = arith.constant 0 : index
    %c0_60 = arith.constant 0 : index
    %157 = vector.load %arg7[%156, %c0_59, %c0_60] : memref<8x8x32xf32, #tpu.memory_space<vmem>>, vector<1x8x32xf32>
    %158 = vector.shape_cast %157 : vector<1x8x32xf32> to vector<8x32xf32>
    %159 = vector.shape_cast %155 : vector<8x32xf32> to vector<1x8x32xf32>
    tpu.vector_store %arg7[%156, %c0_59, %c0_60], %159 {strides = array<i32>} : memref<8x8x32xf32, #tpu.memory_space<vmem>>, vector<1x8x32xf32>,
    %c5_i32 = arith.constant 5 : i32
    %c7_i32_61 = arith.constant 7 : i32
    %160 = arith.subi %c7_i32_61, %c5_i32 : i32
    %161 = arith.index_cast %160 : i32 to index
    %c0_62 = arith.constant 0 : index
    %c0_63 = arith.constant 0 : index
    %162 = vector.load %arg10[%161, %c0_62, %c0_63] : memref<8x8x128xf32, #tpu.memory_space<vmem>>, vector<1x8x128xf32>
    %163 = vector.shape_cast %162 : vector<1x8x128xf32> to vector<8x128xf32>
    %cst_64 = arith.constant dense<0.000000e+00> : vector<8x128xf32>
    %164 = tpu.matmul %151, %12, %cst_64 {dimension_numbers = #tpu.dot_dimension_numbers<[1], [0], [0], [1], [0, 0, 1, 1], [], []>} : vector<8x32xf32>, vector<32x128xf32>, vector<8x128xf32> -> vector<8x128xf32>
    %165 = arith.addf %163, %164 : vector<8x128xf32>
    %166 = arith.negf %165 : vector<8x128xf32>
    %167 = math.exp %166 : vector<8x128xf32>
    %cst_65 = arith.constant 1.000000e+00 : f32
    %168 = vector.broadcast %cst_65 : f32 to vector<8x128xf32>
    %169 = arith.addf %168, %167 : vector<8x128xf32>
    %170 = arith.divf %168, %169 : vector<8x128xf32>
    %171 = math.tanh %165 : vector<8x128xf32>
    %172 = vector.extract_strided_slice %170 {offsets = [0, 0], sizes = [8, 32], strides = [1, 1]} : vector<8x128xf32> to vector<8x32xf32>
    %173 = vector.extract_strided_slice %170 {offsets = [0, 32], sizes = [8, 32], strides = [1, 1]} : vector<8x128xf32> to vector<8x32xf32>
    %174 = vector.extract_strided_slice %171 {offsets = [0, 64], sizes = [8, 32], strides = [1, 1]} : vector<8x128xf32> to vector<8x32xf32>
    %175 = vector.extract_strided_slice %170 {offsets = [0, 96], sizes = [8, 32], strides = [1, 1]} : vector<8x128xf32> to vector<8x32xf32>
    %176 = arith.mulf %173, %149 : vector<8x32xf32>
    %177 = arith.mulf %172, %174 : vector<8x32xf32>
    %178 = arith.addf %176, %177 : vector<8x32xf32>
    %179 = math.tanh %178 : vector<8x32xf32>
    %180 = arith.mulf %175, %179 : vector<8x32xf32>
    %181 = arith.index_cast %160 : i32 to index
    %c0_66 = arith.constant 0 : index
    %c0_67 = arith.constant 0 : index
    %182 = vector.load %arg3[%181, %c0_66, %c0_67] : memref<8x8x32xf32, #tpu.memory_space<vmem>>, vector<1x8x32xf32>
    %183 = vector.shape_cast %182 : vector<1x8x32xf32> to vector<8x32xf32>
    %184 = arith.addf %183, %180 : vector<8x32xf32>
    %185 = arith.index_cast %160 : i32 to index
    %c0_68 = arith.constant 0 : index
    %c0_69 = arith.constant 0 : index
    %186 = vector.load %arg7[%185, %c0_68, %c0_69] : memref<8x8x32xf32, #tpu.memory_space<vmem>>, vector<1x8x32xf32>
    %187 = vector.shape_cast %186 : vector<1x8x32xf32> to vector<8x32xf32>
    %188 = vector.shape_cast %184 : vector<8x32xf32> to vector<1x8x32xf32>
    tpu.vector_store %arg7[%185, %c0_68, %c0_69], %188 {strides = array<i32>} : memref<8x8x32xf32, #tpu.memory_space<vmem>>, vector<1x8x32xf32>,
    %c6_i32 = arith.constant 6 : i32
    %c7_i32_70 = arith.constant 7 : i32
    %189 = arith.subi %c7_i32_70, %c6_i32 : i32
    %190 = arith.index_cast %189 : i32 to index
    %c0_71 = arith.constant 0 : index
    %c0_72 = arith.constant 0 : index
    %191 = vector.load %arg10[%190, %c0_71, %c0_72] : memref<8x8x128xf32, #tpu.memory_space<vmem>>, vector<1x8x128xf32>
    %192 = vector.shape_cast %191 : vector<1x8x128xf32> to vector<8x128xf32>
    %cst_73 = arith.constant dense<0.000000e+00> : vector<8x128xf32>
    %193 = tpu.matmul %180, %12, %cst_73 {dimension_numbers = #tpu.dot_dimension_numbers<[1], [0], [0], [1], [0, 0, 1, 1], [], []>} : vector<8x32xf32>, vector<32x128xf32>, vector<8x128xf32> -> vector<8x128xf32>
    %194 = arith.addf %192, %193 : vector<8x128xf32>
    %195 = arith.negf %194 : vector<8x128xf32>
    %196 = math.exp %195 : vector<8x128xf32>
    %cst_74 = arith.constant 1.000000e+00 : f32
    %197 = vector.broadcast %cst_74 : f32 to vector<8x128xf32>
    %198 = arith.addf %197, %196 : vector<8x128xf32>
    %199 = arith.divf %197, %198 : vector<8x128xf32>
    %200 = math.tanh %194 : vector<8x128xf32>
    %201 = vector.extract_strided_slice %199 {offsets = [0, 0], sizes = [8, 32], strides = [1, 1]} : vector<8x128xf32> to vector<8x32xf32>
    %202 = vector.extract_strided_slice %199 {offsets = [0, 32], sizes = [8, 32], strides = [1, 1]} : vector<8x128xf32> to vector<8x32xf32>
    %203 = vector.extract_strided_slice %200 {offsets = [0, 64], sizes = [8, 32], strides = [1, 1]} : vector<8x128xf32> to vector<8x32xf32>
    %204 = vector.extract_strided_slice %199 {offsets = [0, 96], sizes = [8, 32], strides = [1, 1]} : vector<8x128xf32> to vector<8x32xf32>
    %205 = arith.mulf %202, %178 : vector<8x32xf32>
    %206 = arith.mulf %201, %203 : vector<8x32xf32>
    %207 = arith.addf %205, %206 : vector<8x32xf32>
    %208 = math.tanh %207 : vector<8x32xf32>
    %209 = arith.mulf %204, %208 : vector<8x32xf32>
    %210 = arith.index_cast %189 : i32 to index
    %c0_75 = arith.constant 0 : index
    %c0_76 = arith.constant 0 : index
    %211 = vector.load %arg3[%210, %c0_75, %c0_76] : memref<8x8x32xf32, #tpu.memory_space<vmem>>, vector<1x8x32xf32>
    %212 = vector.shape_cast %211 : vector<1x8x32xf32> to vector<8x32xf32>
    %213 = arith.addf %212, %209 : vector<8x32xf32>
    %214 = arith.index_cast %189 : i32 to index
    %c0_77 = arith.constant 0 : index
    %c0_78 = arith.constant 0 : index
    %215 = vector.load %arg7[%214, %c0_77, %c0_78] : memref<8x8x32xf32, #tpu.memory_space<vmem>>, vector<1x8x32xf32>
    %216 = vector.shape_cast %215 : vector<1x8x32xf32> to vector<8x32xf32>
    %217 = vector.shape_cast %213 : vector<8x32xf32> to vector<1x8x32xf32>
    tpu.vector_store %arg7[%214, %c0_77, %c0_78], %217 {strides = array<i32>} : memref<8x8x32xf32, #tpu.memory_space<vmem>>, vector<1x8x32xf32>,
    %c7_i32_79 = arith.constant 7 : i32
    %c7_i32_80 = arith.constant 7 : i32
    %218 = arith.subi %c7_i32_80, %c7_i32_79 : i32
    %219 = arith.index_cast %218 : i32 to index
    %c0_81 = arith.constant 0 : index
    %c0_82 = arith.constant 0 : index
    %220 = vector.load %arg10[%219, %c0_81, %c0_82] : memref<8x8x128xf32, #tpu.memory_space<vmem>>, vector<1x8x128xf32>
    %221 = vector.shape_cast %220 : vector<1x8x128xf32> to vector<8x128xf32>
    %cst_83 = arith.constant dense<0.000000e+00> : vector<8x128xf32>
    %222 = tpu.matmul %209, %12, %cst_83 {dimension_numbers = #tpu.dot_dimension_numbers<[1], [0], [0], [1], [0, 0, 1, 1], [], []>} : vector<8x32xf32>, vector<32x128xf32>, vector<8x128xf32> -> vector<8x128xf32>
    %223 = arith.addf %221, %222 : vector<8x128xf32>
    %224 = arith.negf %223 : vector<8x128xf32>
    %225 = math.exp %224 : vector<8x128xf32>
    %cst_84 = arith.constant 1.000000e+00 : f32
    %226 = vector.broadcast %cst_84 : f32 to vector<8x128xf32>
    %227 = arith.addf %226, %225 : vector<8x128xf32>
    %228 = arith.divf %226, %227 : vector<8x128xf32>
    %229 = math.tanh %223 : vector<8x128xf32>
    %230 = vector.extract_strided_slice %228 {offsets = [0, 0], sizes = [8, 32], strides = [1, 1]} : vector<8x128xf32> to vector<8x32xf32>
    %231 = vector.extract_strided_slice %228 {offsets = [0, 32], sizes = [8, 32], strides = [1, 1]} : vector<8x128xf32> to vector<8x32xf32>
    %232 = vector.extract_strided_slice %229 {offsets = [0, 64], sizes = [8, 32], strides = [1, 1]} : vector<8x128xf32> to vector<8x32xf32>
    %233 = vector.extract_strided_slice %228 {offsets = [0, 96], sizes = [8, 32], strides = [1, 1]} : vector<8x128xf32> to vector<8x32xf32>
    %234 = arith.mulf %231, %207 : vector<8x32xf32>
    %235 = arith.mulf %230, %232 : vector<8x32xf32>
    %236 = arith.addf %234, %235 : vector<8x32xf32>
    %237 = math.tanh %236 : vector<8x32xf32>
    %238 = arith.mulf %233, %237 : vector<8x32xf32>
    %239 = arith.index_cast %218 : i32 to index
    %c0_85 = arith.constant 0 : index
    %c0_86 = arith.constant 0 : index
    %240 = vector.load %arg3[%239, %c0_85, %c0_86] : memref<8x8x32xf32, #tpu.memory_space<vmem>>, vector<1x8x32xf32>
    %241 = vector.shape_cast %240 : vector<1x8x32xf32> to vector<8x32xf32>
    %242 = arith.addf %241, %238 : vector<8x32xf32>
    %243 = arith.index_cast %218 : i32 to index
    %c0_87 = arith.constant 0 : index
    %c0_88 = arith.constant 0 : index
    %244 = vector.load %arg7[%243, %c0_87, %c0_88] : memref<8x8x32xf32, #tpu.memory_space<vmem>>, vector<1x8x32xf32>
    %245 = vector.shape_cast %244 : vector<1x8x32xf32> to vector<8x32xf32>
    %246 = vector.shape_cast %242 : vector<8x32xf32> to vector<1x8x32xf32>
    tpu.vector_store %arg7[%243, %c0_87, %c0_88], %246 {strides = array<i32>} : memref<8x8x32xf32, #tpu.memory_space<vmem>>, vector<1x8x32xf32>,
    %c8_i32 = arith.constant 8 : i32
    %c0_89 = arith.constant 0 : index
    %c0_90 = arith.constant 0 : index
    %247 = vector.load %arg11[%c0_89, %c0_90] : memref<8x32xf32, #tpu.memory_space<vmem>>, vector<8x32xf32>
    tpu.vector_store %arg11[%c0_89, %c0_90], %238 {strides = array<i32>} : memref<8x32xf32, #tpu.memory_space<vmem>>, vector<8x32xf32>,
    %c0_91 = arith.constant 0 : index
    %c0_92 = arith.constant 0 : index
    %248 = vector.load %arg12[%c0_91, %c0_92] : memref<8x32xf32, #tpu.memory_space<vmem>>, vector<8x32xf32>
    tpu.vector_store %arg12[%c0_91, %c0_92], %236 {strides = array<i32>} : memref<8x32xf32, #tpu.memory_space<vmem>>, vector<8x32xf32>,
    %c0_93 = arith.constant 0 : index
    %c0_94 = arith.constant 0 : index
    %249 = vector.load %arg8[%c0_93, %c0_94] : memref<8x32xf32, #tpu.memory_space<vmem>>, vector<8x32xf32>
    tpu.vector_store %arg8[%c0_93, %c0_94], %238 {strides = array<i32>} : memref<8x32xf32, #tpu.memory_space<vmem>>, vector<8x32xf32>,
    %c0_95 = arith.constant 0 : index
    %c0_96 = arith.constant 0 : index
    %250 = vector.load %arg9[%c0_95, %c0_96] : memref<8x32xf32, #tpu.memory_space<vmem>>, vector<8x32xf32>
    tpu.vector_store %arg9[%c0_95, %c0_96], %236 {strides = array<i32>} : memref<8x32xf32, #tpu.memory_space<vmem>>, vector<8x32xf32>,
    return
  }
  func.func @transform_0(%arg0: i32, %arg1: i32) -> (i32, i32, i32) {
    %c0_i32 = arith.constant 0 : i32
    %0 = arith.subi %c0_i32, %arg1 : i32
    %c0_i32_0 = arith.constant 0 : i32
    %c0_i32_1 = arith.constant 0 : i32
    return %0, %arg0, %c0_i32_0 : i32, i32, i32
  }
  func.func @transform_1(%arg0: i32, %arg1: i32) -> (i32, i32, i32) {
    %c0_i32 = arith.constant 0 : i32
    %0 = arith.subi %c0_i32, %arg1 : i32
    %c0_i32_0 = arith.constant 0 : i32
    %c0_i32_1 = arith.constant 0 : i32
    return %0, %arg0, %c0_i32_0 : i32, i32, i32
  }
  func.func @transform_2(%arg0: i32, %arg1: i32) -> (i32, i32) {
    %c0_i32 = arith.constant 0 : i32
    %c0_i32_0 = arith.constant 0 : i32
    %c0_i32_1 = arith.constant 0 : i32
    return %c0_i32, %c0_i32_0 : i32, i32
  }
  func.func @transform_3(%arg0: i32, %arg1: i32) -> (i32, i32) {
    %c0_i32 = arith.constant 0 : i32
    %c0_i32_0 = arith.constant 0 : i32
    %c0_i32_1 = arith.constant 0 : i32
    return %c0_i32, %c0_i32_0 : i32, i32
  }
  func.func @transform_4(%arg0: i32, %arg1: i32) -> (i32, i32) {
    %c0_i32 = arith.constant 0 : i32
    %c0_i32_0 = arith.constant 0 : i32
    %c0_i32_1 = arith.constant 0 : i32
    return %c0_i32, %c0_i32_0 : i32, i32
  }
  func.func @transform_5(%arg0: i32, %arg1: i32) -> (i32, i32, i32) {
    %c0_i32 = arith.constant 0 : i32
    %0 = arith.subi %c0_i32, %arg1 : i32
    %c0_i32_0 = arith.constant 0 : i32
    %c0_i32_1 = arith.constant 0 : i32
    return %0, %arg0, %c0_i32_0 : i32, i32, i32
  }
  func.func @transform_6(%arg0: i32, %arg1: i32) -> (i32, i32) {
    %c0_i32 = arith.constant 0 : i32
    %c0_i32_0 = arith.constant 0 : i32
    return %arg0, %c0_i32 : i32, i32
  }
  func.func @transform_7(%arg0: i32, %arg1: i32) -> (i32, i32) {
    %c0_i32 = arith.constant 0 : i32
    %c0_i32_0 = arith.constant 0 : i32
    return %arg0, %c0_i32 : i32, i32
  }
}

module attributes {stable_mosaic.version = 11 : i64} {
  func.func @_dec_chunk_kernel(%arg0: i32, %arg1: i32, %arg2: memref<7x8x32xf32, #tpu.memory_space<vmem>>, %arg3: memref<32x128xf32, #tpu.memory_space<vmem>>, %arg4: memref<32x128xf32, #tpu.memory_space<vmem>>, %arg5: memref<1x128xf32, #tpu.memory_space<vmem>>, %arg6: memref<32x128xf32, #tpu.memory_space<vmem>>, %arg7: memref<32x128xf32, #tpu.memory_space<vmem>>, %arg8: memref<1x128xf32, #tpu.memory_space<vmem>>, %arg9: memref<8x32xf32, #tpu.memory_space<vmem>>, %arg10: memref<8x32xf32, #tpu.memory_space<vmem>>, %arg11: memref<8x32xf32, #tpu.memory_space<vmem>>, %arg12: memref<7x8x32xf32, #tpu.memory_space<vmem>>, %arg13: memref<7x8x128xf32, #tpu.memory_space<vmem>>, %arg14: memref<8x32xf32, #tpu.memory_space<vmem>>, %arg15: memref<8x32xf32, #tpu.memory_space<vmem>>, %arg16: memref<8x32xf32, #tpu.memory_space<vmem>>) attributes {dimension_semantics = [#tpu.dimension_semantics<parallel>, #tpu.dimension_semantics<arbitrary>], iteration_bounds = array<i64: 1, 1>, scalar_prefetch = 0 : i64, scratch_operands = 4 : i64, tpu.core_type = #tpu.core_type<tc>, window_params = [{transform_indices = @transform_0, window_bounds = array<i64: 7, 8, 32>}, {pipeline_mode = #tpu.pipeline_mode<synchronous>, transform_indices = @transform_1, window_bounds = array<i64: 32, 128>}, {pipeline_mode = #tpu.pipeline_mode<synchronous>, transform_indices = @transform_2, window_bounds = array<i64: 32, 128>}, {pipeline_mode = #tpu.pipeline_mode<synchronous>, transform_indices = @transform_3, window_bounds = array<i64: 1, 128>}, {pipeline_mode = #tpu.pipeline_mode<synchronous>, transform_indices = @transform_4, window_bounds = array<i64: 32, 128>}, {pipeline_mode = #tpu.pipeline_mode<synchronous>, transform_indices = @transform_5, window_bounds = array<i64: 32, 128>}, {pipeline_mode = #tpu.pipeline_mode<synchronous>, transform_indices = @transform_6, window_bounds = array<i64: 1, 128>}, {transform_indices = @transform_7, window_bounds = array<i64: 8, 32>}, {transform_indices = @transform_8, window_bounds = array<i64: 8, 32>}, {transform_indices = @transform_9, window_bounds = array<i64: 8, 32>}, {transform_indices = @transform_10, window_bounds = array<i64: 7, 8, 32>}]} {
    %c0_i32 = arith.constant 0 : i32
    %0 = arith.cmpi eq, %arg1, %c0_i32 : i32
    %1 = arith.extui %0 : i1 to i32
    %c0_i32_0 = arith.constant 0 : i32
    %2 = arith.cmpi ne, %1, %c0_i32_0 : i32
    scf.if %2 {
      %c0_94 = arith.constant 0 : index
      %c0_95 = arith.constant 0 : index
      %304 = vector.load %arg9[%c0_94, %c0_95] : memref<8x32xf32, #tpu.memory_space<vmem>>, vector<8x32xf32>
      %c0_96 = arith.constant 0 : index
      %c0_97 = arith.constant 0 : index
      %305 = vector.load %arg14[%c0_96, %c0_97] : memref<8x32xf32, #tpu.memory_space<vmem>>, vector<8x32xf32>
      tpu.vector_store %arg14[%c0_96, %c0_97], %304 {strides = array<i32>} : memref<8x32xf32, #tpu.memory_space<vmem>>, vector<8x32xf32>,
      %c0_98 = arith.constant 0 : index
      %c0_99 = arith.constant 0 : index
      %306 = vector.load %arg10[%c0_98, %c0_99] : memref<8x32xf32, #tpu.memory_space<vmem>>, vector<8x32xf32>
      %c0_100 = arith.constant 0 : index
      %c0_101 = arith.constant 0 : index
      %307 = vector.load %arg15[%c0_100, %c0_101] : memref<8x32xf32, #tpu.memory_space<vmem>>, vector<8x32xf32>
      tpu.vector_store %arg15[%c0_100, %c0_101], %306 {strides = array<i32>} : memref<8x32xf32, #tpu.memory_space<vmem>>, vector<8x32xf32>,
      %c0_102 = arith.constant 0 : index
      %c0_103 = arith.constant 0 : index
      %308 = vector.load %arg11[%c0_102, %c0_103] : memref<8x32xf32, #tpu.memory_space<vmem>>, vector<8x32xf32>
      %c0_104 = arith.constant 0 : index
      %c0_105 = arith.constant 0 : index
      %309 = vector.load %arg16[%c0_104, %c0_105] : memref<8x32xf32, #tpu.memory_space<vmem>>, vector<8x32xf32>
      tpu.vector_store %arg16[%c0_104, %c0_105], %308 {strides = array<i32>} : memref<8x32xf32, #tpu.memory_space<vmem>>, vector<8x32xf32>,
    } else {
    }
    %c0 = arith.constant 0 : index
    %c0_1 = arith.constant 0 : index
    %c0_2 = arith.constant 0 : index
    %3 = vector.load %arg2[%c0, %c0_1, %c0_2] : memref<7x8x32xf32, #tpu.memory_space<vmem>>, vector<7x8x32xf32>
    %4 = vector.shape_cast %3 : vector<7x8x32xf32> to vector<56x32xf32>
    %c0_3 = arith.constant 0 : index
    %c0_4 = arith.constant 0 : index
    %5 = vector.load %arg3[%c0_3, %c0_4] : memref<32x128xf32, #tpu.memory_space<vmem>>, vector<32x128xf32>
    %cst = arith.constant dense<0.000000e+00> : vector<56x128xf32>
    %6 = tpu.matmul %4, %5, %cst {dimension_numbers = #tpu.dot_dimension_numbers<[1], [0], [0], [1], [0, 0, 1, 1], [], []>} : vector<56x32xf32>, vector<32x128xf32>, vector<56x128xf32> -> vector<56x128xf32>
    %c0_5 = arith.constant 0 : index
    %c0_6 = arith.constant 0 : index
    %7 = vector.load %arg5[%c0_5, %c0_6] : memref<1x128xf32, #tpu.memory_space<vmem>>, vector<1x128xf32>
    %8 = vector.broadcast %7 : vector<1x128xf32> to vector<56x128xf32>
    %9 = arith.addf %6, %8 : vector<56x128xf32>
    %10 = vector.shape_cast %9 : vector<56x128xf32> to vector<7x8x128xf32>
    %c0_7 = arith.constant 0 : index
    %c0_8 = arith.constant 0 : index
    %c0_9 = arith.constant 0 : index
    %11 = vector.load %arg13[%c0_7, %c0_8, %c0_9] : memref<7x8x128xf32, #tpu.memory_space<vmem>>, vector<7x8x128xf32>
    tpu.vector_store %arg13[%c0_7, %c0_8, %c0_9], %10 {strides = array<i32>} : memref<7x8x128xf32, #tpu.memory_space<vmem>>, vector<7x8x128xf32>,
    %c0_10 = arith.constant 0 : index
    %c0_11 = arith.constant 0 : index
    %12 = vector.load %arg4[%c0_10, %c0_11] : memref<32x128xf32, #tpu.memory_space<vmem>>, vector<32x128xf32>
    %c0_12 = arith.constant 0 : index
    %c0_13 = arith.constant 0 : index
    %13 = vector.load %arg6[%c0_12, %c0_13] : memref<32x128xf32, #tpu.memory_space<vmem>>, vector<32x128xf32>
    %c0_14 = arith.constant 0 : index
    %c0_15 = arith.constant 0 : index
    %14 = vector.load %arg7[%c0_14, %c0_15] : memref<32x128xf32, #tpu.memory_space<vmem>>, vector<32x128xf32>
    %c0_16 = arith.constant 0 : index
    %c0_17 = arith.constant 0 : index
    %15 = vector.load %arg8[%c0_16, %c0_17] : memref<1x128xf32, #tpu.memory_space<vmem>>, vector<1x128xf32>
    %16 = vector.shape_cast %15 : vector<1x128xf32> to vector<1x128xf32>
    %17 = vector.broadcast %16 : vector<1x128xf32> to vector<8x128xf32>
    %c0_18 = arith.constant 0 : index
    %c0_19 = arith.constant 0 : index
    %18 = vector.load %arg14[%c0_18, %c0_19] : memref<8x32xf32, #tpu.memory_space<vmem>>, vector<8x32xf32>
    %c0_20 = arith.constant 0 : index
    %c0_21 = arith.constant 0 : index
    %19 = vector.load %arg15[%c0_20, %c0_21] : memref<8x32xf32, #tpu.memory_space<vmem>>, vector<8x32xf32>
    %c0_22 = arith.constant 0 : index
    %c0_23 = arith.constant 0 : index
    %20 = vector.load %arg16[%c0_22, %c0_23] : memref<8x32xf32, #tpu.memory_space<vmem>>, vector<8x32xf32>
    %c0_i32_24 = arith.constant 0 : i32
    %21 = arith.index_cast %c0_i32_24 : i32 to index
    %c0_25 = arith.constant 0 : index
    %c0_26 = arith.constant 0 : index
    %22 = vector.load %arg13[%21, %c0_25, %c0_26] : memref<7x8x128xf32, #tpu.memory_space<vmem>>, vector<1x8x128xf32>
    %23 = vector.shape_cast %22 : vector<1x8x128xf32> to vector<8x128xf32>
    %cst_27 = arith.constant dense<0.000000e+00> : vector<8x128xf32>
    %24 = tpu.matmul %18, %12, %cst_27 {dimension_numbers = #tpu.dot_dimension_numbers<[1], [0], [0], [1], [0, 0, 1, 1], [], []>} : vector<8x32xf32>, vector<32x128xf32>, vector<8x128xf32> -> vector<8x128xf32>
    %25 = arith.addf %23, %24 : vector<8x128xf32>
    %26 = arith.negf %25 : vector<8x128xf32>
    %27 = math.exp %26 : vector<8x128xf32>
    %cst_28 = arith.constant 1.000000e+00 : f32
    %28 = vector.broadcast %cst_28 : f32 to vector<8x128xf32>
    %29 = arith.addf %28, %27 : vector<8x128xf32>
    %30 = arith.divf %28, %29 : vector<8x128xf32>
    %31 = math.tanh %25 : vector<8x128xf32>
    %32 = vector.extract_strided_slice %30 {offsets = [0, 0], sizes = [8, 32], strides = [1, 1]} : vector<8x128xf32> to vector<8x32xf32>
    %33 = vector.extract_strided_slice %30 {offsets = [0, 32], sizes = [8, 32], strides = [1, 1]} : vector<8x128xf32> to vector<8x32xf32>
    %34 = vector.extract_strided_slice %31 {offsets = [0, 64], sizes = [8, 32], strides = [1, 1]} : vector<8x128xf32> to vector<8x32xf32>
    %35 = vector.extract_strided_slice %30 {offsets = [0, 96], sizes = [8, 32], strides = [1, 1]} : vector<8x128xf32> to vector<8x32xf32>
    %36 = arith.mulf %33, %19 : vector<8x32xf32>
    %37 = arith.mulf %32, %34 : vector<8x32xf32>
    %38 = arith.addf %36, %37 : vector<8x32xf32>
    %39 = math.tanh %38 : vector<8x32xf32>
    %40 = arith.mulf %35, %39 : vector<8x32xf32>
    %cst_29 = arith.constant dense<0.000000e+00> : vector<8x128xf32>
    %41 = tpu.matmul %40, %13, %cst_29 {dimension_numbers = #tpu.dot_dimension_numbers<[1], [0], [0], [1], [0, 0, 1, 1], [], []>} : vector<8x32xf32>, vector<32x128xf32>, vector<8x128xf32> -> vector<8x128xf32>
    %cst_30 = arith.constant dense<0.000000e+00> : vector<8x128xf32>
    %42 = tpu.matmul %20, %14, %cst_30 {dimension_numbers = #tpu.dot_dimension_numbers<[1], [0], [0], [1], [0, 0, 1, 1], [], []>} : vector<8x32xf32>, vector<32x128xf32>, vector<8x128xf32> -> vector<8x128xf32>
    %43 = arith.addf %41, %42 : vector<8x128xf32>
    %44 = arith.addf %43, %17 : vector<8x128xf32>
    %45 = arith.negf %44 : vector<8x128xf32>
    %46 = math.exp %45 : vector<8x128xf32>
    %cst_31 = arith.constant 1.000000e+00 : f32
    %47 = vector.broadcast %cst_31 : f32 to vector<8x128xf32>
    %48 = arith.addf %47, %46 : vector<8x128xf32>
    %49 = arith.divf %47, %48 : vector<8x128xf32>
    %50 = math.tanh %44 : vector<8x128xf32>
    %51 = vector.extract_strided_slice %49 {offsets = [0, 0], sizes = [8, 32], strides = [1, 1]} : vector<8x128xf32> to vector<8x32xf32>
    %52 = vector.extract_strided_slice %50 {offsets = [0, 64], sizes = [8, 32], strides = [1, 1]} : vector<8x128xf32> to vector<8x32xf32>
    %53 = vector.extract_strided_slice %49 {offsets = [0, 96], sizes = [8, 32], strides = [1, 1]} : vector<8x128xf32> to vector<8x32xf32>
    %54 = arith.mulf %51, %52 : vector<8x32xf32>
    %55 = math.tanh %54 : vector<8x32xf32>
    %56 = arith.mulf %53, %55 : vector<8x32xf32>
    %57 = arith.index_cast %c0_i32_24 : i32 to index
    %c0_32 = arith.constant 0 : index
    %c0_33 = arith.constant 0 : index
    %58 = vector.load %arg12[%57, %c0_32, %c0_33] : memref<7x8x32xf32, #tpu.memory_space<vmem>>, vector<1x8x32xf32>
    %59 = vector.shape_cast %58 : vector<1x8x32xf32> to vector<8x32xf32>
    %60 = vector.shape_cast %56 : vector<8x32xf32> to vector<1x8x32xf32>
    tpu.vector_store %arg12[%57, %c0_32, %c0_33], %60 {strides = array<i32>} : memref<7x8x32xf32, #tpu.memory_space<vmem>>, vector<1x8x32xf32>,
    %c1_i32 = arith.constant 1 : i32
    %61 = arith.index_cast %c1_i32 : i32 to index
    %c0_34 = arith.constant 0 : index
    %c0_35 = arith.constant 0 : index
    %62 = vector.load %arg13[%61, %c0_34, %c0_35] : memref<7x8x128xf32, #tpu.memory_space<vmem>>, vector<1x8x128xf32>
    %63 = vector.shape_cast %62 : vector<1x8x128xf32> to vector<8x128xf32>
    %cst_36 = arith.constant dense<0.000000e+00> : vector<8x128xf32>
    %64 = tpu.matmul %40, %12, %cst_36 {dimension_numbers = #tpu.dot_dimension_numbers<[1], [0], [0], [1], [0, 0, 1, 1], [], []>} : vector<8x32xf32>, vector<32x128xf32>, vector<8x128xf32> -> vector<8x128xf32>
    %65 = arith.addf %63, %64 : vector<8x128xf32>
    %66 = arith.negf %65 : vector<8x128xf32>
    %67 = math.exp %66 : vector<8x128xf32>
    %cst_37 = arith.constant 1.000000e+00 : f32
    %68 = vector.broadcast %cst_37 : f32 to vector<8x128xf32>
    %69 = arith.addf %68, %67 : vector<8x128xf32>
    %70 = arith.divf %68, %69 : vector<8x128xf32>
    %71 = math.tanh %65 : vector<8x128xf32>
    %72 = vector.extract_strided_slice %70 {offsets = [0, 0], sizes = [8, 32], strides = [1, 1]} : vector<8x128xf32> to vector<8x32xf32>
    %73 = vector.extract_strided_slice %70 {offsets = [0, 32], sizes = [8, 32], strides = [1, 1]} : vector<8x128xf32> to vector<8x32xf32>
    %74 = vector.extract_strided_slice %71 {offsets = [0, 64], sizes = [8, 32], strides = [1, 1]} : vector<8x128xf32> to vector<8x32xf32>
    %75 = vector.extract_strided_slice %70 {offsets = [0, 96], sizes = [8, 32], strides = [1, 1]} : vector<8x128xf32> to vector<8x32xf32>
    %76 = arith.mulf %73, %38 : vector<8x32xf32>
    %77 = arith.mulf %72, %74 : vector<8x32xf32>
    %78 = arith.addf %76, %77 : vector<8x32xf32>
    %79 = math.tanh %78 : vector<8x32xf32>
    %80 = arith.mulf %75, %79 : vector<8x32xf32>
    %cst_38 = arith.constant dense<0.000000e+00> : vector<8x128xf32>
    %81 = tpu.matmul %80, %13, %cst_38 {dimension_numbers = #tpu.dot_dimension_numbers<[1], [0], [0], [1], [0, 0, 1, 1], [], []>} : vector<8x32xf32>, vector<32x128xf32>, vector<8x128xf32> -> vector<8x128xf32>
    %cst_39 = arith.constant dense<0.000000e+00> : vector<8x128xf32>
    %82 = tpu.matmul %56, %14, %cst_39 {dimension_numbers = #tpu.dot_dimension_numbers<[1], [0], [0], [1], [0, 0, 1, 1], [], []>} : vector<8x32xf32>, vector<32x128xf32>, vector<8x128xf32> -> vector<8x128xf32>
    %83 = arith.addf %81, %82 : vector<8x128xf32>
    %84 = arith.addf %83, %17 : vector<8x128xf32>
    %85 = arith.negf %84 : vector<8x128xf32>
    %86 = math.exp %85 : vector<8x128xf32>
    %cst_40 = arith.constant 1.000000e+00 : f32
    %87 = vector.broadcast %cst_40 : f32 to vector<8x128xf32>
    %88 = arith.addf %87, %86 : vector<8x128xf32>
    %89 = arith.divf %87, %88 : vector<8x128xf32>
    %90 = math.tanh %84 : vector<8x128xf32>
    %91 = vector.extract_strided_slice %89 {offsets = [0, 0], sizes = [8, 32], strides = [1, 1]} : vector<8x128xf32> to vector<8x32xf32>
    %92 = vector.extract_strided_slice %90 {offsets = [0, 64], sizes = [8, 32], strides = [1, 1]} : vector<8x128xf32> to vector<8x32xf32>
    %93 = vector.extract_strided_slice %89 {offsets = [0, 96], sizes = [8, 32], strides = [1, 1]} : vector<8x128xf32> to vector<8x32xf32>
    %94 = arith.mulf %91, %92 : vector<8x32xf32>
    %95 = math.tanh %94 : vector<8x32xf32>
    %96 = arith.mulf %93, %95 : vector<8x32xf32>
    %97 = arith.index_cast %c1_i32 : i32 to index
    %c0_41 = arith.constant 0 : index
    %c0_42 = arith.constant 0 : index
    %98 = vector.load %arg12[%97, %c0_41, %c0_42] : memref<7x8x32xf32, #tpu.memory_space<vmem>>, vector<1x8x32xf32>
    %99 = vector.shape_cast %98 : vector<1x8x32xf32> to vector<8x32xf32>
    %100 = vector.shape_cast %96 : vector<8x32xf32> to vector<1x8x32xf32>
    tpu.vector_store %arg12[%97, %c0_41, %c0_42], %100 {strides = array<i32>} : memref<7x8x32xf32, #tpu.memory_space<vmem>>, vector<1x8x32xf32>,
    %c2_i32 = arith.constant 2 : i32
    %101 = arith.index_cast %c2_i32 : i32 to index
    %c0_43 = arith.constant 0 : index
    %c0_44 = arith.constant 0 : index
    %102 = vector.load %arg13[%101, %c0_43, %c0_44] : memref<7x8x128xf32, #tpu.memory_space<vmem>>, vector<1x8x128xf32>
    %103 = vector.shape_cast %102 : vector<1x8x128xf32> to vector<8x128xf32>
    %cst_45 = arith.constant dense<0.000000e+00> : vector<8x128xf32>
    %104 = tpu.matmul %80, %12, %cst_45 {dimension_numbers = #tpu.dot_dimension_numbers<[1], [0], [0], [1], [0, 0, 1, 1], [], []>} : vector<8x32xf32>, vector<32x128xf32>, vector<8x128xf32> -> vector<8x128xf32>
    %105 = arith.addf %103, %104 : vector<8x128xf32>
    %106 = arith.negf %105 : vector<8x128xf32>
    %107 = math.exp %106 : vector<8x128xf32>
    %cst_46 = arith.constant 1.000000e+00 : f32
    %108 = vector.broadcast %cst_46 : f32 to vector<8x128xf32>
    %109 = arith.addf %108, %107 : vector<8x128xf32>
    %110 = arith.divf %108, %109 : vector<8x128xf32>
    %111 = math.tanh %105 : vector<8x128xf32>
    %112 = vector.extract_strided_slice %110 {offsets = [0, 0], sizes = [8, 32], strides = [1, 1]} : vector<8x128xf32> to vector<8x32xf32>
    %113 = vector.extract_strided_slice %110 {offsets = [0, 32], sizes = [8, 32], strides = [1, 1]} : vector<8x128xf32> to vector<8x32xf32>
    %114 = vector.extract_strided_slice %111 {offsets = [0, 64], sizes = [8, 32], strides = [1, 1]} : vector<8x128xf32> to vector<8x32xf32>
    %115 = vector.extract_strided_slice %110 {offsets = [0, 96], sizes = [8, 32], strides = [1, 1]} : vector<8x128xf32> to vector<8x32xf32>
    %116 = arith.mulf %113, %78 : vector<8x32xf32>
    %117 = arith.mulf %112, %114 : vector<8x32xf32>
    %118 = arith.addf %116, %117 : vector<8x32xf32>
    %119 = math.tanh %118 : vector<8x32xf32>
    %120 = arith.mulf %115, %119 : vector<8x32xf32>
    %cst_47 = arith.constant dense<0.000000e+00> : vector<8x128xf32>
    %121 = tpu.matmul %120, %13, %cst_47 {dimension_numbers = #tpu.dot_dimension_numbers<[1], [0], [0], [1], [0, 0, 1, 1], [], []>} : vector<8x32xf32>, vector<32x128xf32>, vector<8x128xf32> -> vector<8x128xf32>
    %cst_48 = arith.constant dense<0.000000e+00> : vector<8x128xf32>
    %122 = tpu.matmul %96, %14, %cst_48 {dimension_numbers = #tpu.dot_dimension_numbers<[1], [0], [0], [1], [0, 0, 1, 1], [], []>} : vector<8x32xf32>, vector<32x128xf32>, vector<8x128xf32> -> vector<8x128xf32>
    %123 = arith.addf %121, %122 : vector<8x128xf32>
    %124 = arith.addf %123, %17 : vector<8x128xf32>
    %125 = arith.negf %124 : vector<8x128xf32>
    %126 = math.exp %125 : vector<8x128xf32>
    %cst_49 = arith.constant 1.000000e+00 : f32
    %127 = vector.broadcast %cst_49 : f32 to vector<8x128xf32>
    %128 = arith.addf %127, %126 : vector<8x128xf32>
    %129 = arith.divf %127, %128 : vector<8x128xf32>
    %130 = math.tanh %124 : vector<8x128xf32>
    %131 = vector.extract_strided_slice %129 {offsets = [0, 0], sizes = [8, 32], strides = [1, 1]} : vector<8x128xf32> to vector<8x32xf32>
    %132 = vector.extract_strided_slice %130 {offsets = [0, 64], sizes = [8, 32], strides = [1, 1]} : vector<8x128xf32> to vector<8x32xf32>
    %133 = vector.extract_strided_slice %129 {offsets = [0, 96], sizes = [8, 32], strides = [1, 1]} : vector<8x128xf32> to vector<8x32xf32>
    %134 = arith.mulf %131, %132 : vector<8x32xf32>
    %135 = math.tanh %134 : vector<8x32xf32>
    %136 = arith.mulf %133, %135 : vector<8x32xf32>
    %137 = arith.index_cast %c2_i32 : i32 to index
    %c0_50 = arith.constant 0 : index
    %c0_51 = arith.constant 0 : index
    %138 = vector.load %arg12[%137, %c0_50, %c0_51] : memref<7x8x32xf32, #tpu.memory_space<vmem>>, vector<1x8x32xf32>
    %139 = vector.shape_cast %138 : vector<1x8x32xf32> to vector<8x32xf32>
    %140 = vector.shape_cast %136 : vector<8x32xf32> to vector<1x8x32xf32>
    tpu.vector_store %arg12[%137, %c0_50, %c0_51], %140 {strides = array<i32>} : memref<7x8x32xf32, #tpu.memory_space<vmem>>, vector<1x8x32xf32>,
    %c3_i32 = arith.constant 3 : i32
    %141 = arith.index_cast %c3_i32 : i32 to index
    %c0_52 = arith.constant 0 : index
    %c0_53 = arith.constant 0 : index
    %142 = vector.load %arg13[%141, %c0_52, %c0_53] : memref<7x8x128xf32, #tpu.memory_space<vmem>>, vector<1x8x128xf32>
    %143 = vector.shape_cast %142 : vector<1x8x128xf32> to vector<8x128xf32>
    %cst_54 = arith.constant dense<0.000000e+00> : vector<8x128xf32>
    %144 = tpu.matmul %120, %12, %cst_54 {dimension_numbers = #tpu.dot_dimension_numbers<[1], [0], [0], [1], [0, 0, 1, 1], [], []>} : vector<8x32xf32>, vector<32x128xf32>, vector<8x128xf32> -> vector<8x128xf32>
    %145 = arith.addf %143, %144 : vector<8x128xf32>
    %146 = arith.negf %145 : vector<8x128xf32>
    %147 = math.exp %146 : vector<8x128xf32>
    %cst_55 = arith.constant 1.000000e+00 : f32
    %148 = vector.broadcast %cst_55 : f32 to vector<8x128xf32>
    %149 = arith.addf %148, %147 : vector<8x128xf32>
    %150 = arith.divf %148, %149 : vector<8x128xf32>
    %151 = math.tanh %145 : vector<8x128xf32>
    %152 = vector.extract_strided_slice %150 {offsets = [0, 0], sizes = [8, 32], strides = [1, 1]} : vector<8x128xf32> to vector<8x32xf32>
    %153 = vector.extract_strided_slice %150 {offsets = [0, 32], sizes = [8, 32], strides = [1, 1]} : vector<8x128xf32> to vector<8x32xf32>
    %154 = vector.extract_strided_slice %151 {offsets = [0, 64], sizes = [8, 32], strides = [1, 1]} : vector<8x128xf32> to vector<8x32xf32>
    %155 = vector.extract_strided_slice %150 {offsets = [0, 96], sizes = [8, 32], strides = [1, 1]} : vector<8x128xf32> to vector<8x32xf32>
    %156 = arith.mulf %153, %118 : vector<8x32xf32>
    %157 = arith.mulf %152, %154 : vector<8x32xf32>
    %158 = arith.addf %156, %157 : vector<8x32xf32>
    %159 = math.tanh %158 : vector<8x32xf32>
    %160 = arith.mulf %155, %159 : vector<8x32xf32>
    %cst_56 = arith.constant dense<0.000000e+00> : vector<8x128xf32>
    %161 = tpu.matmul %160, %13, %cst_56 {dimension_numbers = #tpu.dot_dimension_numbers<[1], [0], [0], [1], [0, 0, 1, 1], [], []>} : vector<8x32xf32>, vector<32x128xf32>, vector<8x128xf32> -> vector<8x128xf32>
    %cst_57 = arith.constant dense<0.000000e+00> : vector<8x128xf32>
    %162 = tpu.matmul %136, %14, %cst_57 {dimension_numbers = #tpu.dot_dimension_numbers<[1], [0], [0], [1], [0, 0, 1, 1], [], []>} : vector<8x32xf32>, vector<32x128xf32>, vector<8x128xf32> -> vector<8x128xf32>
    %163 = arith.addf %161, %162 : vector<8x128xf32>
    %164 = arith.addf %163, %17 : vector<8x128xf32>
    %165 = arith.negf %164 : vector<8x128xf32>
    %166 = math.exp %165 : vector<8x128xf32>
    %cst_58 = arith.constant 1.000000e+00 : f32
    %167 = vector.broadcast %cst_58 : f32 to vector<8x128xf32>
    %168 = arith.addf %167, %166 : vector<8x128xf32>
    %169 = arith.divf %167, %168 : vector<8x128xf32>
    %170 = math.tanh %164 : vector<8x128xf32>
    %171 = vector.extract_strided_slice %169 {offsets = [0, 0], sizes = [8, 32], strides = [1, 1]} : vector<8x128xf32> to vector<8x32xf32>
    %172 = vector.extract_strided_slice %170 {offsets = [0, 64], sizes = [8, 32], strides = [1, 1]} : vector<8x128xf32> to vector<8x32xf32>
    %173 = vector.extract_strided_slice %169 {offsets = [0, 96], sizes = [8, 32], strides = [1, 1]} : vector<8x128xf32> to vector<8x32xf32>
    %174 = arith.mulf %171, %172 : vector<8x32xf32>
    %175 = math.tanh %174 : vector<8x32xf32>
    %176 = arith.mulf %173, %175 : vector<8x32xf32>
    %177 = arith.index_cast %c3_i32 : i32 to index
    %c0_59 = arith.constant 0 : index
    %c0_60 = arith.constant 0 : index
    %178 = vector.load %arg12[%177, %c0_59, %c0_60] : memref<7x8x32xf32, #tpu.memory_space<vmem>>, vector<1x8x32xf32>
    %179 = vector.shape_cast %178 : vector<1x8x32xf32> to vector<8x32xf32>
    %180 = vector.shape_cast %176 : vector<8x32xf32> to vector<1x8x32xf32>
    tpu.vector_store %arg12[%177, %c0_59, %c0_60], %180 {strides = array<i32>} : memref<7x8x32xf32, #tpu.memory_space<vmem>>, vector<1x8x32xf32>,
    %c4_i32 = arith.constant 4 : i32
    %181 = arith.index_cast %c4_i32 : i32 to index
    %c0_61 = arith.constant 0 : index
    %c0_62 = arith.constant 0 : index
    %182 = vector.load %arg13[%181, %c0_61, %c0_62] : memref<7x8x128xf32, #tpu.memory_space<vmem>>, vector<1x8x128xf32>
    %183 = vector.shape_cast %182 : vector<1x8x128xf32> to vector<8x128xf32>
    %cst_63 = arith.constant dense<0.000000e+00> : vector<8x128xf32>
    %184 = tpu.matmul %160, %12, %cst_63 {dimension_numbers = #tpu.dot_dimension_numbers<[1], [0], [0], [1], [0, 0, 1, 1], [], []>} : vector<8x32xf32>, vector<32x128xf32>, vector<8x128xf32> -> vector<8x128xf32>
    %185 = arith.addf %183, %184 : vector<8x128xf32>
    %186 = arith.negf %185 : vector<8x128xf32>
    %187 = math.exp %186 : vector<8x128xf32>
    %cst_64 = arith.constant 1.000000e+00 : f32
    %188 = vector.broadcast %cst_64 : f32 to vector<8x128xf32>
    %189 = arith.addf %188, %187 : vector<8x128xf32>
    %190 = arith.divf %188, %189 : vector<8x128xf32>
    %191 = math.tanh %185 : vector<8x128xf32>
    %192 = vector.extract_strided_slice %190 {offsets = [0, 0], sizes = [8, 32], strides = [1, 1]} : vector<8x128xf32> to vector<8x32xf32>
    %193 = vector.extract_strided_slice %190 {offsets = [0, 32], sizes = [8, 32], strides = [1, 1]} : vector<8x128xf32> to vector<8x32xf32>
    %194 = vector.extract_strided_slice %191 {offsets = [0, 64], sizes = [8, 32], strides = [1, 1]} : vector<8x128xf32> to vector<8x32xf32>
    %195 = vector.extract_strided_slice %190 {offsets = [0, 96], sizes = [8, 32], strides = [1, 1]} : vector<8x128xf32> to vector<8x32xf32>
    %196 = arith.mulf %193, %158 : vector<8x32xf32>
    %197 = arith.mulf %192, %194 : vector<8x32xf32>
    %198 = arith.addf %196, %197 : vector<8x32xf32>
    %199 = math.tanh %198 : vector<8x32xf32>
    %200 = arith.mulf %195, %199 : vector<8x32xf32>
    %cst_65 = arith.constant dense<0.000000e+00> : vector<8x128xf32>
    %201 = tpu.matmul %200, %13, %cst_65 {dimension_numbers = #tpu.dot_dimension_numbers<[1], [0], [0], [1], [0, 0, 1, 1], [], []>} : vector<8x32xf32>, vector<32x128xf32>, vector<8x128xf32> -> vector<8x128xf32>
    %cst_66 = arith.constant dense<0.000000e+00> : vector<8x128xf32>
    %202 = tpu.matmul %176, %14, %cst_66 {dimension_numbers = #tpu.dot_dimension_numbers<[1], [0], [0], [1], [0, 0, 1, 1], [], []>} : vector<8x32xf32>, vector<32x128xf32>, vector<8x128xf32> -> vector<8x128xf32>
    %203 = arith.addf %201, %202 : vector<8x128xf32>
    %204 = arith.addf %203, %17 : vector<8x128xf32>
    %205 = arith.negf %204 : vector<8x128xf32>
    %206 = math.exp %205 : vector<8x128xf32>
    %cst_67 = arith.constant 1.000000e+00 : f32
    %207 = vector.broadcast %cst_67 : f32 to vector<8x128xf32>
    %208 = arith.addf %207, %206 : vector<8x128xf32>
    %209 = arith.divf %207, %208 : vector<8x128xf32>
    %210 = math.tanh %204 : vector<8x128xf32>
    %211 = vector.extract_strided_slice %209 {offsets = [0, 0], sizes = [8, 32], strides = [1, 1]} : vector<8x128xf32> to vector<8x32xf32>
    %212 = vector.extract_strided_slice %210 {offsets = [0, 64], sizes = [8, 32], strides = [1, 1]} : vector<8x128xf32> to vector<8x32xf32>
    %213 = vector.extract_strided_slice %209 {offsets = [0, 96], sizes = [8, 32], strides = [1, 1]} : vector<8x128xf32> to vector<8x32xf32>
    %214 = arith.mulf %211, %212 : vector<8x32xf32>
    %215 = math.tanh %214 : vector<8x32xf32>
    %216 = arith.mulf %213, %215 : vector<8x32xf32>
    %217 = arith.index_cast %c4_i32 : i32 to index
    %c0_68 = arith.constant 0 : index
    %c0_69 = arith.constant 0 : index
    %218 = vector.load %arg12[%217, %c0_68, %c0_69] : memref<7x8x32xf32, #tpu.memory_space<vmem>>, vector<1x8x32xf32>
    %219 = vector.shape_cast %218 : vector<1x8x32xf32> to vector<8x32xf32>
    %220 = vector.shape_cast %216 : vector<8x32xf32> to vector<1x8x32xf32>
    tpu.vector_store %arg12[%217, %c0_68, %c0_69], %220 {strides = array<i32>} : memref<7x8x32xf32, #tpu.memory_space<vmem>>, vector<1x8x32xf32>,
    %c5_i32 = arith.constant 5 : i32
    %221 = arith.index_cast %c5_i32 : i32 to index
    %c0_70 = arith.constant 0 : index
    %c0_71 = arith.constant 0 : index
    %222 = vector.load %arg13[%221, %c0_70, %c0_71] : memref<7x8x128xf32, #tpu.memory_space<vmem>>, vector<1x8x128xf32>
    %223 = vector.shape_cast %222 : vector<1x8x128xf32> to vector<8x128xf32>
    %cst_72 = arith.constant dense<0.000000e+00> : vector<8x128xf32>
    %224 = tpu.matmul %200, %12, %cst_72 {dimension_numbers = #tpu.dot_dimension_numbers<[1], [0], [0], [1], [0, 0, 1, 1], [], []>} : vector<8x32xf32>, vector<32x128xf32>, vector<8x128xf32> -> vector<8x128xf32>
    %225 = arith.addf %223, %224 : vector<8x128xf32>
    %226 = arith.negf %225 : vector<8x128xf32>
    %227 = math.exp %226 : vector<8x128xf32>
    %cst_73 = arith.constant 1.000000e+00 : f32
    %228 = vector.broadcast %cst_73 : f32 to vector<8x128xf32>
    %229 = arith.addf %228, %227 : vector<8x128xf32>
    %230 = arith.divf %228, %229 : vector<8x128xf32>
    %231 = math.tanh %225 : vector<8x128xf32>
    %232 = vector.extract_strided_slice %230 {offsets = [0, 0], sizes = [8, 32], strides = [1, 1]} : vector<8x128xf32> to vector<8x32xf32>
    %233 = vector.extract_strided_slice %230 {offsets = [0, 32], sizes = [8, 32], strides = [1, 1]} : vector<8x128xf32> to vector<8x32xf32>
    %234 = vector.extract_strided_slice %231 {offsets = [0, 64], sizes = [8, 32], strides = [1, 1]} : vector<8x128xf32> to vector<8x32xf32>
    %235 = vector.extract_strided_slice %230 {offsets = [0, 96], sizes = [8, 32], strides = [1, 1]} : vector<8x128xf32> to vector<8x32xf32>
    %236 = arith.mulf %233, %198 : vector<8x32xf32>
    %237 = arith.mulf %232, %234 : vector<8x32xf32>
    %238 = arith.addf %236, %237 : vector<8x32xf32>
    %239 = math.tanh %238 : vector<8x32xf32>
    %240 = arith.mulf %235, %239 : vector<8x32xf32>
    %cst_74 = arith.constant dense<0.000000e+00> : vector<8x128xf32>
    %241 = tpu.matmul %240, %13, %cst_74 {dimension_numbers = #tpu.dot_dimension_numbers<[1], [0], [0], [1], [0, 0, 1, 1], [], []>} : vector<8x32xf32>, vector<32x128xf32>, vector<8x128xf32> -> vector<8x128xf32>
    %cst_75 = arith.constant dense<0.000000e+00> : vector<8x128xf32>
    %242 = tpu.matmul %216, %14, %cst_75 {dimension_numbers = #tpu.dot_dimension_numbers<[1], [0], [0], [1], [0, 0, 1, 1], [], []>} : vector<8x32xf32>, vector<32x128xf32>, vector<8x128xf32> -> vector<8x128xf32>
    %243 = arith.addf %241, %242 : vector<8x128xf32>
    %244 = arith.addf %243, %17 : vector<8x128xf32>
    %245 = arith.negf %244 : vector<8x128xf32>
    %246 = math.exp %245 : vector<8x128xf32>
    %cst_76 = arith.constant 1.000000e+00 : f32
    %247 = vector.broadcast %cst_76 : f32 to vector<8x128xf32>
    %248 = arith.addf %247, %246 : vector<8x128xf32>
    %249 = arith.divf %247, %248 : vector<8x128xf32>
    %250 = math.tanh %244 : vector<8x128xf32>
    %251 = vector.extract_strided_slice %249 {offsets = [0, 0], sizes = [8, 32], strides = [1, 1]} : vector<8x128xf32> to vector<8x32xf32>
    %252 = vector.extract_strided_slice %250 {offsets = [0, 64], sizes = [8, 32], strides = [1, 1]} : vector<8x128xf32> to vector<8x32xf32>
    %253 = vector.extract_strided_slice %249 {offsets = [0, 96], sizes = [8, 32], strides = [1, 1]} : vector<8x128xf32> to vector<8x32xf32>
    %254 = arith.mulf %251, %252 : vector<8x32xf32>
    %255 = math.tanh %254 : vector<8x32xf32>
    %256 = arith.mulf %253, %255 : vector<8x32xf32>
    %257 = arith.index_cast %c5_i32 : i32 to index
    %c0_77 = arith.constant 0 : index
    %c0_78 = arith.constant 0 : index
    %258 = vector.load %arg12[%257, %c0_77, %c0_78] : memref<7x8x32xf32, #tpu.memory_space<vmem>>, vector<1x8x32xf32>
    %259 = vector.shape_cast %258 : vector<1x8x32xf32> to vector<8x32xf32>
    %260 = vector.shape_cast %256 : vector<8x32xf32> to vector<1x8x32xf32>
    tpu.vector_store %arg12[%257, %c0_77, %c0_78], %260 {strides = array<i32>} : memref<7x8x32xf32, #tpu.memory_space<vmem>>, vector<1x8x32xf32>,
    %c6_i32 = arith.constant 6 : i32
    %261 = arith.index_cast %c6_i32 : i32 to index
    %c0_79 = arith.constant 0 : index
    %c0_80 = arith.constant 0 : index
    %262 = vector.load %arg13[%261, %c0_79, %c0_80] : memref<7x8x128xf32, #tpu.memory_space<vmem>>, vector<1x8x128xf32>
    %263 = vector.shape_cast %262 : vector<1x8x128xf32> to vector<8x128xf32>
    %cst_81 = arith.constant dense<0.000000e+00> : vector<8x128xf32>
    %264 = tpu.matmul %240, %12, %cst_81 {dimension_numbers = #tpu.dot_dimension_numbers<[1], [0], [0], [1], [0, 0, 1, 1], [], []>} : vector<8x32xf32>, vector<32x128xf32>, vector<8x128xf32> -> vector<8x128xf32>
    %265 = arith.addf %263, %264 : vector<8x128xf32>
    %266 = arith.negf %265 : vector<8x128xf32>
    %267 = math.exp %266 : vector<8x128xf32>
    %cst_82 = arith.constant 1.000000e+00 : f32
    %268 = vector.broadcast %cst_82 : f32 to vector<8x128xf32>
    %269 = arith.addf %268, %267 : vector<8x128xf32>
    %270 = arith.divf %268, %269 : vector<8x128xf32>
    %271 = math.tanh %265 : vector<8x128xf32>
    %272 = vector.extract_strided_slice %270 {offsets = [0, 0], sizes = [8, 32], strides = [1, 1]} : vector<8x128xf32> to vector<8x32xf32>
    %273 = vector.extract_strided_slice %270 {offsets = [0, 32], sizes = [8, 32], strides = [1, 1]} : vector<8x128xf32> to vector<8x32xf32>
    %274 = vector.extract_strided_slice %271 {offsets = [0, 64], sizes = [8, 32], strides = [1, 1]} : vector<8x128xf32> to vector<8x32xf32>
    %275 = vector.extract_strided_slice %270 {offsets = [0, 96], sizes = [8, 32], strides = [1, 1]} : vector<8x128xf32> to vector<8x32xf32>
    %276 = arith.mulf %273, %238 : vector<8x32xf32>
    %277 = arith.mulf %272, %274 : vector<8x32xf32>
    %278 = arith.addf %276, %277 : vector<8x32xf32>
    %279 = math.tanh %278 : vector<8x32xf32>
    %280 = arith.mulf %275, %279 : vector<8x32xf32>
    %cst_83 = arith.constant dense<0.000000e+00> : vector<8x128xf32>
    %281 = tpu.matmul %280, %13, %cst_83 {dimension_numbers = #tpu.dot_dimension_numbers<[1], [0], [0], [1], [0, 0, 1, 1], [], []>} : vector<8x32xf32>, vector<32x128xf32>, vector<8x128xf32> -> vector<8x128xf32>
    %cst_84 = arith.constant dense<0.000000e+00> : vector<8x128xf32>
    %282 = tpu.matmul %256, %14, %cst_84 {dimension_numbers = #tpu.dot_dimension_numbers<[1], [0], [0], [1], [0, 0, 1, 1], [], []>} : vector<8x32xf32>, vector<32x128xf32>, vector<8x128xf32> -> vector<8x128xf32>
    %283 = arith.addf %281, %282 : vector<8x128xf32>
    %284 = arith.addf %283, %17 : vector<8x128xf32>
    %285 = arith.negf %284 : vector<8x128xf32>
    %286 = math.exp %285 : vector<8x128xf32>
    %cst_85 = arith.constant 1.000000e+00 : f32
    %287 = vector.broadcast %cst_85 : f32 to vector<8x128xf32>
    %288 = arith.addf %287, %286 : vector<8x128xf32>
    %289 = arith.divf %287, %288 : vector<8x128xf32>
    %290 = math.tanh %284 : vector<8x128xf32>
    %291 = vector.extract_strided_slice %289 {offsets = [0, 0], sizes = [8, 32], strides = [1, 1]} : vector<8x128xf32> to vector<8x32xf32>
    %292 = vector.extract_strided_slice %290 {offsets = [0, 64], sizes = [8, 32], strides = [1, 1]} : vector<8x128xf32> to vector<8x32xf32>
    %293 = vector.extract_strided_slice %289 {offsets = [0, 96], sizes = [8, 32], strides = [1, 1]} : vector<8x128xf32> to vector<8x32xf32>
    %294 = arith.mulf %291, %292 : vector<8x32xf32>
    %295 = math.tanh %294 : vector<8x32xf32>
    %296 = arith.mulf %293, %295 : vector<8x32xf32>
    %297 = arith.index_cast %c6_i32 : i32 to index
    %c0_86 = arith.constant 0 : index
    %c0_87 = arith.constant 0 : index
    %298 = vector.load %arg12[%297, %c0_86, %c0_87] : memref<7x8x32xf32, #tpu.memory_space<vmem>>, vector<1x8x32xf32>
    %299 = vector.shape_cast %298 : vector<1x8x32xf32> to vector<8x32xf32>
    %300 = vector.shape_cast %296 : vector<8x32xf32> to vector<1x8x32xf32>
    tpu.vector_store %arg12[%297, %c0_86, %c0_87], %300 {strides = array<i32>} : memref<7x8x32xf32, #tpu.memory_space<vmem>>, vector<1x8x32xf32>,
    %c7_i32 = arith.constant 7 : i32
    %c0_88 = arith.constant 0 : index
    %c0_89 = arith.constant 0 : index
    %301 = vector.load %arg14[%c0_88, %c0_89] : memref<8x32xf32, #tpu.memory_space<vmem>>, vector<8x32xf32>
    tpu.vector_store %arg14[%c0_88, %c0_89], %280 {strides = array<i32>} : memref<8x32xf32, #tpu.memory_space<vmem>>, vector<8x32xf32>,
    %c0_90 = arith.constant 0 : index
    %c0_91 = arith.constant 0 : index
    %302 = vector.load %arg15[%c0_90, %c0_91] : memref<8x32xf32, #tpu.memory_space<vmem>>, vector<8x32xf32>
    tpu.vector_store %arg15[%c0_90, %c0_91], %278 {strides = array<i32>} : memref<8x32xf32, #tpu.memory_space<vmem>>, vector<8x32xf32>,
    %c0_92 = arith.constant 0 : index
    %c0_93 = arith.constant 0 : index
    %303 = vector.load %arg16[%c0_92, %c0_93] : memref<8x32xf32, #tpu.memory_space<vmem>>, vector<8x32xf32>
    tpu.vector_store %arg16[%c0_92, %c0_93], %296 {strides = array<i32>} : memref<8x32xf32, #tpu.memory_space<vmem>>, vector<8x32xf32>,
    return
  }
  func.func @transform_0(%arg0: i32, %arg1: i32) -> (i32, i32, i32) {
    %c0_i32 = arith.constant 0 : i32
    %c0_i32_0 = arith.constant 0 : i32
    return %arg1, %arg0, %c0_i32 : i32, i32, i32
  }
  func.func @transform_1(%arg0: i32, %arg1: i32) -> (i32, i32) {
    %c0_i32 = arith.constant 0 : i32
    %c0_i32_0 = arith.constant 0 : i32
    %c0_i32_1 = arith.constant 0 : i32
    return %c0_i32, %c0_i32_0 : i32, i32
  }
  func.func @transform_2(%arg0: i32, %arg1: i32) -> (i32, i32) {
    %c0_i32 = arith.constant 0 : i32
    %c0_i32_0 = arith.constant 0 : i32
    %c0_i32_1 = arith.constant 0 : i32
    return %c0_i32, %c0_i32_0 : i32, i32
  }
  func.func @transform_3(%arg0: i32, %arg1: i32) -> (i32, i32) {
    %c0_i32 = arith.constant 0 : i32
    %c0_i32_0 = arith.constant 0 : i32
    %c0_i32_1 = arith.constant 0 : i32
    return %c0_i32, %c0_i32_0 : i32, i32
  }
  func.func @transform_4(%arg0: i32, %arg1: i32) -> (i32, i32) {
    %c0_i32 = arith.constant 0 : i32
    %c0_i32_0 = arith.constant 0 : i32
    %c0_i32_1 = arith.constant 0 : i32
    return %c0_i32, %c0_i32_0 : i32, i32
  }
  func.func @transform_5(%arg0: i32, %arg1: i32) -> (i32, i32) {
    %c0_i32 = arith.constant 0 : i32
    %c0_i32_0 = arith.constant 0 : i32
    %c0_i32_1 = arith.constant 0 : i32
    return %c0_i32, %c0_i32_0 : i32, i32
  }
  func.func @transform_6(%arg0: i32, %arg1: i32) -> (i32, i32) {
    %c0_i32 = arith.constant 0 : i32
    %c0_i32_0 = arith.constant 0 : i32
    %c0_i32_1 = arith.constant 0 : i32
    return %c0_i32, %c0_i32_0 : i32, i32
  }
  func.func @transform_7(%arg0: i32, %arg1: i32) -> (i32, i32) {
    %c0_i32 = arith.constant 0 : i32
    %c0_i32_0 = arith.constant 0 : i32
    return %arg0, %c0_i32 : i32, i32
  }
  func.func @transform_8(%arg0: i32, %arg1: i32) -> (i32, i32) {
    %c0_i32 = arith.constant 0 : i32
    %c0_i32_0 = arith.constant 0 : i32
    return %arg0, %c0_i32 : i32, i32
  }
  func.func @transform_9(%arg0: i32, %arg1: i32) -> (i32, i32) {
    %c0_i32 = arith.constant 0 : i32
    %c0_i32_0 = arith.constant 0 : i32
    return %arg0, %c0_i32 : i32, i32
  }
  func.func @transform_10(%arg0: i32, %arg1: i32) -> (i32, i32, i32) {
    %c0_i32 = arith.constant 0 : i32
    %c0_i32_0 = arith.constant 0 : i32
    return %arg1, %arg0, %c0_i32 : i32, i32, i32
  }
}

module attributes {stable_mosaic.version = 11 : i64} {
  func.func @_logits_lse_kernel(%arg0: i32, %arg1: i32, %arg2: memref<56x32xbf16, #tpu.memory_space<vmem>>, %arg3: memref<32x128xbf16, #tpu.memory_space<vmem>>, %arg4: memref<1x128xf32, #tpu.memory_space<vmem>>, %arg5: memref<56x128xf32, #tpu.memory_space<vmem>>, %arg6: memref<56x128xf32, #tpu.memory_space<vmem>>, %arg7: memref<56x1xf32, #tpu.memory_space<vmem>>, %arg8: memref<56x1xf32, #tpu.memory_space<vmem>>) attributes {dimension_semantics = [#tpu.dimension_semantics<parallel>, #tpu.dimension_semantics<arbitrary>], iteration_bounds = array<i64: 1, 1>, scalar_prefetch = 0 : i64, scratch_operands = 2 : i64, tpu.core_type = #tpu.core_type<tc>, window_params = [{transform_indices = @transform_0, window_bounds = array<i64: 56, 32>}, {transform_indices = @transform_1, window_bounds = array<i64: 32, 128>}, {transform_indices = @transform_2, window_bounds = array<i64: 1, 128>}, {transform_indices = @transform_3, window_bounds = array<i64: 56, 128>}, {transform_indices = @transform_4, window_bounds = array<i64: 56, 128>}]} {
    %c0_i32 = arith.constant 0 : i32
    %0 = arith.cmpi eq, %arg1, %c0_i32 : i32
    %1 = arith.extui %0 : i1 to i32
    %c0_i32_0 = arith.constant 0 : i32
    %2 = arith.cmpi ne, %1, %c0_i32_0 : i32
    scf.if %2 {
      %cst_22 = arith.constant 0xFF800000 : f32
      %30 = vector.broadcast %cst_22 : f32 to vector<56x1xf32>
      %c0_23 = arith.constant 0 : index
      %c0_24 = arith.constant 0 : index
      %31 = vector.load %arg7[%c0_23, %c0_24] : memref<56x1xf32, #tpu.memory_space<vmem>>, vector<56x1xf32>
      tpu.vector_store %arg7[%c0_23, %c0_24], %30 {strides = array<i32>} : memref<56x1xf32, #tpu.memory_space<vmem>>, vector<56x1xf32>,
      %cst_25 = arith.constant 0.000000e+00 : f32
      %32 = vector.broadcast %cst_25 : f32 to vector<56x1xf32>
      %c0_26 = arith.constant 0 : index
      %c0_27 = arith.constant 0 : index
      %33 = vector.load %arg8[%c0_26, %c0_27] : memref<56x1xf32, #tpu.memory_space<vmem>>, vector<56x1xf32>
      tpu.vector_store %arg8[%c0_26, %c0_27], %32 {strides = array<i32>} : memref<56x1xf32, #tpu.memory_space<vmem>>, vector<56x1xf32>,
    } else {
    }
    %c0 = arith.constant 0 : index
    %c0_1 = arith.constant 0 : index
    %3 = vector.load %arg2[%c0, %c0_1] : memref<56x32xbf16, #tpu.memory_space<vmem>>, vector<56x32xbf16>
    %c0_2 = arith.constant 0 : index
    %c0_3 = arith.constant 0 : index
    %4 = vector.load %arg3[%c0_2, %c0_3] : memref<32x128xbf16, #tpu.memory_space<vmem>>, vector<32x128xbf16>
    %cst = arith.constant dense<0.000000e+00> : vector<56x128xf32>
    %5 = tpu.matmul %3, %4, %cst {dimension_numbers = #tpu.dot_dimension_numbers<[1], [0], [0], [1], [0, 0, 1, 1], [], []>} : vector<56x32xbf16>, vector<32x128xbf16>, vector<56x128xf32> -> vector<56x128xf32>
    %c0_4 = arith.constant 0 : index
    %c0_5 = arith.constant 0 : index
    %6 = vector.load %arg4[%c0_4, %c0_5] : memref<1x128xf32, #tpu.memory_space<vmem>>, vector<1x128xf32>
    %7 = vector.broadcast %6 : vector<1x128xf32> to vector<56x128xf32>
    %8 = arith.addf %5, %7 : vector<56x128xf32>
    %c0_6 = arith.constant 0 : index
    %c0_7 = arith.constant 0 : index
    %9 = vector.load %arg5[%c0_6, %c0_7] : memref<56x128xf32, #tpu.memory_space<vmem>>, vector<56x128xf32>
    tpu.vector_store %arg5[%c0_6, %c0_7], %8 {strides = array<i32>} : memref<56x128xf32, #tpu.memory_space<vmem>>, vector<56x128xf32>,
    %cst_8 = arith.constant dense<0xFF800000> : vector<56xf32>
    %10 = vector.multi_reduction <maximumf>, %8, %cst_8 [1] : vector<56x128xf32> to vector<56xf32>
    %11 = vector.shape_cast %10 : vector<56xf32> to vector<56x1xf32>
    %c0_9 = arith.constant 0 : index
    %c0_10 = arith.constant 0 : index
    %12 = vector.load %arg7[%c0_9, %c0_10] : memref<56x1xf32, #tpu.memory_space<vmem>>, vector<56x1xf32>
    %13 = arith.maximumf %12, %11 : vector<56x1xf32>
    %c0_11 = arith.constant 0 : index
    %c0_12 = arith.constant 0 : index
    %14 = vector.load %arg8[%c0_11, %c0_12] : memref<56x1xf32, #tpu.memory_space<vmem>>, vector<56x1xf32>
    %c0_13 = arith.constant 0 : index
    %c0_14 = arith.constant 0 : index
    %15 = vector.load %arg7[%c0_13, %c0_14] : memref<56x1xf32, #tpu.memory_space<vmem>>, vector<56x1xf32>
    %16 = arith.subf %15, %13 : vector<56x1xf32>
    %17 = math.exp %16 : vector<56x1xf32>
    %18 = arith.mulf %14, %17 : vector<56x1xf32>
    %19 = vector.broadcast %13 : vector<56x1xf32> to vector<56x128xf32>
    %20 = arith.subf %8, %19 : vector<56x128xf32>
    %21 = math.exp %20 : vector<56x128xf32>
    %cst_15 = arith.constant dense<0.000000e+00> : vector<56xf32>
    %22 = vector.multi_reduction <add>, %21, %cst_15 [1] : vector<56x128xf32> to vector<56xf32>
    %23 = vector.shape_cast %22 : vector<56xf32> to vector<56x1xf32>
    %24 = arith.addf %18, %23 : vector<56x1xf32>
    %c0_16 = arith.constant 0 : index
    %c0_17 = arith.constant 0 : index
    %25 = vector.load %arg8[%c0_16, %c0_17] : memref<56x1xf32, #tpu.memory_space<vmem>>, vector<56x1xf32>
    tpu.vector_store %arg8[%c0_16, %c0_17], %24 {strides = array<i32>} : memref<56x1xf32, #tpu.memory_space<vmem>>, vector<56x1xf32>,
    %c0_18 = arith.constant 0 : index
    %c0_19 = arith.constant 0 : index
    %26 = vector.load %arg7[%c0_18, %c0_19] : memref<56x1xf32, #tpu.memory_space<vmem>>, vector<56x1xf32>
    tpu.vector_store %arg7[%c0_18, %c0_19], %13 {strides = array<i32>} : memref<56x1xf32, #tpu.memory_space<vmem>>, vector<56x1xf32>,
    %c0_i32_20 = arith.constant 0 : i32
    %27 = arith.cmpi eq, %arg1, %c0_i32_20 : i32
    %28 = arith.extui %27 : i1 to i32
    %c0_i32_21 = arith.constant 0 : i32
    %29 = arith.cmpi ne, %28, %c0_i32_21 : i32
    scf.if %29 {
      %c0_22 = arith.constant 0 : index
      %c0_23 = arith.constant 0 : index
      %30 = vector.load %arg7[%c0_22, %c0_23] : memref<56x1xf32, #tpu.memory_space<vmem>>, vector<56x1xf32>
      %c0_24 = arith.constant 0 : index
      %c0_25 = arith.constant 0 : index
      %31 = vector.load %arg8[%c0_24, %c0_25] : memref<56x1xf32, #tpu.memory_space<vmem>>, vector<56x1xf32>
      %32 = math.log %31 : vector<56x1xf32>
      %33 = arith.addf %30, %32 : vector<56x1xf32>
      %34 = vector.shape_cast %33 : vector<56x1xf32> to vector<56x1xf32>
      %35 = vector.broadcast %34 : vector<56x1xf32> to vector<56x128xf32>
      %c0_26 = arith.constant 0 : index
      %c0_27 = arith.constant 0 : index
      %36 = vector.load %arg6[%c0_26, %c0_27] : memref<56x128xf32, #tpu.memory_space<vmem>>, vector<56x128xf32>
      tpu.vector_store %arg6[%c0_26, %c0_27], %35 {strides = array<i32>} : memref<56x128xf32, #tpu.memory_space<vmem>>, vector<56x128xf32>,
    } else {
    }
    return
  }
  func.func @transform_0(%arg0: i32, %arg1: i32) -> (i32, i32) {
    %c0_i32 = arith.constant 0 : i32
    %c0_i32_0 = arith.constant 0 : i32
    return %arg0, %c0_i32 : i32, i32
  }
  func.func @transform_1(%arg0: i32, %arg1: i32) -> (i32, i32) {
    %c0_i32 = arith.constant 0 : i32
    %c0_i32_0 = arith.constant 0 : i32
    return %c0_i32, %arg1 : i32, i32
  }
  func.func @transform_2(%arg0: i32, %arg1: i32) -> (i32, i32) {
    %c0_i32 = arith.constant 0 : i32
    %c0_i32_0 = arith.constant 0 : i32
    return %c0_i32, %arg1 : i32, i32
  }
  func.func @transform_3(%arg0: i32, %arg1: i32) -> (i32, i32) {
    %c0_i32 = arith.constant 0 : i32
    return %arg0, %arg1 : i32, i32
  }
  func.func @transform_4(%arg0: i32, %arg1: i32) -> (i32, i32) {
    %c0_i32 = arith.constant 0 : i32
    %c0_i32_0 = arith.constant 0 : i32
    return %arg0, %c0_i32 : i32, i32
  }
}

module attributes {stable_mosaic.version = 11 : i64} {
  func.func @_sub_lse_kernel(%arg0: i32, %arg1: i32, %arg2: memref<56x128xf32, #tpu.memory_space<vmem>>, %arg3: memref<56x128xf32, #tpu.memory_space<vmem>>, %arg4: memref<56x128xf32, #tpu.memory_space<vmem>>) attributes {dimension_semantics = [#tpu.dimension_semantics<parallel>, #tpu.dimension_semantics<parallel>], iteration_bounds = array<i64: 1, 1>, scalar_prefetch = 0 : i64, scratch_operands = 0 : i64, tpu.core_type = #tpu.core_type<tc>, window_params = [{transform_indices = @transform_0, window_bounds = array<i64: 56, 128>}, {transform_indices = @transform_1, window_bounds = array<i64: 56, 128>}, {transform_indices = @transform_2, window_bounds = array<i64: 56, 128>}]} {
    %c0 = arith.constant 0 : index
    %c0_0 = arith.constant 0 : index
    %0 = vector.load %arg2[%c0, %c0_0] : memref<56x128xf32, #tpu.memory_space<vmem>>, vector<56x128xf32>
    %c0_1 = arith.constant 0 : index
    %c0_2 = arith.constant 0 : index
    %1 = vector.load %arg3[%c0_1, %c0_2] : memref<56x128xf32, #tpu.memory_space<vmem>>, vector<56x1xf32>
    %2 = vector.broadcast %1 : vector<56x1xf32> to vector<56x128xf32>
    %3 = arith.subf %0, %2 : vector<56x128xf32>
    %c0_3 = arith.constant 0 : index
    %c0_4 = arith.constant 0 : index
    %4 = vector.load %arg4[%c0_3, %c0_4] : memref<56x128xf32, #tpu.memory_space<vmem>>, vector<56x128xf32>
    tpu.vector_store %arg4[%c0_3, %c0_4], %3 {strides = array<i32>} : memref<56x128xf32, #tpu.memory_space<vmem>>, vector<56x128xf32>,
    return
  }
  func.func @transform_0(%arg0: i32, %arg1: i32) -> (i32, i32) {
    %c0_i32 = arith.constant 0 : i32
    return %arg0, %arg1 : i32, i32
  }
  func.func @transform_1(%arg0: i32, %arg1: i32) -> (i32, i32) {
    %c0_i32 = arith.constant 0 : i32
    %c0_i32_0 = arith.constant 0 : i32
    return %arg0, %c0_i32 : i32, i32
  }
  func.func @transform_2(%arg0: i32, %arg1: i32) -> (i32, i32) {
    %c0_i32 = arith.constant 0 : i32
    return %arg0, %arg1 : i32, i32
  }
}

</mosaic_0001>

<llo_original>
// kernel: forward.6
$region0: #{forward.6}
  #allocation0 [shape = 'u32[]', space=smem, size = 0x4, offset = 0x4, fixed_abs, tag = 'smem constant byte address 0x4 - core index']
  #allocation1 [shape = 'u32[72,128]{1,0:T(1,128)}', space=vmem, size = 0x9000, scoped, tag = 'internal scratch']
  #allocation2 [shape = 'f32[8,8,128]{2,1,0:T(8,128)}', space=vmem, size = 0x8000, scoped, tag = 'scratch operand']
  #allocation3 [shape = 'f32[8,32]{1,0:T(8,128)}', space=vmem, size = 0x1000, scoped, tag = 'scratch operand']
  #allocation4 [shape = 'f32[8,32]{1,0:T(8,128)}', space=vmem, size = 0x1000, scoped, tag = 'scratch operand']
  %s0 = inlined_call_operand.vmem [shape: f32[8,8,32], index: 0, kind: input, shape index: {}]
  %s1 = inlined_call_operand.vmem [shape: f32[32,128], index: 1, kind: input, shape index: {}]
  %s2 = inlined_call_operand.vmem [shape: f32[32,128], index: 2, kind: input, shape index: {}]
  %s3 = inlined_call_operand.vmem [shape: f32[1,128], index: 3, kind: input, shape index: {}]
  %s4 = inlined_call_operand.vmem [shape: f32[8,8,32], index: 4, kind: output, shape index: {}]
  %s5 = sld [smem:[#allocation0]]
  $region30: #{forward.6} parent=0
    _
  %s7 = ssub.s32 1, %s5
  %s8 = scalar_select 0, %s7, %s5
  // Predicated region
  $region2: #{forward.6} parent=0 // pred_check
    _
  $region3: #{forward.6} parent=0 // pred_check_branch
    %10 = sbr.rel (0) target = $region5
  $region4: #{forward.6} parent=0 // pred_region
    _
  $region5: #{forward.6} parent=0 // pred_fallthru
    _
  // Predicated region
  $region6: #{forward.6} parent=0 // pred_check
    _
  $region7: #{forward.6} parent=0 // pred_check_branch
    %12 = sbr.rel (0) target = $region9
  $region8: #{forward.6} parent=0 // pred_region
    _
  $region9: #{forward.6} parent=0 // pred_fallthru
    _
  // Predicated region
  $region10: #{forward.6} parent=0 // pred_check
    _
  $region11: #{forward.6} parent=0 // pred_check_branch
    %14 = sbr.rel (0) target = $region13
  $region12: #{forward.6} parent=0 // pred_region
    _
  $region13: #{forward.6} parent=0 // pred_fallthru
    _
  // Predicated region
  $region14: #{forward.6} parent=0 // pred_check
    _
  $region15: #{forward.6} parent=0 // pred_check_branch
    %16 = sbr.rel (0) target = $region17
  $region16: #{forward.6} parent=0 // pred_region
    _
  $region17: #{forward.6} parent=0 // pred_fallthru
    _
  %p17 = scmp.eq.s32.totalorder 0, 0
  // Predicated region
  $region18: #{forward.6} parent=0 // pred_check
    %p18 = pneg %p17
  $region19: #{forward.6} parent=0 // pred_check_branch
    %20 = sbr.rel (%p18) target = $region21
  $region20: #{forward.6} parent=0 // pred_region
    %vm21 = vcmask 261120
    %22 = vst.msk [vmem:[#allocation3] sm:$0xff] %vm21, 0.0
    %23 = vst.msk [vmem:[#allocation4] sm:$0xff] %vm21, 0.0
  $region21: #{forward.6} parent=0 // pred_fallthru
    _
  %v24 = vld [vmem:[%s0] sm:$0xff]
  %v25 = vld [vmem:[%s0 + $0x8] sm:$0xff]
  %v26 = vld [vmem:[%s0 + $0x10] sm:$0xff]
  %v27 = vld [vmem:[%s0 + $0x18] sm:$0xff]
  %v28 = vld [vmem:[%s0 + $0x20] sm:$0xff]
  %v29 = vld [vmem:[%s0 + $0x28] sm:$0xff]
  %v30 = vld [vmem:[%s0 + $0x30] sm:$0xff]
  %v31 = vld [vmem:[%s0 + $0x38] sm:$0xff]
  %v32 = vld [vmem:[%s1] sm:$0xff]
  %v33 = vld [vmem:[%s1 + $0x8] sm:$0xff]
  %v34 = vld [vmem:[%s1 + $0x10] sm:$0xff]
  %v35 = vld [vmem:[%s1 + $0x18] sm:$0xff]
  %v36 = vld [vmem:[%s3] sm:$0x1]
  %v38 = vperm.slane %v36, 0
  %vm40 = vcmask 261120
  %v42 = vsel %vm40, %v24, 0
  %v45 = vsel %vm40, %v25, 0
  %v48 = vsel %vm40, %v26, 0
  %v51 = vsel %vm40, %v27, 0
  %v54 = vsel %vm40, %v28, 0
  %v57 = vsel %vm40, %v29, 0
  %v60 = vsel %vm40, %v30, 0
  %v63 = vsel %vm40, %v31, 0
  %65 = vmatpush.msra.mxu0 0.0
  %66 = vmatpush.msra.mxu0 0.0
  %67 = vmatpush.msra.mxu0 0.0
  %68 = vmatpush.msra.mxu0 0.0
  %69 = vmatpush.msra.mxu0 0.0
  %70 = vmatpush.msra.mxu0 0.0
  %71 = vmatpush.msra.mxu0 0.0
  %72 = vmatpush.msra.mxu0 0.0
  %73 = vmatpush.msra.mxu0 0.0
  %74 = vmatpush.msra.mxu0 0.0
  %75 = vmatpush.msra.mxu0 0.0
  %76 = vmatpush.msra.mxu0 0.0
  %77 = vmatpush.msra.mxu0 %v35
  %78 = vmatpush.msra.mxu0 %v34
  %79 = vmatpush.msra.mxu0 %v33
  %80 = vmatpush.msra.mxu0 %v32
  %81 = vmatmul.f32.gmra.mxu0 %v42
  %v82 = vpop.f32.mrf.mxu0
  %v83 = vadd.f32 %v38, %v82
  %84 = vmatmul.f32.gmra.mxu0 %v45
  %v85 = vpop.f32.mrf.mxu0
  %v86 = vadd.f32 %v38, %v85
  %87 = vmatmul.f32.gmra.mxu0 %v48
  %v88 = vpop.f32.mrf.mxu0
  %v89 = vadd.f32 %v38, %v88
  %90 = vmatmul.f32.gmra.mxu0 %v51
  %v91 = vpop.f32.mrf.mxu0
  %v92 = vadd.f32 %v38, %v91
  %93 = vmatmul.f32.gmra.mxu0 %v54
  %v94 = vpop.f32.mrf.mxu0
  %v95 = vadd.f32 %v38, %v94
  %96 = vmatmul.f32.gmra.mxu0 %v57
  %v97 = vpop.f32.mrf.mxu0
  %v98 = vadd.f32 %v38, %v97
  %99 = vmatmul.f32.gmra.mxu0 %v60
  %v100 = vpop.f32.mrf.mxu0
  %v101 = vadd.f32 %v38, %v100
  %102 = vmatmul.f32.gmra.mxu0 %v63
  %v103 = vpop.f32.mrf.mxu0
  %v104 = vadd.f32 %v38, %v103
  %105 = vdwg.mxu0
  %106 = vst [vmem:[#allocation2] sm:$0xff] %v83
  %107 = vst [vmem:[#allocation2 + $0x8] sm:$0xff] %v86
  %108 = vst [vmem:[#allocation2 + $0x10] sm:$0xff] %v89
  %109 = vst [vmem:[#allocation2 + $0x18] sm:$0xff] %v92
  %110 = vst [vmem:[#allocation2 + $0x20] sm:$0xff] %v95
  %111 = vst [vmem:[#allocation2 + $0x28] sm:$0xff] %v98
  %112 = vst [vmem:[#allocation2 + $0x30] sm:$0xff] %v101
  %113 = vst [vmem:[#allocation2 + $0x38] sm:$0xff] %v104
  %v114 = vld [vmem:[%s2] sm:$0xff]
  %v115 = vld [vmem:[%s2 + $0x8] sm:$0xff]
  %v116 = vld [vmem:[%s2 + $0x10] sm:$0xff]
  %v117 = vld [vmem:[%s2 + $0x18] sm:$0xff]
  %v118 = vld [vmem:[#allocation3] sm:$0xff]
  %v119 = vld [vmem:[#allocation4] sm:$0xff]
  %v120 = vld [vmem:[#allocation2] sm:$0xff]
  %v122 = vsel %vm40, %v118, 0
  %124 = vmatpush.msra.mxu0 0.0
  %125 = vmatpush.msra.mxu0 0.0
  %126 = vmatpush.msra.mxu0 0.0
  %127 = vmatpush.msra.mxu0 0.0
  %128 = vmatpush.msra.mxu0 0.0
  %129 = vmatpush.msra.mxu0 0.0
  %130 = vmatpush.msra.mxu0 0.0
  %131 = vmatpush.msra.mxu0 0.0
  %132 = vmatpush.msra.mxu0 0.0
  %133 = vmatpush.msra.mxu0 0.0
  %134 = vmatpush.msra.mxu0 0.0
  %135 = vmatpush.msra.mxu0 0.0
  %136 = vmatpush.msra.mxu0 %v117
  %137 = vmatpush.msra.mxu0 %v116
  %138 = vmatpush.msra.mxu0 %v115
  %139 = vmatpush.msra.mxu0 %v114
  %140 = vmatmul.f32.gmra.mxu0 %v122
  %v141 = vpop.f32.mrf.mxu0
  %v142 = vadd.f32 0.0, %v141
  %143 = vdwg.mxu0
  %v144 = vadd.f32 %v120, %v142
  %v145 = vxor.u32 %v144, 2147483648
  %v146 = vmul.f32 %v145, 1.442695
  %v147 = vpow.pop %v146
  %v148 = vadd.f32 %v147, 1.0
  %v149 = vrcp.pop %v148
  %v150 = vmul.f32 %v148, %v149
  %v151 = vsub.f32 1.0, %v150
  %v152 = vmul.f32 %v149, %v151
  %v153 = vadd.f32 %v149, %v152
  %vm154 = vweird.f32 %v148
  %vm155 = vweird.f32 %v149
  %vm156 = vmor %vm154, %vm155
  %v157 = vsel %vm156, %v149, %v153
  %v158 = vand.u32 2147483647, %v148
  %vm159 = vcmp.eq.f32.partialorder %v158, 8.507059e+37
  %v160 = vand.u32 %v148, 2147483648
  %v161 = vor.u32 1.1754944e-38, %v160
  %v162 = vsel %vm159, %v161, %v157
  %v163 = vmul.f32 1.0, %v162
  %v164 = vtanh.pop %v144
  %166 = vrot.lane.b32.xlu0 %v119, 32
  %v167 = vpop.permute.xlu0 %166
  %v169 = vmul.f32 %v163, %v167
  %171 = vrot.lane.b32.xlu0 %v164, 64
  %v172 = vpop.permute.xlu0 %171
  %v174 = vmul.f32 %v163, %v172
  %176 = vrot.lane.b32.xlu0 %v174, 32
  %v177 = vpop.permute.xlu0 %176
  %v179 = vadd.f32 %v169, %v177
  %v180 = vtanh.pop %v179
  %182 = vrot.lane.b32.xlu0 %v180, 64
  %v183 = vpop.permute.xlu0 %182
  %v185 = vmul.f32 %v163, %v183
  %187 = vrot.lane.b32.xlu0 %v185, 32
  %v188 = vpop.permute.xlu0 %187
  %190 = vst.msk [vmem:[%s4] sm:$0xff] %vm40, %v188
  %s191 = scalar_lea.vmem [#allocation2], 8
  %v192 = vld [vmem:[%s191] sm:$0xff]
  %v193 = vsel %vm40, %v188, 0
  %195 = vmatpush.msra.mxu0 0.0
  %196 = vmatpush.msra.mxu0 0.0
  %197 = vmatpush.msra.mxu0 0.0
  %198 = vmatpush.msra.mxu0 0.0
  %199 = vmatpush.msra.mxu0 0.0
  %200 = vmatpush.msra.mxu0 0.0
  %201 = vmatpush.msra.mxu0 0.0
  %202 = vmatpush.msra.mxu0 0.0
  %203 = vmatpush.msra.mxu0 0.0
  %204 = vmatpush.msra.mxu0 0.0
  %205 = vmatpush.msra.mxu0 0.0
  %206 = vmatpush.msra.mxu0 0.0
  %207 = vmatpush.msra.mxu0 %v117
  %208 = vmatpush.msra.mxu0 %v116
  %209 = vmatpush.msra.mxu0 %v115
  %210 = vmatpush.msra.mxu0 %v114
  %211 = vmatmul.f32.gmra.mxu0 %v193
  %v212 = vpop.f32.mrf.mxu0
  %v213 = vadd.f32 0.0, %v212
  %214 = vdwg.mxu0
  %v215 = vadd.f32 %v192, %v213
  %v216 = vxor.u32 %v215, 2147483648
  %v217 = vmul.f32 %v216, 1.442695
  %v218 = vpow.pop %v217
  %v219 = vadd.f32 %v218, 1.0
  %v220 = vrcp.pop %v219
  %v221 = vmul.f32 %v219, %v220
  %v222 = vsub.f32 1.0, %v221
  %v223 = vmul.f32 %v220, %v222
  %v224 = vadd.f32 %v220, %v223
  %vm225 = vweird.f32 %v219
  %vm226 = vweird.f32 %v220
  %vm227 = vmor %vm225, %vm226
  %v228 = vsel %vm227, %v220, %v224
  %v229 = vand.u32 2147483647, %v219
  %vm230 = vcmp.eq.f32.partialorder %v229, 8.507059e+37
  %v231 = vand.u32 %v219, 2147483648
  %v232 = vor.u32 1.1754944e-38, %v231
  %v233 = vsel %vm230, %v232, %v228
  %v234 = vmul.f32 1.0, %v233
  %v235 = vtanh.pop %v215
  %v236 = vmul.f32 %v234, %v179
  %238 = vrot.lane.b32.xlu0 %v235, 64
  %v239 = vpop.permute.xlu0 %238
  %v241 = vmul.f32 %v234, %v239
  %243 = vrot.lane.b32.xlu0 %v241, 32
  %v244 = vpop.permute.xlu0 %243
  %v246 = vadd.f32 %v236, %v244
  %v247 = vtanh.pop %v246
  %249 = vrot.lane.b32.xlu0 %v247, 64
  %v250 = vpop.permute.xlu0 %249
  %v252 = vmul.f32 %v234, %v250
  %254 = vrot.lane.b32.xlu0 %v252, 32
  %v255 = vpop.permute.xlu0 %254
  %s257 = scalar_lea.vmem %s4, 8
  %258 = vst.msk [vmem:[%s257] sm:$0xff] %vm40, %v255
  %s259 = scalar_lea.vmem [#allocation2], 16
  %v260 = vld [vmem:[%s259] sm:$0xff]
  %v261 = vsel %vm40, %v255, 0
  %263 = vmatpush.msra.mxu0 0.0
  %264 = vmatpush.msra.mxu0 0.0
  %265 = vmatpush.msra.mxu0 0.0
  %266 = vmatpush.msra.mxu0 0.0
  %267 = vmatpush.msra.mxu0 0.0
  %268 = vmatpush.msra.mxu0 0.0
  %269 = vmatpush.msra.mxu0 0.0
  %270 = vmatpush.msra.mxu0 0.0
  %271 = vmatpush.msra.mxu0 0.0
  %272 = vmatpush.msra.mxu0 0.0
  %273 = vmatpush.msra.mxu0 0.0
  %274 = vmatpush.msra.mxu0 0.0
  %275 = vmatpush.msra.mxu0 %v117
  %276 = vmatpush.msra.mxu0 %v116
  %277 = vmatpush.msra.mxu0 %v115
  %278 = vmatpush.msra.mxu0 %v114
  %279 = vmatmul.f32.gmra.mxu0 %v261
  %v280 = vpop.f32.mrf.mxu0
  %v281 = vadd.f32 0.0, %v280
  %282 = vdwg.mxu0
  %v283 = vadd.f32 %v260, %v281
  %v284 = vxor.u32 %v283, 2147483648
  %v285 = vmul.f32 %v284, 1.442695
  %v286 = vpow.pop %v285
  %v287 = vadd.f32 %v286, 1.0
  %v288 = vrcp.pop %v287
  %v289 = vmul.f32 %v287, %v288
  %v290 = vsub.f32 1.0, %v289
  %v291 = vmul.f32 %v288, %v290
  %v292 = vadd.f32 %v288, %v291
  %vm293 = vweird.f32 %v287
  %vm294 = vweird.f32 %v288
  %vm295 = vmor %vm293, %vm294
  %v296 = vsel %vm295, %v288, %v292
  %v297 = vand.u32 2147483647, %v287
  %vm298 = vcmp.eq.f32.partialorder %v297, 8.507059e+37
  %v299 = vand.u32 %v287, 2147483648
  %v300 = vor.u32 1.1754944e-38, %v299
  %v301 = vsel %vm298, %v300, %v296
  %v302 = vmul.f32 1.0, %v301
  %v303 = vtanh.pop %v283
  %v304 = vmul.f32 %v302, %v246
  %306 = vrot.lane.b32.xlu0 %v303, 64
  %v307 = vpop.permute.xlu0 %306
  %v309 = vmul.f32 %v302, %v307
  %311 = vrot.lane.b32.xlu0 %v309, 32
  %v312 = vpop.permute.xlu0 %311
  %v314 = vadd.f32 %v304, %v312
  %v315 = vtanh.pop %v314
  %317 = vrot.lane.b32.xlu0 %v315, 64
  %v318 = vpop.permute.xlu0 %317
  %v320 = vmul.f32 %v302, %v318
  %322 = vrot.lane.b32.xlu0 %v320, 32
  %v323 = vpop.permute.xlu0 %322
  %s325 = scalar_lea.vmem %s4, 16
  %326 = vst.msk [vmem:[%s325] sm:$0xff] %vm40, %v323
  %s327 = scalar_lea.vmem [#allocation2], 24
  %v328 = vld [vmem:[%s327] sm:$0xff]
  %v329 = vsel %vm40, %v323, 0
  %331 = vmatpush.msra.mxu0 0.0
  %332 = vmatpush.msra.mxu0 0.0
  %333 = vmatpush.msra.mxu0 0.0
  %334 = vmatpush.msra.mxu0 0.0
  %335 = vmatpush.msra.mxu0 0.0
  %336 = vmatpush.msra.mxu0 0.0
  %337 = vmatpush.msra.mxu0 0.0
  %338 = vmatpush.msra.mxu0 0.0
  %339 = vmatpush.msra.mxu0 0.0
  %340 = vmatpush.msra.mxu0 0.0
  %341 = vmatpush.msra.mxu0 0.0
  %342 = vmatpush.msra.mxu0 0.0
  %343 = vmatpush.msra.mxu0 %v117
  %344 = vmatpush.msra.mxu0 %v116
  %345 = vmatpush.msra.mxu0 %v115
  %346 = vmatpush.msra.mxu0 %v114
  %347 = vmatmul.f32.gmra.mxu0 %v329
  %v348 = vpop.f32.mrf.mxu0
  %v349 = vadd.f32 0.0, %v348
  %350 = vdwg.mxu0
  %v351 = vadd.f32 %v328, %v349
  %v352 = vxor.u32 %v351, 2147483648
  %v353 = vmul.f32 %v352, 1.442695
  %v354 = vpow.pop %v353
  %v355 = vadd.f32 %v354, 1.0
  %v356 = vrcp.pop %v355
  %v357 = vmul.f32 %v355, %v356
  %v358 = vsub.f32 1.0, %v357
  %v359 = vmul.f32 %v356, %v358
  %v360 = vadd.f32 %v356, %v359
  %vm361 = vweird.f32 %v355
  %vm362 = vweird.f32 %v356
  %vm363 = vmor %vm361, %vm362
  %v364 = vsel %vm363, %v356, %v360
  %v365 = vand.u32 2147483647, %v355
  %vm366 = vcmp.eq.f32.partialorder %v365, 8.507059e+37
  %v367 = vand.u32 %v355, 2147483648
  %v368 = vor.u32 1.1754944e-38, %v367
  %v369 = vsel %vm366, %v368, %v364
  %v370 = vmul.f32 1.0, %v369
  %v371 = vtanh.pop %v351
  %v372 = vmul.f32 %v370, %v314
  %374 = vrot.lane.b32.xlu0 %v371, 64
  %v375 = vpop.permute.xlu0 %374
  %v377 = vmul.f32 %v370, %v375
  %379 = vrot.lane.b32.xlu0 %v377, 32
  %v380 = vpop.permute.xlu0 %379
  %v382 = vadd.f32 %v372, %v380
  %v383 = vtanh.pop %v382
  %385 = vrot.lane.b32.xlu0 %v383, 64
  %v386 = vpop.permute.xlu0 %385
  %v388 = vmul.f32 %v370, %v386
  %390 = vrot.lane.b32.xlu0 %v388, 32
  %v391 = vpop.permute.xlu0 %390
  %s393 = scalar_lea.vmem %s4, 24
  %394 = vst.msk [vmem:[%s393] sm:$0xff] %vm40, %v391
  %s395 = scalar_lea.vmem [#allocation2], 32
  %v396 = vld [vmem:[%s395] sm:$0xff]
  %v397 = vsel %vm40, %v391, 0
  %399 = vmatpush.msra.mxu0 0.0
  %400 = vmatpush.msra.mxu0 0.0
  %401 = vmatpush.msra.mxu0 0.0
  %402 = vmatpush.msra.mxu0 0.0
  %403 = vmatpush.msra.mxu0 0.0
  %404 = vmatpush.msra.mxu0 0.0
  %405 = vmatpush.msra.mxu0 0.0
  %406 = vmatpush.msra.mxu0 0.0
  %407 = vmatpush.msra.mxu0 0.0
  %408 = vmatpush.msra.mxu0 0.0
  %409 = vmatpush.msra.mxu0 0.0
  %410 = vmatpush.msra.mxu0 0.0
  %411 = vmatpush.msra.mxu0 %v117
  %412 = vmatpush.msra.mxu0 %v116
  %413 = vmatpush.msra.mxu0 %v115
  %414 = vmatpush.msra.mxu0 %v114
  %415 = vmatmul.f32.gmra.mxu0 %v397
  %v416 = vpop.f32.mrf.mxu0
  %v417 = vadd.f32 0.0, %v416
  %418 = vdwg.mxu0
  %v419 = vadd.f32 %v396, %v417
  %v420 = vxor.u32 %v419, 2147483648
  %v421 = vmul.f32 %v420, 1.442695
  %v422 = vpow.pop %v421
  %v423 = vadd.f32 %v422, 1.0
  %v424 = vrcp.pop %v423
  %v425 = vmul.f32 %v423, %v424
  %v426 = vsub.f32 1.0, %v425
  %v427 = vmul.f32 %v424, %v426
  %v428 = vadd.f32 %v424, %v427
  %vm429 = vweird.f32 %v423
  %vm430 = vweird.f32 %v424
  %vm431 = vmor %vm429, %vm430
  %v432 = vsel %vm431, %v424, %v428
  %v433 = vand.u32 2147483647, %v423
  %vm434 = vcmp.eq.f32.partialorder %v433, 8.507059e+37
  %v435 = vand.u32 %v423, 2147483648
  %v436 = vor.u32 1.1754944e-38, %v435
  %v437 = vsel %vm434, %v436, %v432
  %v438 = vmul.f32 1.0, %v437
  %v439 = vtanh.pop %v419
  %v440 = vmul.f32 %v438, %v382
  %442 = vrot.lane.b32.xlu0 %v439, 64
  %v443 = vpop.permute.xlu0 %442
  %v445 = vmul.f32 %v438, %v443
  %447 = vrot.lane.b32.xlu0 %v445, 32
  %v448 = vpop.permute.xlu0 %447
  %v450 = vadd.f32 %v440, %v448
  %v451 = vtanh.pop %v450
  %453 = vrot.lane.b32.xlu0 %v451, 64
  %v454 = vpop.permute.xlu0 %453
  %v456 = vmul.f32 %v438, %v454
  %458 = vrot.lane.b32.xlu0 %v456, 32
  %v459 = vpop.permute.xlu0 %458
  %s461 = scalar_lea.vmem %s4, 32
  %462 = vst.msk [vmem:[%s461] sm:$0xff] %vm40, %v459
  %s463 = scalar_lea.vmem [#allocation2], 40
  %v464 = vld [vmem:[%s463] sm:$0xff]
  %v465 = vsel %vm40, %v459, 0
  %467 = vmatpush.msra.mxu0 0.0
  %468 = vmatpush.msra.mxu0 0.0
  %469 = vmatpush.msra.mxu0 0.0
  %470 = vmatpush.msra.mxu0 0.0
  %471 = vmatpush.msra.mxu0 0.0
  %472 = vmatpush.msra.mxu0 0.0
  %473 = vmatpush.msra.mxu0 0.0
  %474 = vmatpush.msra.mxu0 0.0
  %475 = vmatpush.msra.mxu0 0.0
  %476 = vmatpush.msra.mxu0 0.0
  %477 = vmatpush.msra.mxu0 0.0
  %478 = vmatpush.msra.mxu0 0.0
  %479 = vmatpush.msra.mxu0 %v117
  %480 = vmatpush.msra.mxu0 %v116
  %481 = vmatpush.msra.mxu0 %v115
  %482 = vmatpush.msra.mxu0 %v114
  %483 = vmatmul.f32.gmra.mxu0 %v465
  %v484 = vpop.f32.mrf.mxu0
  %v485 = vadd.f32 0.0, %v484
  %486 = vdwg.mxu0
  %v487 = vadd.f32 %v464, %v485
  %v488 = vxor.u32 %v487, 2147483648
  %v489 = vmul.f32 %v488, 1.442695
  %v490 = vpow.pop %v489
  %v491 = vadd.f32 %v490, 1.0
  %v492 = vrcp.pop %v491
  %v493 = vmul.f32 %v491, %v492
  %v494 = vsub.f32 1.0, %v493
  %v495 = vmul.f32 %v492, %v494
  %v496 = vadd.f32 %v492, %v495
  %vm497 = vweird.f32 %v491
  %vm498 = vweird.f32 %v492
  %vm499 = vmor %vm497, %vm498
  %v500 = vsel %vm499, %v492, %v496
  %v501 = vand.u32 2147483647, %v491
  %vm502 = vcmp.eq.f32.partialorder %v501, 8.507059e+37
  %v503 = vand.u32 %v491, 2147483648
  %v504 = vor.u32 1.1754944e-38, %v503
  %v505 = vsel %vm502, %v504, %v500
  %v506 = vmul.f32 1.0, %v505
  %v507 = vtanh.pop %v487
  %v508 = vmul.f32 %v506, %v450
  %510 = vrot.lane.b32.xlu0 %v507, 64
  %v511 = vpop.permute.xlu0 %510
  %v513 = vmul.f32 %v506, %v511
  %515 = vrot.lane.b32.xlu0 %v513, 32
  %v516 = vpop.permute.xlu0 %515
  %v518 = vadd.f32 %v508, %v516
  %v519 = vtanh.pop %v518
  %521 = vrot.lane.b32.xlu0 %v519, 64
  %v522 = vpop.permute.xlu0 %521
  %v524 = vmul.f32 %v506, %v522
  %526 = vrot.lane.b32.xlu0 %v524, 32
  %v527 = vpop.permute.xlu0 %526
  %s529 = scalar_lea.vmem %s4, 40
  %530 = vst.msk [vmem:[%s529] sm:$0xff] %vm40, %v527
  %s531 = scalar_lea.vmem [#allocation2], 48
  %v532 = vld [vmem:[%s531] sm:$0xff]
  %v533 = vsel %vm40, %v527, 0
  %535 = vmatpush.msra.mxu0 0.0
  %536 = vmatpush.msra.mxu0 0.0
  %537 = vmatpush.msra.mxu0 0.0
  %538 = vmatpush.msra.mxu0 0.0
  %539 = vmatpush.msra.mxu0 0.0
  %540 = vmatpush.msra.mxu0 0.0
  %541 = vmatpush.msra.mxu0 0.0
  %542 = vmatpush.msra.mxu0 0.0
  %543 = vmatpush.msra.mxu0 0.0
  %544 = vmatpush.msra.mxu0 0.0
  %545 = vmatpush.msra.mxu0 0.0
  %546 = vmatpush.msra.mxu0 0.0
  %547 = vmatpush.msra.mxu0 %v117
  %548 = vmatpush.msra.mxu0 %v116
  %549 = vmatpush.msra.mxu0 %v115
  %550 = vmatpush.msra.mxu0 %v114
  %551 = vmatmul.f32.gmra.mxu0 %v533
  %v552 = vpop.f32.mrf.mxu0
  %v553 = vadd.f32 0.0, %v552
  %554 = vdwg.mxu0
  %v555 = vadd.f32 %v532, %v553
  %v556 = vxor.u32 %v555, 2147483648
  %v557 = vmul.f32 %v556, 1.442695
  %v558 = vpow.pop %v557
  %v559 = vadd.f32 %v558, 1.0
  %v560 = vrcp.pop %v559
  %v561 = vmul.f32 %v559, %v560
  %v562 = vsub.f32 1.0, %v561
  %v563 = vmul.f32 %v560, %v562
  %v564 = vadd.f32 %v560, %v563
  %vm565 = vweird.f32 %v559
  %vm566 = vweird.f32 %v560
  %vm567 = vmor %vm565, %vm566
  %v568 = vsel %vm567, %v560, %v564
  %v569 = vand.u32 2147483647, %v559
  %vm570 = vcmp.eq.f32.partialorder %v569, 8.507059e+37
  %v571 = vand.u32 %v559, 2147483648
  %v572 = vor.u32 1.1754944e-38, %v571
  %v573 = vsel %vm570, %v572, %v568
  %v574 = vmul.f32 1.0, %v573
  %v575 = vtanh.pop %v555
  %v576 = vmul.f32 %v574, %v518
  %578 = vrot.lane.b32.xlu0 %v575, 64
  %v579 = vpop.permute.xlu0 %578
  %v581 = vmul.f32 %v574, %v579
  %583 = vrot.lane.b32.xlu0 %v581, 32
  %v584 = vpop.permute.xlu0 %583
  %v586 = vadd.f32 %v576, %v584
  %v587 = vtanh.pop %v586
  %589 = vrot.lane.b32.xlu0 %v587, 64
  %v590 = vpop.permute.xlu0 %589
  %v592 = vmul.f32 %v574, %v590
  %594 = vrot.lane.b32.xlu0 %v592, 32
  %v595 = vpop.permute.xlu0 %594
  %s597 = scalar_lea.vmem %s4, 48
  %598 = vst.msk [vmem:[%s597] sm:$0xff] %vm40, %v595
  %s599 = scalar_lea.vmem [#allocation2], 56
  %v600 = vld [vmem:[%s599] sm:$0xff]
  %v601 = vsel %vm40, %v595, 0
  %603 = vmatpush.msra.mxu0 0.0
  %604 = vmatpush.msra.mxu0 0.0
  %605 = vmatpush.msra.mxu0 0.0
  %606 = vmatpush.msra.mxu0 0.0
  %607 = vmatpush.msra.mxu0 0.0
  %608 = vmatpush.msra.mxu0 0.0
  %609 = vmatpush.msra.mxu0 0.0
  %610 = vmatpush.msra.mxu0 0.0
  %611 = vmatpush.msra.mxu0 0.0
  %612 = vmatpush.msra.mxu0 0.0
  %613 = vmatpush.msra.mxu0 0.0
  %614 = vmatpush.msra.mxu0 0.0
  %615 = vmatpush.msra.mxu0 %v117
  %616 = vmatpush.msra.mxu0 %v116
  %617 = vmatpush.msra.mxu0 %v115
  %618 = vmatpush.msra.mxu0 %v114
  %619 = vmatmul.f32.gmra.mxu0 %v601
  %v620 = vpop.f32.mrf.mxu0
  %v621 = vadd.f32 0.0, %v620
  %622 = vdwg.mxu0
  %v623 = vadd.f32 %v600, %v621
  %v624 = vxor.u32 %v623, 2147483648
  %v625 = vmul.f32 %v624, 1.442695
  %v626 = vpow.pop %v625
  %v627 = vadd.f32 %v626, 1.0
  %v628 = vrcp.pop %v627
  %v629 = vmul.f32 %v627, %v628
  %v630 = vsub.f32 1.0, %v629
  %v631 = vmul.f32 %v628, %v630
  %v632 = vadd.f32 %v628, %v631
  %vm633 = vweird.f32 %v627
  %vm634 = vweird.f32 %v628
  %vm635 = vmor %vm633, %vm634
  %v636 = vsel %vm635, %v628, %v632
  %v637 = vand.u32 2147483647, %v627
  %vm638 = vcmp.eq.f32.partialorder %v637, 8.507059e+37
  %v639 = vand.u32 %v627, 2147483648
  %v640 = vor.u32 1.1754944e-38, %v639
  %v641 = vsel %vm638, %v640, %v636
  %v642 = vmul.f32 1.0, %v641
  %v643 = vtanh.pop %v623
  %v644 = vmul.f32 %v642, %v586
  %646 = vrot.lane.b32.xlu0 %v643, 64
  %v647 = vpop.permute.xlu0 %646
  %v649 = vmul.f32 %v642, %v647
  %651 = vrot.lane.b32.xlu0 %v649, 32
  %v652 = vpop.permute.xlu0 %651
  %v654 = vadd.f32 %v644, %v652
  %v655 = vtanh.pop %v654
  %657 = vrot.lane.b32.xlu0 %v655, 64
  %v658 = vpop.permute.xlu0 %657
  %v660 = vmul.f32 %v642, %v658
  %662 = vrot.lane.b32.xlu0 %v660, 32
  %v663 = vpop.permute.xlu0 %662
  %s665 = scalar_lea.vmem %s4, 56
  %666 = vst.msk [vmem:[%s665] sm:$0xff] %vm40, %v663
  %667 = vst.msk [vmem:[#allocation3] sm:$0xff] %vm40, %v663
  %669 = vrot.lane.b32.xlu0 %v654, 96
  %v670 = vpop.permute.xlu0 %669
  %672 = vst.msk [vmem:[#allocation4] sm:$0xff] %vm40, %v670
  // Predicated region
  $region22: #{forward.6} parent=0 // pred_check
    _
  $region23: #{forward.6} parent=0 // pred_check_branch
    %674 = sbr.rel (0) target = $region25
  $region24: #{forward.6} parent=0 // pred_region
    _
  $region25: #{forward.6} parent=0 // pred_fallthru
    _
  // Predicated region
  $region26: #{forward.6} parent=0 // pred_check
    _
  $region27: #{forward.6} parent=0 // pred_check_branch
    %676 = sbr.rel (0) target = $region29
  $region28: #{forward.6} parent=0 // pred_region
    _
  $region29: #{forward.6} parent=0 // pred_fallthru
    _

// kernel: forward.7
$region0: #{forward.7}
  #allocation0 [shape = 'u32[]', space=smem, size = 0x4, offset = 0x4, fixed_abs, tag = 'smem constant byte address 0x4 - core index']
  #allocation1 [shape = 'u32[72,128]{1,0:T(1,128)}', space=vmem, size = 0x9000, scoped, tag = 'internal scratch']
  #allocation2 [shape = 'f32[8,8,128]{2,1,0:T(8,128)}', space=vmem, size = 0x8000, scoped, tag = 'scratch operand']
  #allocation3 [shape = 'f32[8,32]{1,0:T(8,128)}', space=vmem, size = 0x1000, scoped, tag = 'scratch operand']
  #allocation4 [shape = 'f32[8,32]{1,0:T(8,128)}', space=vmem, size = 0x1000, scoped, tag = 'scratch operand']
  %s0 = inlined_call_operand.vmem [shape: f32[8,8,32], index: 0, kind: input, shape index: {}]
  %s1 = inlined_call_operand.vmem [shape: f32[8,8,32], index: 1, kind: input, shape index: {}]
  %s2 = inlined_call_operand.vmem [shape: f32[32,128], index: 2, kind: input, shape index: {}]
  %s3 = inlined_call_operand.vmem [shape: f32[32,128], index: 3, kind: input, shape index: {}]
  %s4 = inlined_call_operand.vmem [shape: f32[1,128], index: 4, kind: input, shape index: {}]
  %s5 = inlined_call_operand.vmem [shape: f32[8,8,32], index: 5, kind: output, shape index: {0}]
  %s6 = inlined_call_operand.vmem [shape: f32[8,32], index: 6, kind: output, shape index: {1}]
  %s7 = inlined_call_operand.vmem [shape: f32[8,32], index: 7, kind: output, shape index: {2}]
  %8 = xla_tuple %s5, %s6, %s7
  %s9 = sld [smem:[#allocation0]]
  $region50: #{forward.7} parent=0
    _
  %s11 = ssub.s32 1, %s9
  %s12 = scalar_select 0, %s11, %s9
  // Predicated region
  $region2: #{forward.7} parent=0 // pred_check
    _
  $region3: #{forward.7} parent=0 // pred_check_branch
    %14 = sbr.rel (0) target = $region5
  $region4: #{forward.7} parent=0 // pred_region
    %s15 = ssub.s32 0, 0
    %s16 = smul.u32 8, %s15
    %p17 = scmp.lt.s32.totalorder %s16, 7
    %s18 = scalar_select %p17, %s16, 7
    %s19 = smul.addr %s18, 8
    %s20 = scalar_lea.vmem %s0, %s19
    %s21 = ssub.s32 0, 0
    %s22 = smul.u32 8, %s21
  $region5: #{forward.7} parent=0 // pred_fallthru
    _
  // Predicated region
  $region6: #{forward.7} parent=0 // pred_check
    _
  $region7: #{forward.7} parent=0 // pred_check_branch
    %24 = sbr.rel (0) target = $region9
  $region8: #{forward.7} parent=0 // pred_region
    %s25 = ssub.s32 0, 0
    %s26 = smul.u32 8, %s25
    %p27 = scmp.lt.s32.totalorder %s26, 7
    %s28 = scalar_select %p27, %s26, 7
    %s29 = smul.addr %s28, 8
    %s30 = scalar_lea.vmem %s1, %s29
    %s31 = ssub.s32 0, 0
    %s32 = smul.u32 8, %s31
  $region9: #{forward.7} parent=0 // pred_fallthru
    _
  // Predicated region
  $region10: #{forward.7} parent=0 // pred_check
    _
  $region11: #{forward.7} parent=0 // pred_check_branch
    %34 = sbr.rel (0) target = $region13
  $region12: #{forward.7} parent=0 // pred_region
    _
  $region13: #{forward.7} parent=0 // pred_fallthru
    _
  // Predicated region
  $region14: #{forward.7} parent=0 // pred_check
    _
  $region15: #{forward.7} parent=0 // pred_check_branch
    %36 = sbr.rel (0) target = $region17
  $region16: #{forward.7} parent=0 // pred_region
    _
  $region17: #{forward.7} parent=0 // pred_fallthru
    _
  // Predicated region
  $region18: #{forward.7} parent=0 // pred_check
    _
  $region19: #{forward.7} parent=0 // pred_check_branch
    %38 = sbr.rel (0) target = $region21
  $region20: #{forward.7} parent=0 // pred_region
    _
  $region21: #{forward.7} parent=0 // pred_fallthru
    _
  %s39 = ssub.s32 0, 0
  %s40 = smul.u32 8, %s39
  %p41 = scmp.lt.s32.totalorder %s40, 7
  %s42 = scalar_select %p41, %s40, 7
  %s43 = smul.addr %s42, 8
  %s44 = scalar_lea.vmem %s0, %s43
  %s45 = ssub.s32 0, 0
  %s46 = smul.u32 8, %s45
  %p47 = scmp.lt.s32.totalorder %s46, 7
  %s48 = scalar_select %p47, %s46, 7
  %s49 = smul.addr %s48, 8
  %s50 = scalar_lea.vmem %s1, %s49
  %s51 = ssub.s32 0, 0
  %s52 = smul.u32 8, %s51
  %p53 = scmp.lt.s32.totalorder %s52, 7
  %s54 = scalar_select %p53, %s52, 7
  %s55 = smul.addr %s54, 8
  %s56 = scalar_lea.vmem %s5, %s55
  %s57 = ssub.s32 0, 0
  %s58 = smul.u32 8, %s57
  %p59 = scmp.lt.s32.totalorder %s58, 7
  %s60 = scalar_select %p59, %s58, 7
  %s61 = smul.addr %s60, 8
  %s62 = scalar_lea.vmem %s0, %s61
  %s63 = ssub.s32 0, 0
  %s64 = smul.u32 8, %s63
  %s65 = ssub.s32 0, 0
  %s66 = smul.u32 8, %s65
  %p67 = scmp.lt.s32.totalorder %s66, 7
  %s68 = scalar_select %p67, %s66, 7
  %s69 = smul.addr %s68, 8
  %s70 = scalar_lea.vmem %s1, %s69
  %s71 = ssub.s32 0, 0
  %s72 = smul.u32 8, %s71
  %s73 = ssub.s32 0, 0
  %s74 = smul.u32 8, %s73
  %p75 = scmp.lt.s32.totalorder %s74, 7
  %s76 = scalar_select %p75, %s74, 7
  %s77 = smul.addr %s76, 8
  %s78 = scalar_lea.vmem %s5, %s77
  %s79 = ssub.s32 0, 0
  %s80 = smul.u32 8, %s79
  %p81 = scmp.eq.s32.totalorder 0, 0
  // Predicated region
  $region22: #{forward.7} parent=0 // pred_check
    %p82 = pneg %p81
  $region23: #{forward.7} parent=0 // pred_check_branch
    %84 = sbr.rel (%p82) target = $region25
  $region24: #{forward.7} parent=0 // pred_region
    %vm85 = vcmask 261120
    %86 = vst.msk [vmem:[#allocation3] sm:$0xff] %vm85, 0.0
    %87 = vst.msk [vmem:[#allocation4] sm:$0xff] %vm85, 0.0
  $region25: #{forward.7} parent=0 // pred_fallthru
    _
  %v88 = vld [vmem:[%s62] sm:$0xff]
  %v89 = vld [vmem:[%s62 + $0x8] sm:$0xff]
  %v90 = vld [vmem:[%s62 + $0x10] sm:$0xff]
  %v91 = vld [vmem:[%s62 + $0x18] sm:$0xff]
  %v92 = vld [vmem:[%s62 + $0x20] sm:$0xff]
  %v93 = vld [vmem:[%s62 + $0x28] sm:$0xff]
  %v94 = vld [vmem:[%s62 + $0x30] sm:$0xff]
  %v95 = vld [vmem:[%s62 + $0x38] sm:$0xff]
  %v96 = vld [vmem:[%s2] sm:$0xff]
  %v97 = vld [vmem:[%s2 + $0x8] sm:$0xff]
  %v98 = vld [vmem:[%s2 + $0x10] sm:$0xff]
  %v99 = vld [vmem:[%s2 + $0x18] sm:$0xff]
  %v100 = vld [vmem:[%s4] sm:$0x1]
  %v102 = vperm.slane %v100, 0
  %vm104 = vcmask 261120
  %v106 = vsel %vm104, %v88, 0
  %v109 = vsel %vm104, %v89, 0
  %v112 = vsel %vm104, %v90, 0
  %v115 = vsel %vm104, %v91, 0
  %v118 = vsel %vm104, %v92, 0
  %v121 = vsel %vm104, %v93, 0
  %v124 = vsel %vm104, %v94, 0
  %v127 = vsel %vm104, %v95, 0
  %129 = vmatpush.msra.mxu0 0.0
  %130 = vmatpush.msra.mxu0 0.0
  %131 = vmatpush.msra.mxu0 0.0
  %132 = vmatpush.msra.mxu0 0.0
  %133 = vmatpush.msra.mxu0 0.0
  %134 = vmatpush.msra.mxu0 0.0
  %135 = vmatpush.msra.mxu0 0.0
  %136 = vmatpush.msra.mxu0 0.0
  %137 = vmatpush.msra.mxu0 0.0
  %138 = vmatpush.msra.mxu0 0.0
  %139 = vmatpush.msra.mxu0 0.0
  %140 = vmatpush.msra.mxu0 0.0
  %141 = vmatpush.msra.mxu0 %v99
  %142 = vmatpush.msra.mxu0 %v98
  %143 = vmatpush.msra.mxu0 %v97
  %144 = vmatpush.msra.mxu0 %v96
  %145 = vmatmul.f32.gmra.mxu0 %v106
  %v146 = vpop.f32.mrf.mxu0
  %v147 = vadd.f32 %v102, %v146
  %148 = vmatmul.f32.gmra.mxu0 %v109
  %v149 = vpop.f32.mrf.mxu0
  %v150 = vadd.f32 %v102, %v149
  %151 = vmatmul.f32.gmra.mxu0 %v112
  %v152 = vpop.f32.mrf.mxu0
  %v153 = vadd.f32 %v102, %v152
  %154 = vmatmul.f32.gmra.mxu0 %v115
  %v155 = vpop.f32.mrf.mxu0
  %v156 = vadd.f32 %v102, %v155
  %157 = vmatmul.f32.gmra.mxu0 %v118
  %v158 = vpop.f32.mrf.mxu0
  %v159 = vadd.f32 %v102, %v158
  %160 = vmatmul.f32.gmra.mxu0 %v121
  %v161 = vpop.f32.mrf.mxu0
  %v162 = vadd.f32 %v102, %v161
  %163 = vmatmul.f32.gmra.mxu0 %v124
  %v164 = vpop.f32.mrf.mxu0
  %v165 = vadd.f32 %v102, %v164
  %166 = vmatmul.f32.gmra.mxu0 %v127
  %v167 = vpop.f32.mrf.mxu0
  %v168 = vadd.f32 %v102, %v167
  %169 = vdwg.mxu0
  %170 = vst [vmem:[#allocation2] sm:$0xff] %v147
  %171 = vst [vmem:[#allocation2 + $0x8] sm:$0xff] %v150
  %172 = vst [vmem:[#allocation2 + $0x10] sm:$0xff] %v153
  %173 = vst [vmem:[#allocation2 + $0x18] sm:$0xff] %v156
  %174 = vst [vmem:[#allocation2 + $0x20] sm:$0xff] %v159
  %175 = vst [vmem:[#allocation2 + $0x28] sm:$0xff] %v162
  %176 = vst [vmem:[#allocation2 + $0x30] sm:$0xff] %v165
  %177 = vst [vmem:[#allocation2 + $0x38] sm:$0xff] %v168
  %v178 = vld [vmem:[%s3] sm:$0xff]
  %v179 = vld [vmem:[%s3 + $0x8] sm:$0xff]
  %v180 = vld [vmem:[%s3 + $0x10] sm:$0xff]
  %v181 = vld [vmem:[%s3 + $0x18] sm:$0xff]
  %v182 = vld [vmem:[#allocation3] sm:$0xff]
  %v183 = vld [vmem:[#allocation4] sm:$0xff]
  %s184 = scalar_lea.vmem [#allocation2], 56
  %v185 = vld [vmem:[%s184] sm:$0xff]
  %v187 = vsel %vm104, %v182, 0
  %189 = vmatpush.msra.mxu0 0.0
  %190 = vmatpush.msra.mxu0 0.0
  %191 = vmatpush.msra.mxu0 0.0
  %192 = vmatpush.msra.mxu0 0.0
  %193 = vmatpush.msra.mxu0 0.0
  %194 = vmatpush.msra.mxu0 0.0
  %195 = vmatpush.msra.mxu0 0.0
  %196 = vmatpush.msra.mxu0 0.0
  %197 = vmatpush.msra.mxu0 0.0
  %198 = vmatpush.msra.mxu0 0.0
  %199 = vmatpush.msra.mxu0 0.0
  %200 = vmatpush.msra.mxu0 0.0
  %201 = vmatpush.msra.mxu0 %v181
  %202 = vmatpush.msra.mxu0 %v180
  %203 = vmatpush.msra.mxu0 %v179
  %204 = vmatpush.msra.mxu0 %v178
  %205 = vmatmul.f32.gmra.mxu0 %v187
  %v206 = vpop.f32.mrf.mxu0
  %v207 = vadd.f32 0.0, %v206
  %208 = vdwg.mxu0
  %v209 = vadd.f32 %v185, %v207
  %v210 = vxor.u32 %v209, 2147483648
  %v211 = vmul.f32 %v210, 1.442695
  %v212 = vpow.pop %v211
  %v213 = vadd.f32 %v212, 1.0
  %v214 = vrcp.pop %v213
  %v215 = vmul.f32 %v213, %v214
  %v216 = vsub.f32 1.0, %v215
  %v217 = vmul.f32 %v214, %v216
  %v218 = vadd.f32 %v214, %v217
  %vm219 = vweird.f32 %v213
  %vm220 = vweird.f32 %v214
  %vm221 = vmor %vm219, %vm220
  %v222 = vsel %vm221, %v214, %v218
  %v223 = vand.u32 2147483647, %v213
  %vm224 = vcmp.eq.f32.partialorder %v223, 8.507059e+37
  %v225 = vand.u32 %v213, 2147483648
  %v226 = vor.u32 1.1754944e-38, %v225
  %v227 = vsel %vm224, %v226, %v222
  %v228 = vmul.f32 1.0, %v227
  %v229 = vtanh.pop %v209
  %231 = vrot.lane.b32.xlu0 %v183, 32
  %v232 = vpop.permute.xlu0 %231
  %v234 = vmul.f32 %v228, %v232
  %236 = vrot.lane.b32.xlu0 %v229, 64
  %v237 = vpop.permute.xlu0 %236
  %v239 = vmul.f32 %v228, %v237
  %241 = vrot.lane.b32.xlu0 %v239, 32
  %v242 = vpop.permute.xlu0 %241
  %v244 = vadd.f32 %v234, %v242
  %v245 = vtanh.pop %v244
  %247 = vrot.lane.b32.xlu0 %v245, 64
  %v248 = vpop.permute.xlu0 %247
  %v250 = vmul.f32 %v228, %v248
  %s251 = scalar_lea.vmem %s70, 56
  %v252 = vld [vmem:[%s251] sm:$0xff]
  %254 = vrot.lane.b32.xlu0 %v250, 32
  %v255 = vpop.permute.xlu0 %254
  %v257 = vadd.f32 %v252, %v255
  %s258 = scalar_lea.vmem %s78, 56
  %259 = vst.msk [vmem:[%s258] sm:$0xff] %vm104, %v257
  %s260 = scalar_lea.vmem [#allocation2], 48
  %v261 = vld [vmem:[%s260] sm:$0xff]
  %v262 = vsel %vm104, %v255, 0
  %264 = vmatpush.msra.mxu0 0.0
  %265 = vmatpush.msra.mxu0 0.0
  %266 = vmatpush.msra.mxu0 0.0
  %267 = vmatpush.msra.mxu0 0.0
  %268 = vmatpush.msra.mxu0 0.0
  %269 = vmatpush.msra.mxu0 0.0
  %270 = vmatpush.msra.mxu0 0.0
  %271 = vmatpush.msra.mxu0 0.0
  %272 = vmatpush.msra.mxu0 0.0
  %273 = vmatpush.msra.mxu0 0.0
  %274 = vmatpush.msra.mxu0 0.0
  %275 = vmatpush.msra.mxu0 0.0
  %276 = vmatpush.msra.mxu0 %v181
  %277 = vmatpush.msra.mxu0 %v180
  %278 = vmatpush.msra.mxu0 %v179
  %279 = vmatpush.msra.mxu0 %v178
  %280 = vmatmul.f32.gmra.mxu0 %v262
  %v281 = vpop.f32.mrf.mxu0
  %v282 = vadd.f32 0.0, %v281
  %283 = vdwg.mxu0
  %v284 = vadd.f32 %v261, %v282
  %v285 = vxor.u32 %v284, 2147483648
  %v286 = vmul.f32 %v285, 1.442695
  %v287 = vpow.pop %v286
  %v288 = vadd.f32 %v287, 1.0
  %v289 = vrcp.pop %v288
  %v290 = vmul.f32 %v288, %v289
  %v291 = vsub.f32 1.0, %v290
  %v292 = vmul.f32 %v289, %v291
  %v293 = vadd.f32 %v289, %v292
  %vm294 = vweird.f32 %v288
  %vm295 = vweird.f32 %v289
  %vm296 = vmor %vm294, %vm295
  %v297 = vsel %vm296, %v289, %v293
  %v298 = vand.u32 2147483647, %v288
  %vm299 = vcmp.eq.f32.partialorder %v298, 8.507059e+37
  %v300 = vand.u32 %v288, 2147483648
  %v301 = vor.u32 1.1754944e-38, %v300
  %v302 = vsel %vm299, %v301, %v297
  %v303 = vmul.f32 1.0, %v302
  %v304 = vtanh.pop %v284
  %v305 = vmul.f32 %v303, %v244
  %307 = vrot.lane.b32.xlu0 %v304, 64
  %v308 = vpop.permute.xlu0 %307
  %v310 = vmul.f32 %v303, %v308
  %312 = vrot.lane.b32.xlu0 %v310, 32
  %v313 = vpop.permute.xlu0 %312
  %v315 = vadd.f32 %v305, %v313
  %v316 = vtanh.pop %v315
  %318 = vrot.lane.b32.xlu0 %v316, 64
  %v319 = vpop.permute.xlu0 %318
  %v321 = vmul.f32 %v303, %v319
  %s322 = scalar_lea.vmem %s70, 48
  %v323 = vld [vmem:[%s322] sm:$0xff]
  %325 = vrot.lane.b32.xlu0 %v321, 32
  %v326 = vpop.permute.xlu0 %325
  %v328 = vadd.f32 %v323, %v326
  %s329 = scalar_lea.vmem %s78, 48
  %330 = vst.msk [vmem:[%s329] sm:$0xff] %vm104, %v328
  %s331 = scalar_lea.vmem [#allocation2], 40
  %v332 = vld [vmem:[%s331] sm:$0xff]
  %v333 = vsel %vm104, %v326, 0
  %335 = vmatpush.msra.mxu0 0.0
  %336 = vmatpush.msra.mxu0 0.0
  %337 = vmatpush.msra.mxu0 0.0
  %338 = vmatpush.msra.mxu0 0.0
  %339 = vmatpush.msra.mxu0 0.0
  %340 = vmatpush.msra.mxu0 0.0
  %341 = vmatpush.msra.mxu0 0.0
  %342 = vmatpush.msra.mxu0 0.0
  %343 = vmatpush.msra.mxu0 0.0
  %344 = vmatpush.msra.mxu0 0.0
  %345 = vmatpush.msra.mxu0 0.0
  %346 = vmatpush.msra.mxu0 0.0
  %347 = vmatpush.msra.mxu0 %v181
  %348 = vmatpush.msra.mxu0 %v180
  %349 = vmatpush.msra.mxu0 %v179
  %350 = vmatpush.msra.mxu0 %v178
  %351 = vmatmul.f32.gmra.mxu0 %v333
  %v352 = vpop.f32.mrf.mxu0
  %v353 = vadd.f32 0.0, %v352
  %354 = vdwg.mxu0
  %v355 = vadd.f32 %v332, %v353
  %v356 = vxor.u32 %v355, 2147483648
  %v357 = vmul.f32 %v356, 1.442695
  %v358 = vpow.pop %v357
  %v359 = vadd.f32 %v358, 1.0
  %v360 = vrcp.pop %v359
  %v361 = vmul.f32 %v359, %v360
  %v362 = vsub.f32 1.0, %v361
  %v363 = vmul.f32 %v360, %v362
  %v364 = vadd.f32 %v360, %v363
  %vm365 = vweird.f32 %v359
  %vm366 = vweird.f32 %v360
  %vm367 = vmor %vm365, %vm366
  %v368 = vsel %vm367, %v360, %v364
  %v369 = vand.u32 2147483647, %v359
  %vm370 = vcmp.eq.f32.partialorder %v369, 8.507059e+37
  %v371 = vand.u32 %v359, 2147483648
  %v372 = vor.u32 1.1754944e-38, %v371
  %v373 = vsel %vm370, %v372, %v368
  %v374 = vmul.f32 1.0, %v373
  %v375 = vtanh.pop %v355
  %v376 = vmul.f32 %v374, %v315
  %378 = vrot.lane.b32.xlu0 %v375, 64
  %v379 = vpop.permute.xlu0 %378
  %v381 = vmul.f32 %v374, %v379
  %383 = vrot.lane.b32.xlu0 %v381, 32
  %v384 = vpop.permute.xlu0 %383
  %v386 = vadd.f32 %v376, %v384
  %v387 = vtanh.pop %v386
  %389 = vrot.lane.b32.xlu0 %v387, 64
  %v390 = vpop.permute.xlu0 %389
  %v392 = vmul.f32 %v374, %v390
  %s393 = scalar_lea.vmem %s70, 40
  %v394 = vld [vmem:[%s393] sm:$0xff]
  %396 = vrot.lane.b32.xlu0 %v392, 32
  %v397 = vpop.permute.xlu0 %396
  %v399 = vadd.f32 %v394, %v397
  %s400 = scalar_lea.vmem %s78, 40
  %401 = vst.msk [vmem:[%s400] sm:$0xff] %vm104, %v399
  %s402 = scalar_lea.vmem [#allocation2], 32
  %v403 = vld [vmem:[%s402] sm:$0xff]
  %v404 = vsel %vm104, %v397, 0
  %406 = vmatpush.msra.mxu0 0.0
  %407 = vmatpush.msra.mxu0 0.0
  %408 = vmatpush.msra.mxu0 0.0
  %409 = vmatpush.msra.mxu0 0.0
  %410 = vmatpush.msra.mxu0 0.0
  %411 = vmatpush.msra.mxu0 0.0
  %412 = vmatpush.msra.mxu0 0.0
  %413 = vmatpush.msra.mxu0 0.0
  %414 = vmatpush.msra.mxu0 0.0
  %415 = vmatpush.msra.mxu0 0.0
  %416 = vmatpush.msra.mxu0 0.0
  %417 = vmatpush.msra.mxu0 0.0
  %418 = vmatpush.msra.mxu0 %v181
  %419 = vmatpush.msra.mxu0 %v180
  %420 = vmatpush.msra.mxu0 %v179
  %421 = vmatpush.msra.mxu0 %v178
  %422 = vmatmul.f32.gmra.mxu0 %v404
  %v423 = vpop.f32.mrf.mxu0
  %v424 = vadd.f32 0.0, %v423
  %425 = vdwg.mxu0
  %v426 = vadd.f32 %v403, %v424
  %v427 = vxor.u32 %v426, 2147483648
  %v428 = vmul.f32 %v427, 1.442695
  %v429 = vpow.pop %v428
  %v430 = vadd.f32 %v429, 1.0
  %v431 = vrcp.pop %v430
  %v432 = vmul.f32 %v430, %v431
  %v433 = vsub.f32 1.0, %v432
  %v434 = vmul.f32 %v431, %v433
  %v435 = vadd.f32 %v431, %v434
  %vm436 = vweird.f32 %v430
  %vm437 = vweird.f32 %v431
  %vm438 = vmor %vm436, %vm437
  %v439 = vsel %vm438, %v431, %v435
  %v440 = vand.u32 2147483647, %v430
  %vm441 = vcmp.eq.f32.partialorder %v440, 8.507059e+37
  %v442 = vand.u32 %v430, 2147483648
  %v443 = vor.u32 1.1754944e-38, %v442
  %v444 = vsel %vm441, %v443, %v439
  %v445 = vmul.f32 1.0, %v444
  %v446 = vtanh.pop %v426
  %v447 = vmul.f32 %v445, %v386
  %449 = vrot.lane.b32.xlu0 %v446, 64
  %v450 = vpop.permute.xlu0 %449
  %v452 = vmul.f32 %v445, %v450
  %454 = vrot.lane.b32.xlu0 %v452, 32
  %v455 = vpop.permute.xlu0 %454
  %v457 = vadd.f32 %v447, %v455
  %v458 = vtanh.pop %v457
  %460 = vrot.lane.b32.xlu0 %v458, 64
  %v461 = vpop.permute.xlu0 %460
  %v463 = vmul.f32 %v445, %v461
  %s464 = scalar_lea.vmem %s70, 32
  %v465 = vld [vmem:[%s464] sm:$0xff]
  %467 = vrot.lane.b32.xlu0 %v463, 32
  %v468 = vpop.permute.xlu0 %467
  %v470 = vadd.f32 %v465, %v468
  %s471 = scalar_lea.vmem %s78, 32
  %472 = vst.msk [vmem:[%s471] sm:$0xff] %vm104, %v470
  %s473 = scalar_lea.vmem [#allocation2], 24
  %v474 = vld [vmem:[%s473] sm:$0xff]
  %v475 = vsel %vm104, %v468, 0
  %477 = vmatpush.msra.mxu0 0.0
  %478 = vmatpush.msra.mxu0 0.0
  %479 = vmatpush.msra.mxu0 0.0
  %480 = vmatpush.msra.mxu0 0.0
  %481 = vmatpush.msra.mxu0 0.0
  %482 = vmatpush.msra.mxu0 0.0
  %483 = vmatpush.msra.mxu0 0.0
  %484 = vmatpush.msra.mxu0 0.0
  %485 = vmatpush.msra.mxu0 0.0
  %486 = vmatpush.msra.mxu0 0.0
  %487 = vmatpush.msra.mxu0 0.0
  %488 = vmatpush.msra.mxu0 0.0
  %489 = vmatpush.msra.mxu0 %v181
  %490 = vmatpush.msra.mxu0 %v180
  %491 = vmatpush.msra.mxu0 %v179
  %492 = vmatpush.msra.mxu0 %v178
  %493 = vmatmul.f32.gmra.mxu0 %v475
  %v494 = vpop.f32.mrf.mxu0
  %v495 = vadd.f32 0.0, %v494
  %496 = vdwg.mxu0
  %v497 = vadd.f32 %v474, %v495
  %v498 = vxor.u32 %v497, 2147483648
  %v499 = vmul.f32 %v498, 1.442695
  %v500 = vpow.pop %v499
  %v501 = vadd.f32 %v500, 1.0
  %v502 = vrcp.pop %v501
  %v503 = vmul.f32 %v501, %v502
  %v504 = vsub.f32 1.0, %v503
  %v505 = vmul.f32 %v502, %v504
  %v506 = vadd.f32 %v502, %v505
  %vm507 = vweird.f32 %v501
  %vm508 = vweird.f32 %v502
  %vm509 = vmor %vm507, %vm508
  %v510 = vsel %vm509, %v502, %v506
  %v511 = vand.u32 2147483647, %v501
  %vm512 = vcmp.eq.f32.partialorder %v511, 8.507059e+37
  %v513 = vand.u32 %v501, 2147483648
  %v514 = vor.u32 1.1754944e-38, %v513
  %v515 = vsel %vm512, %v514, %v510
  %v516 = vmul.f32 1.0, %v515
  %v517 = vtanh.pop %v497
  %v518 = vmul.f32 %v516, %v457
  %520 = vrot.lane.b32.xlu0 %v517, 64
  %v521 = vpop.permute.xlu0 %520
  %v523 = vmul.f32 %v516, %v521
  %525 = vrot.lane.b32.xlu0 %v523, 32
  %v526 = vpop.permute.xlu0 %525
  %v528 = vadd.f32 %v518, %v526
  %v529 = vtanh.pop %v528
  %531 = vrot.lane.b32.xlu0 %v529, 64
  %v532 = vpop.permute.xlu0 %531
  %v534 = vmul.f32 %v516, %v532
  %s535 = scalar_lea.vmem %s70, 24
  %v536 = vld [vmem:[%s535] sm:$0xff]
  %538 = vrot.lane.b32.xlu0 %v534, 32
  %v539 = vpop.permute.xlu0 %538
  %v541 = vadd.f32 %v536, %v539
  %s542 = scalar_lea.vmem %s78, 24
  %543 = vst.msk [vmem:[%s542] sm:$0xff] %vm104, %v541
  %s544 = scalar_lea.vmem [#allocation2], 16
  %v545 = vld [vmem:[%s544] sm:$0xff]
  %v546 = vsel %vm104, %v539, 0
  %548 = vmatpush.msra.mxu0 0.0
  %549 = vmatpush.msra.mxu0 0.0
  %550 = vmatpush.msra.mxu0 0.0
  %551 = vmatpush.msra.mxu0 0.0
  %552 = vmatpush.msra.mxu0 0.0
  %553 = vmatpush.msra.mxu0 0.0
  %554 = vmatpush.msra.mxu0 0.0
  %555 = vmatpush.msra.mxu0 0.0
  %556 = vmatpush.msra.mxu0 0.0
  %557 = vmatpush.msra.mxu0 0.0
  %558 = vmatpush.msra.mxu0 0.0
  %559 = vmatpush.msra.mxu0 0.0
  %560 = vmatpush.msra.mxu0 %v181
  %561 = vmatpush.msra.mxu0 %v180
  %562 = vmatpush.msra.mxu0 %v179
  %563 = vmatpush.msra.mxu0 %v178
  %564 = vmatmul.f32.gmra.mxu0 %v546
  %v565 = vpop.f32.mrf.mxu0
  %v566 = vadd.f32 0.0, %v565
  %567 = vdwg.mxu0
  %v568 = vadd.f32 %v545, %v566
  %v569 = vxor.u32 %v568, 2147483648
  %v570 = vmul.f32 %v569, 1.442695
  %v571 = vpow.pop %v570
  %v572 = vadd.f32 %v571, 1.0
  %v573 = vrcp.pop %v572
  %v574 = vmul.f32 %v572, %v573
  %v575 = vsub.f32 1.0, %v574
  %v576 = vmul.f32 %v573, %v575
  %v577 = vadd.f32 %v573, %v576
  %vm578 = vweird.f32 %v572
  %vm579 = vweird.f32 %v573
  %vm580 = vmor %vm578, %vm579
  %v581 = vsel %vm580, %v573, %v577
  %v582 = vand.u32 2147483647, %v572
  %vm583 = vcmp.eq.f32.partialorder %v582, 8.507059e+37
  %v584 = vand.u32 %v572, 2147483648
  %v585 = vor.u32 1.1754944e-38, %v584
  %v586 = vsel %vm583, %v585, %v581
  %v587 = vmul.f32 1.0, %v586
  %v588 = vtanh.pop %v568
  %v589 = vmul.f32 %v587, %v528
  %591 = vrot.lane.b32.xlu0 %v588, 64
  %v592 = vpop.permute.xlu0 %591
  %v594 = vmul.f32 %v587, %v592
  %596 = vrot.lane.b32.xlu0 %v594, 32
  %v597 = vpop.permute.xlu0 %596
  %v599 = vadd.f32 %v589, %v597
  %v600 = vtanh.pop %v599
  %602 = vrot.lane.b32.xlu0 %v600, 64
  %v603 = vpop.permute.xlu0 %602
  %v605 = vmul.f32 %v587, %v603
  %s606 = scalar_lea.vmem %s70, 16
  %v607 = vld [vmem:[%s606] sm:$0xff]
  %609 = vrot.lane.b32.xlu0 %v605, 32
  %v610 = vpop.permute.xlu0 %609
  %v612 = vadd.f32 %v607, %v610
  %s613 = scalar_lea.vmem %s78, 16
  %614 = vst.msk [vmem:[%s613] sm:$0xff] %vm104, %v612
  %s615 = scalar_lea.vmem [#allocation2], 8
  %v616 = vld [vmem:[%s615] sm:$0xff]
  %v617 = vsel %vm104, %v610, 0
  %619 = vmatpush.msra.mxu0 0.0
  %620 = vmatpush.msra.mxu0 0.0
  %621 = vmatpush.msra.mxu0 0.0
  %622 = vmatpush.msra.mxu0 0.0
  %623 = vmatpush.msra.mxu0 0.0
  %624 = vmatpush.msra.mxu0 0.0
  %625 = vmatpush.msra.mxu0 0.0
  %626 = vmatpush.msra.mxu0 0.0
  %627 = vmatpush.msra.mxu0 0.0
  %628 = vmatpush.msra.mxu0 0.0
  %629 = vmatpush.msra.mxu0 0.0
  %630 = vmatpush.msra.mxu0 0.0
  %631 = vmatpush.msra.mxu0 %v181
  %632 = vmatpush.msra.mxu0 %v180
  %633 = vmatpush.msra.mxu0 %v179
  %634 = vmatpush.msra.mxu0 %v178
  %635 = vmatmul.f32.gmra.mxu0 %v617
  %v636 = vpop.f32.mrf.mxu0
  %v637 = vadd.f32 0.0, %v636
  %638 = vdwg.mxu0
  %v639 = vadd.f32 %v616, %v637
  %v640 = vxor.u32 %v639, 2147483648
  %v641 = vmul.f32 %v640, 1.442695
  %v642 = vpow.pop %v641
  %v643 = vadd.f32 %v642, 1.0
  %v644 = vrcp.pop %v643
  %v645 = vmul.f32 %v643, %v644
  %v646 = vsub.f32 1.0, %v645
  %v647 = vmul.f32 %v644, %v646
  %v648 = vadd.f32 %v644, %v647
  %vm649 = vweird.f32 %v643
  %vm650 = vweird.f32 %v644
  %vm651 = vmor %vm649, %vm650
  %v652 = vsel %vm651, %v644, %v648
  %v653 = vand.u32 2147483647, %v643
  %vm654 = vcmp.eq.f32.partialorder %v653, 8.507059e+37
  %v655 = vand.u32 %v643, 2147483648
  %v656 = vor.u32 1.1754944e-38, %v655
  %v657 = vsel %vm654, %v656, %v652
  %v658 = vmul.f32 1.0, %v657
  %v659 = vtanh.pop %v639
  %v660 = vmul.f32 %v658, %v599
  %662 = vrot.lane.b32.xlu0 %v659, 64
  %v663 = vpop.permute.xlu0 %662
  %v665 = vmul.f32 %v658, %v663
  %667 = vrot.lane.b32.xlu0 %v665, 32
  %v668 = vpop.permute.xlu0 %667
  %v670 = vadd.f32 %v660, %v668
  %v671 = vtanh.pop %v670
  %673 = vrot.lane.b32.xlu0 %v671, 64
  %v674 = vpop.permute.xlu0 %673
  %v676 = vmul.f32 %v658, %v674
  %s677 = scalar_lea.vmem %s70, 8
  %v678 = vld [vmem:[%s677] sm:$0xff]
  %680 = vrot.lane.b32.xlu0 %v676, 32
  %v681 = vpop.permute.xlu0 %680
  %v683 = vadd.f32 %v678, %v681
  %s684 = scalar_lea.vmem %s78, 8
  %685 = vst.msk [vmem:[%s684] sm:$0xff] %vm104, %v683
  %v686 = vld [vmem:[#allocation2] sm:$0xff]
  %v687 = vsel %vm104, %v681, 0
  %689 = vmatpush.msra.mxu0 0.0
  %690 = vmatpush.msra.mxu0 0.0
  %691 = vmatpush.msra.mxu0 0.0
  %692 = vmatpush.msra.mxu0 0.0
  %693 = vmatpush.msra.mxu0 0.0
  %694 = vmatpush.msra.mxu0 0.0
  %695 = vmatpush.msra.mxu0 0.0
  %696 = vmatpush.msra.mxu0 0.0
  %697 = vmatpush.msra.mxu0 0.0
  %698 = vmatpush.msra.mxu0 0.0
  %699 = vmatpush.msra.mxu0 0.0
  %700 = vmatpush.msra.mxu0 0.0
  %701 = vmatpush.msra.mxu0 %v181
  %702 = vmatpush.msra.mxu0 %v180
  %703 = vmatpush.msra.mxu0 %v179
  %704 = vmatpush.msra.mxu0 %v178
  %705 = vmatmul.f32.gmra.mxu0 %v687
  %v706 = vpop.f32.mrf.mxu0
  %v707 = vadd.f32 0.0, %v706
  %708 = vdwg.mxu0
  %v709 = vadd.f32 %v686, %v707
  %v710 = vxor.u32 %v709, 2147483648
  %v711 = vmul.f32 %v710, 1.442695
  %v712 = vpow.pop %v711
  %v713 = vadd.f32 %v712, 1.0
  %v714 = vrcp.pop %v713
  %v715 = vmul.f32 %v713, %v714
  %v716 = vsub.f32 1.0, %v715
  %v717 = vmul.f32 %v714, %v716
  %v718 = vadd.f32 %v714, %v717
  %vm719 = vweird.f32 %v713
  %vm720 = vweird.f32 %v714
  %vm721 = vmor %vm719, %vm720
  %v722 = vsel %vm721, %v714, %v718
  %v723 = vand.u32 2147483647, %v713
  %vm724 = vcmp.eq.f32.partialorder %v723, 8.507059e+37
  %v725 = vand.u32 %v713, 2147483648
  %v726 = vor.u32 1.1754944e-38, %v725
  %v727 = vsel %vm724, %v726, %v722
  %v728 = vmul.f32 1.0, %v727
  %v729 = vtanh.pop %v709
  %v730 = vmul.f32 %v728, %v670
  %732 = vrot.lane.b32.xlu0 %v729, 64
  %v733 = vpop.permute.xlu0 %732
  %v735 = vmul.f32 %v728, %v733
  %737 = vrot.lane.b32.xlu0 %v735, 32
  %v738 = vpop.permute.xlu0 %737
  %v740 = vadd.f32 %v730, %v738
  %v741 = vtanh.pop %v740
  %743 = vrot.lane.b32.xlu0 %v741, 64
  %v744 = vpop.permute.xlu0 %743
  %v746 = vmul.f32 %v728, %v744
  %v747 = vld [vmem:[%s70] sm:$0xff]
  %749 = vrot.lane.b32.xlu0 %v746, 32
  %v750 = vpop.permute.xlu0 %749
  %v752 = vadd.f32 %v747, %v750
  %753 = vst.msk [vmem:[%s78] sm:$0xff] %vm104, %v752
  %754 = vst.msk [vmem:[#allocation3] sm:$0xff] %vm104, %v750
  %756 = vrot.lane.b32.xlu0 %v740, 96
  %v757 = vpop.permute.xlu0 %756
  %759 = vst.msk [vmem:[#allocation4] sm:$0xff] %vm104, %v757
  %760 = vst.msk [vmem:[%s6] sm:$0xff] %vm104, %v750
  %761 = vst.msk [vmem:[%s7] sm:$0xff] %vm104, %v757
  %s762 = ssub.s32 0, 0
  %s763 = smul.u32 8, %s762
  %p764 = scmp.lt.s32.totalorder %s763, 7
  %s765 = scalar_select %p764, %s763, 7
  %s766 = smul.addr %s765, 8
  %s767 = scalar_lea.vmem %s5, %s766
  // Predicated region
  $region26: #{forward.7} parent=0 // pred_check
    _
  $region27: #{forward.7} parent=0 // pred_check_branch
    %769 = sbr.rel (0) target = $region29
  $region28: #{forward.7} parent=0 // pred_region
    %s770 = ssub.s32 0, 0
    %s771 = smul.u32 8, %s770
  $region29: #{forward.7} parent=0 // pred_fallthru
    _
  // Predicated region
  $region30: #{forward.7} parent=0 // pred_check
    _
  $region31: #{forward.7} parent=0 // pred_check_branch
    %773 = sbr.rel (0) target = $region33
  $region32: #{forward.7} parent=0 // pred_region
    _
  $region33: #{forward.7} parent=0 // pred_fallthru
    _
  // Predicated region
  $region34: #{forward.7} parent=0 // pred_check
    _
  $region35: #{forward.7} parent=0 // pred_check_branch
    %775 = sbr.rel (0) target = $region37
  $region36: #{forward.7} parent=0 // pred_region
    _
  $region37: #{forward.7} parent=0 // pred_fallthru
    _
  // Predicated region
  $region38: #{forward.7} parent=0 // pred_check
    _
  $region39: #{forward.7} parent=0 // pred_check_branch
    %777 = sbr.rel (0) target = $region41
  $region40: #{forward.7} parent=0 // pred_region
    %s778 = ssub.s32 0, 0
    %s779 = smul.u32 8, %s778
    %p780 = scmp.lt.s32.totalorder %s779, 7
    %s781 = scalar_select %p780, %s779, 7
    %s782 = smul.addr %s781, 8
    %s783 = scalar_lea.vmem %s5, %s782
  $region41: #{forward.7} parent=0 // pred_fallthru
    _
  // Predicated region
  $region42: #{forward.7} parent=0 // pred_check
    _
  $region43: #{forward.7} parent=0 // pred_check_branch
    %785 = sbr.rel (0) target = $region45
  $region44: #{forward.7} parent=0 // pred_region
    _
  $region45: #{forward.7} parent=0 // pred_fallthru
    _
  // Predicated region
  $region46: #{forward.7} parent=0 // pred_check
    _
  $region47: #{forward.7} parent=0 // pred_check_branch
    %787 = sbr.rel (0) target = $region49
  $region48: #{forward.7} parent=0 // pred_region
    _
  $region49: #{forward.7} parent=0 // pred_fallthru
    _

// kernel: forward.11
$region0: #{forward.11}
  #allocation0 [shape = 'u32[]', space=smem, size = 0x4, offset = 0x4, fixed_abs, tag = 'smem constant byte address 0x4 - core index']
  #allocation1 [shape = 'u32[72,128]{1,0:T(1,128)}', space=vmem, size = 0x9000, scoped, tag = 'internal scratch']
  %s0 = inlined_call_operand.vmem [shape: f32[56,128], index: 0, kind: input, shape index: {}]
  %s1 = inlined_call_operand.vmem [shape: f32[56,128], index: 1, kind: input, shape index: {}]
  %s2 = inlined_call_operand.vmem [shape: f32[56,128], index: 2, kind: output, shape index: {}]
  %s3 = sld [smem:[#allocation0]]
  $region18: #{forward.11} parent=0
    _
  %s5 = ssub.s32 1, %s3
  %s6 = scalar_select 0, %s5, %s3
  // Predicated region
  $region2: #{forward.11} parent=0 // pred_check
    _
  $region3: #{forward.11} parent=0 // pred_check_branch
    %8 = sbr.rel (0) target = $region5
  $region4: #{forward.11} parent=0 // pred_region
    _
  $region5: #{forward.11} parent=0 // pred_fallthru
    _
  // Predicated region
  $region6: #{forward.11} parent=0 // pred_check
    _
  $region7: #{forward.11} parent=0 // pred_check_branch
    %10 = sbr.rel (0) target = $region9
  $region8: #{forward.11} parent=0 // pred_region
    _
  $region9: #{forward.11} parent=0 // pred_fallthru
    _
  %v11 = vld [vmem:[%s0] sm:$0xff]
  %v12 = vld [vmem:[%s0 + $0x8] sm:$0xff]
  %v13 = vld [vmem:[%s0 + $0x10] sm:$0xff]
  %v14 = vld [vmem:[%s0 + $0x18] sm:$0xff]
  %v15 = vld [vmem:[%s0 + $0x20] sm:$0xff]
  %v16 = vld [vmem:[%s0 + $0x28] sm:$0xff]
  %v17 = vld [vmem:[%s0 + $0x30] sm:$0xff]
  %v18 = vld [vmem:[%s1] sm:$0xff]
  %v19 = vld [vmem:[%s1 + $0x8] sm:$0xff]
  %v20 = vld [vmem:[%s1 + $0x10] sm:$0xff]
  %v21 = vld [vmem:[%s1 + $0x18] sm:$0xff]
  %v22 = vld [vmem:[%s1 + $0x20] sm:$0xff]
  %v23 = vld [vmem:[%s1 + $0x28] sm:$0xff]
  %v24 = vld [vmem:[%s1 + $0x30] sm:$0xff]
  %26 = vset.pattern.permute.xlu0 0
  %27 = vperm.xlu0 %26, %v18
  %v28 = vpop.permute.xlu0 %27
  %31 = vset.pattern.permute.xlu0 0
  %32 = vperm.xlu0 %31, %v19
  %v33 = vpop.permute.xlu0 %32
  %36 = vset.pattern.permute.xlu0 0
  %37 = vperm.xlu0 %36, %v20
  %v38 = vpop.permute.xlu0 %37
  %41 = vset.pattern.permute.xlu0 0
  %42 = vperm.xlu0 %41, %v21
  %v43 = vpop.permute.xlu0 %42
  %46 = vset.pattern.permute.xlu0 0
  %47 = vperm.xlu0 %46, %v22
  %v48 = vpop.permute.xlu0 %47
  %51 = vset.pattern.permute.xlu0 0
  %52 = vperm.xlu0 %51, %v23
  %v53 = vpop.permute.xlu0 %52
  %56 = vset.pattern.permute.xlu0 0
  %57 = vperm.xlu0 %56, %v24
  %v58 = vpop.permute.xlu0 %57
  %v60 = vsub.f32 %v11, %v28
  %v61 = vsub.f32 %v12, %v33
  %v62 = vsub.f32 %v13, %v38
  %v63 = vsub.f32 %v14, %v43
  %v64 = vsub.f32 %v15, %v48
  %v65 = vsub.f32 %v16, %v53
  %v66 = vsub.f32 %v17, %v58
  %67 = vst [vmem:[%s2] sm:$0xff] %v60
  %68 = vst [vmem:[%s2 + $0x8] sm:$0xff] %v61
  %69 = vst [vmem:[%s2 + $0x10] sm:$0xff] %v62
  %70 = vst [vmem:[%s2 + $0x18] sm:$0xff] %v63
  %71 = vst [vmem:[%s2 + $0x20] sm:$0xff] %v64
  %72 = vst [vmem:[%s2 + $0x28] sm:$0xff] %v65
  %73 = vst [vmem:[%s2 + $0x30] sm:$0xff] %v66
  // Predicated region
  $region10: #{forward.11} parent=0 // pred_check
    _
  $region11: #{forward.11} parent=0 // pred_check_branch
    %75 = sbr.rel (0) target = $region13
  $region12: #{forward.11} parent=0 // pred_region
    _
  $region13: #{forward.11} parent=0 // pred_fallthru
    _
  // Predicated region
  $region14: #{forward.11} parent=0 // pred_check
    _
  $region15: #{forward.11} parent=0 // pred_check_branch
    %77 = sbr.rel (0) target = $region17
  $region16: #{forward.11} parent=0 // pred_region
    _
  $region17: #{forward.11} parent=0 // pred_fallthru
    _

// kernel: forward.10
$region0: #{forward.10}
  #allocation0 [shape = 'u32[]', space=smem, size = 0x4, offset = 0x4, fixed_abs, tag = 'smem constant byte address 0x4 - core index']
  #allocation1 [shape = 'u32[72,128]{1,0:T(1,128)}', space=vmem, size = 0x9000, scoped, tag = 'internal scratch']
  #allocation2 [shape = 'f32[56,1]{1,0:T(8,128)}', space=vmem, size = 0x7000, scoped, tag = 'scratch operand']
  #allocation3 [shape = 'f32[56,1]{1,0:T(8,128)}', space=vmem, size = 0x7000, scoped, tag = 'scratch operand']
  %s0 = inlined_call_operand.vmem [shape: bf16[56,32], index: 0, kind: input, shape index: {}]
  %s1 = inlined_call_operand.vmem [shape: bf16[32,128], index: 1, kind: input, shape index: {}]
  %s2 = inlined_call_operand.vmem [shape: f32[1,128], index: 2, kind: input, shape index: {}]
  %s3 = inlined_call_operand.vmem [shape: f32[56,128], index: 3, kind: output, shape index: {0}]
  %s4 = inlined_call_operand.vmem [shape: f32[56,128], index: 4, kind: output, shape index: {1}]
  %5 = xla_tuple %s3, %s4
  %s6 = sld [smem:[#allocation0]]
  $region38: #{forward.10} parent=0
    _
  %s8 = ssub.s32 1, %s6
  %s9 = scalar_select 0, %s8, %s6
  // Predicated region
  $region2: #{forward.10} parent=0 // pred_check
    _
  $region3: #{forward.10} parent=0 // pred_check_branch
    %11 = sbr.rel (0) target = $region5
  $region4: #{forward.10} parent=0 // pred_region
    _
  $region5: #{forward.10} parent=0 // pred_fallthru
    _
  // Predicated region
  $region6: #{forward.10} parent=0 // pred_check
    _
  $region7: #{forward.10} parent=0 // pred_check_branch
    %13 = sbr.rel (0) target = $region9
  $region8: #{forward.10} parent=0 // pred_region
    _
  $region9: #{forward.10} parent=0 // pred_fallthru
    _
  // Predicated region
  $region10: #{forward.10} parent=0 // pred_check
    _
  $region11: #{forward.10} parent=0 // pred_check_branch
    %15 = sbr.rel (0) target = $region13
  $region12: #{forward.10} parent=0 // pred_region
    _
  $region13: #{forward.10} parent=0 // pred_fallthru
    _
  %p17 = scmp.eq.s32.totalorder 0, 0
  // Predicated region
  $region14: #{forward.10} parent=0 // pred_check
    %p18 = pneg %p17
  $region15: #{forward.10} parent=0 // pred_check_branch
    %20 = sbr.rel (%p18) target = $region17
  $region16: #{forward.10} parent=0 // pred_region
    %vm21 = vcmask 7168
    %22 = vst.msk [vmem:[#allocation2] sm:$0xff] %vm21, -inf
    %23 = vst.msk [vmem:[#allocation2 + $0x8] sm:$0xff] %vm21, -inf
    %24 = vst.msk [vmem:[#allocation2 + $0x10] sm:$0xff] %vm21, -inf
    %25 = vst.msk [vmem:[#allocation2 + $0x18] sm:$0xff] %vm21, -inf
    %26 = vst.msk [vmem:[#allocation2 + $0x20] sm:$0xff] %vm21, -inf
    %27 = vst.msk [vmem:[#allocation2 + $0x28] sm:$0xff] %vm21, -inf
    %28 = vst.msk [vmem:[#allocation2 + $0x30] sm:$0xff] %vm21, -inf
    %29 = vst.msk [vmem:[#allocation3] sm:$0xff] %vm21, 0.0
    %30 = vst.msk [vmem:[#allocation3 + $0x8] sm:$0xff] %vm21, 0.0
    %31 = vst.msk [vmem:[#allocation3 + $0x10] sm:$0xff] %vm21, 0.0
    %32 = vst.msk [vmem:[#allocation3 + $0x18] sm:$0xff] %vm21, 0.0
    %33 = vst.msk [vmem:[#allocation3 + $0x20] sm:$0xff] %vm21, 0.0
    %34 = vst.msk [vmem:[#allocation3 + $0x28] sm:$0xff] %vm21, 0.0
    %35 = vst.msk [vmem:[#allocation3 + $0x30] sm:$0xff] %vm21, 0.0
  $region17: #{forward.10} parent=0 // pred_fallthru
    _
  %v36 = vld [vmem:[%s0] sm:$0xf]
  %v37 = vld [vmem:[%s0 + $0x4] sm:$0xf]
  %v38 = vld [vmem:[%s0 + $0x8] sm:$0xf]
  %v39 = vld [vmem:[%s0 + $0xc] sm:$0xf]
  %v40 = vld [vmem:[%s0 + $0x10] sm:$0xf]
  %v41 = vld [vmem:[%s0 + $0x14] sm:$0xf]
  %v42 = vld [vmem:[%s0 + $0x18] sm:$0xf]
  %v43 = vld [vmem:[%s1] sm:$0xf]
  %v44 = vld [vmem:[%s1 + $0x4] sm:$0xf]
  %v45 = vld [vmem:[%s1 + $0x8] sm:$0xf]
  %v46 = vld [vmem:[%s1 + $0xc] sm:$0xf]
  %v47 = vld [vmem:[%s2] sm:$0x1]
  %v49 = vperm.slane %v47, 0
  %v58 = vunpack.c.l.b16 %v36
  %v59 = vunpack.c.l.b16 %v37
  %v60 = vunpack.c.l.b16 %v38
  %v61 = vunpack.c.l.b16 %v39
  %v62 = vunpack.c.l.b16 %v40
  %v63 = vunpack.c.l.b16 %v41
  %v64 = vunpack.c.l.b16 %v42
  %v65 = vpack.c.b16 %v59, %v58
  %v66 = vpack.c.b16 %v61, %v60
  %v67 = vpack.c.b16 %v63, %v62
  %v68 = vpack.c.b16 %v64, %v64
  %v73 = vunpack.c.l.b16 %v43
  %v74 = vunpack.c.l.b16 %v44
  %v75 = vunpack.c.l.b16 %v45
  %v76 = vunpack.c.l.b16 %v46
  %v77 = vpack.c.b16 %v74, %v73
  %v78 = vpack.c.b16 %v76, %v75
  %vm81 = vcmask 261120
  %v83 = vsel %vm81, %v65, 0
  %v86 = vsel %vm81, %v66, 0
  %v89 = vsel %vm81, %v67, 0
  %v92 = vsel %vm81, %v68, 0
  %94 = vmatpush.bf16.msra.mxu0 0
  %95 = vmatpush.bf16.msra.mxu0 0
  %96 = vmatpush.bf16.msra.mxu0 0
  %97 = vmatpush.bf16.msra.mxu0 0
  %98 = vmatpush.bf16.msra.mxu0 0
  %99 = vmatpush.bf16.msra.mxu0 0
  %100 = vmatpush.bf16.msra.mxu0 %v78
  %101 = vmatpush.bf16.msra.mxu0 %v77
  %102 = vmatmul.bf16.gmra.mxu0 %v83
  %v103 = vpop.f32.mrf.mxu0
  %v104 = vadd.f32 %v49, %v103
  %v105 = vpop.f32.mrf.mxu0
  %v106 = vadd.f32 %v49, %v105
  %107 = vmatmul.bf16.gmra.mxu0 %v86
  %v108 = vpop.f32.mrf.mxu0
  %v109 = vadd.f32 %v49, %v108
  %v110 = vpop.f32.mrf.mxu0
  %v111 = vadd.f32 %v49, %v110
  %112 = vmatmul.bf16.gmra.mxu0 %v89
  %v113 = vpop.f32.mrf.mxu0
  %v114 = vadd.f32 %v49, %v113
  %v115 = vpop.f32.mrf.mxu0
  %v116 = vadd.f32 %v49, %v115
  %117 = vmatmul.bf16.gmra.mxu0 %v92
  %v118 = vpop.f32.mrf.mxu0
  %v119 = vadd.f32 %v49, %v118
  %v120 = vpop.f32.mrf.mxu0
  %121 = vdwg.mxu0
  %122 = vst [vmem:[%s3] sm:$0xff] %v104
  %123 = vst [vmem:[%s3 + $0x8] sm:$0xff] %v106
  %124 = vst [vmem:[%s3 + $0x10] sm:$0xff] %v109
  %125 = vst [vmem:[%s3 + $0x18] sm:$0xff] %v111
  %126 = vst [vmem:[%s3 + $0x20] sm:$0xff] %v114
  %127 = vst [vmem:[%s3 + $0x28] sm:$0xff] %v116
  %128 = vst [vmem:[%s3 + $0x30] sm:$0xff] %v119
  %129 = vmax.xlane.f32.xlu0 %v104
  %v130 = vpop.xlane.xlu0 %129
  %131 = vmax.xlane.f32.xlu0 %v106
  %v132 = vpop.xlane.xlu0 %131
  %133 = vmax.xlane.f32.xlu0 %v109
  %v134 = vpop.xlane.xlu0 %133
  %135 = vmax.xlane.f32.xlu0 %v111
  %v136 = vpop.xlane.xlu0 %135
  %137 = vmax.xlane.f32.xlu0 %v114
  %v138 = vpop.xlane.xlu0 %137
  %139 = vmax.xlane.f32.xlu0 %v116
  %v140 = vpop.xlane.xlu0 %139
  %141 = vmax.xlane.f32.xlu0 %v119
  %v142 = vpop.xlane.xlu0 %141
  %v143 = vld [vmem:[#allocation2] sm:$0xff]
  %v144 = vld [vmem:[#allocation2 + $0x8] sm:$0xff]
  %v145 = vld [vmem:[#allocation2 + $0x10] sm:$0xff]
  %v146 = vld [vmem:[#allocation2 + $0x18] sm:$0xff]
  %v147 = vld [vmem:[#allocation2 + $0x20] sm:$0xff]
  %v148 = vld [vmem:[#allocation2 + $0x28] sm:$0xff]
  %v149 = vld [vmem:[#allocation2 + $0x30] sm:$0xff]
  %v150 = vmax.f32 %v143, %v130
  %v151 = vmax.f32 %v144, %v132
  %v152 = vmax.f32 %v145, %v134
  %v153 = vmax.f32 %v146, %v136
  %v154 = vmax.f32 %v147, %v138
  %v155 = vmax.f32 %v148, %v140
  %v156 = vmax.f32 %v149, %v142
  %v157 = vld [vmem:[#allocation3] sm:$0xff]
  %v158 = vld [vmem:[#allocation3 + $0x8] sm:$0xff]
  %v159 = vld [vmem:[#allocation3 + $0x10] sm:$0xff]
  %v160 = vld [vmem:[#allocation3 + $0x18] sm:$0xff]
  %v161 = vld [vmem:[#allocation3 + $0x20] sm:$0xff]
  %v162 = vld [vmem:[#allocation3 + $0x28] sm:$0xff]
  %v163 = vld [vmem:[#allocation3 + $0x30] sm:$0xff]
  %v164 = vsub.f32 %v143, %v150
  %v165 = vsub.f32 %v144, %v151
  %v166 = vsub.f32 %v145, %v152
  %v167 = vsub.f32 %v146, %v153
  %v168 = vsub.f32 %v147, %v154
  %v169 = vsub.f32 %v148, %v155
  %v170 = vsub.f32 %v149, %v156
  %v171 = vmul.f32 %v164, 1.442695
  %v172 = vpow.pop %v171
  %v173 = vmul.f32 %v165, 1.442695
  %v174 = vpow.pop %v173
  %v175 = vmul.f32 %v166, 1.442695
  %v176 = vpow.pop %v175
  %v177 = vmul.f32 %v167, 1.442695
  %v178 = vpow.pop %v177
  %v179 = vmul.f32 %v168, 1.442695
  %v180 = vpow.pop %v179
  %v181 = vmul.f32 %v169, 1.442695
  %v182 = vpow.pop %v181
  %v183 = vmul.f32 %v170, 1.442695
  %v184 = vpow.pop %v183
  %v185 = vmul.f32 %v157, %v172
  %v186 = vmul.f32 %v158, %v174
  %v187 = vmul.f32 %v159, %v176
  %v188 = vmul.f32 %v160, %v178
  %v189 = vmul.f32 %v161, %v180
  %v190 = vmul.f32 %v162, %v182
  %v191 = vmul.f32 %v163, %v184
  %193 = vset.pattern.permute.xlu0 0
  %194 = vperm.xlu0 %193, %v150
  %v195 = vpop.permute.xlu0 %194
  %198 = vset.pattern.permute.xlu0 0
  %199 = vperm.xlu0 %198, %v151
  %v200 = vpop.permute.xlu0 %199
  %203 = vset.pattern.permute.xlu0 0
  %204 = vperm.xlu0 %203, %v152
  %v205 = vpop.permute.xlu0 %204
  %208 = vset.pattern.permute.xlu0 0
  %209 = vperm.xlu0 %208, %v153
  %v210 = vpop.permute.xlu0 %209
  %213 = vset.pattern.permute.xlu0 0
  %214 = vperm.xlu0 %213, %v154
  %v215 = vpop.permute.xlu0 %214
  %218 = vset.pattern.permute.xlu0 0
  %219 = vperm.xlu0 %218, %v155
  %v220 = vpop.permute.xlu0 %219
  %223 = vset.pattern.permute.xlu0 0
  %224 = vperm.xlu0 %223, %v156
  %v225 = vpop.permute.xlu0 %224
  %v227 = vsub.f32 %v104, %v195
  %v228 = vsub.f32 %v106, %v200
  %v229 = vsub.f32 %v109, %v205
  %v230 = vsub.f32 %v111, %v210
  %v231 = vsub.f32 %v114, %v215
  %v232 = vsub.f32 %v116, %v220
  %v233 = vsub.f32 %v119, %v225
  %v234 = vmul.f32 %v227, 1.442695
  %v235 = vpow.pop %v234
  %v236 = vmul.f32 %v228, 1.442695
  %v237 = vpow.pop %v236
  %v238 = vmul.f32 %v229, 1.442695
  %v239 = vpow.pop %v238
  %v240 = vmul.f32 %v230, 1.442695
  %v241 = vpow.pop %v240
  %v242 = vmul.f32 %v231, 1.442695
  %v243 = vpow.pop %v242
  %v244 = vmul.f32 %v232, 1.442695
  %v245 = vpow.pop %v244
  %v246 = vmul.f32 %v233, 1.442695
  %v247 = vpow.pop %v246
  %248 = vadd.xlane.f32.xlu0 %v235
  %v249 = vpop.xlane.xlu0 %248
  %250 = vadd.xlane.f32.xlu0 %v237
  %v251 = vpop.xlane.xlu0 %250
  %252 = vadd.xlane.f32.xlu0 %v239
  %v253 = vpop.xlane.xlu0 %252
  %254 = vadd.xlane.f32.xlu0 %v241
  %v255 = vpop.xlane.xlu0 %254
  %256 = vadd.xlane.f32.xlu0 %v243
  %v257 = vpop.xlane.xlu0 %256
  %258 = vadd.xlane.f32.xlu0 %v245
  %v259 = vpop.xlane.xlu0 %258
  %260 = vadd.xlane.f32.xlu0 %v247
  %v261 = vpop.xlane.xlu0 %260
  %v262 = vadd.f32 %v185, %v249
  %v263 = vadd.f32 %v186, %v251
  %v264 = vadd.f32 %v187, %v253
  %v265 = vadd.f32 %v188, %v255
  %v266 = vadd.f32 %v189, %v257
  %v267 = vadd.f32 %v190, %v259
  %v268 = vadd.f32 %v191, %v261
  %vm269 = vcmask 7168
  %270 = vst.msk [vmem:[#allocation3] sm:$0xff] %vm269, %v262
  %271 = vst.msk [vmem:[#allocation3 + $0x8] sm:$0xff] %vm269, %v263
  %272 = vst.msk [vmem:[#allocation3 + $0x10] sm:$0xff] %vm269, %v264
  %273 = vst.msk [vmem:[#allocation3 + $0x18] sm:$0xff] %vm269, %v265
  %274 = vst.msk [vmem:[#allocation3 + $0x20] sm:$0xff] %vm269, %v266
  %275 = vst.msk [vmem:[#allocation3 + $0x28] sm:$0xff] %vm269, %v267
  %276 = vst.msk [vmem:[#allocation3 + $0x30] sm:$0xff] %vm269, %v268
  %277 = vst.msk [vmem:[#allocation2] sm:$0xff] %vm269, %v150
  %278 = vst.msk [vmem:[#allocation2 + $0x8] sm:$0xff] %vm269, %v151
  %279 = vst.msk [vmem:[#allocation2 + $0x10] sm:$0xff] %vm269, %v152
  %280 = vst.msk [vmem:[#allocation2 + $0x18] sm:$0xff] %vm269, %v153
  %281 = vst.msk [vmem:[#allocation2 + $0x20] sm:$0xff] %vm269, %v154
  %282 = vst.msk [vmem:[#allocation2 + $0x28] sm:$0xff] %vm269, %v155
  %283 = vst.msk [vmem:[#allocation2 + $0x30] sm:$0xff] %vm269, %v156
  // Predicated region
  $region18: #{forward.10} parent=0 // pred_check
    %p284 = pneg %p17
  $region19: #{forward.10} parent=0 // pred_check_branch
    %286 = sbr.rel (%p284) target = $region21
  $region20: #{forward.10} parent=0 // pred_region
    %v287 = vld [vmem:[#allocation2] sm:$0xff]
    %v288 = vld [vmem:[#allocation2 + $0x8] sm:$0xff]
    %v289 = vld [vmem:[#allocation2 + $0x10] sm:$0xff]
    %v290 = vld [vmem:[#allocation2 + $0x18] sm:$0xff]
    %v291 = vld [vmem:[#allocation2 + $0x20] sm:$0xff]
    %v292 = vld [vmem:[#allocation2 + $0x28] sm:$0xff]
    %v293 = vld [vmem:[#allocation2 + $0x30] sm:$0xff]
    %v294 = vld [vmem:[#allocation3] sm:$0xff]
    %v295 = vld [vmem:[#allocation3 + $0x8] sm:$0xff]
    %v296 = vld [vmem:[#allocation3 + $0x10] sm:$0xff]
    %v297 = vld [vmem:[#allocation3 + $0x18] sm:$0xff]
    %v298 = vld [vmem:[#allocation3 + $0x20] sm:$0xff]
    %v299 = vld [vmem:[#allocation3 + $0x28] sm:$0xff]
    %v300 = vld [vmem:[#allocation3 + $0x30] sm:$0xff]
    %v301 = vlog2.pop %v294
    %v302 = vmul.f32 %v301, 0.6931472
    %v303 = vlog2.pop %v295
    %v304 = vmul.f32 %v303, 0.6931472
    %v305 = vlog2.pop %v296
    %v306 = vmul.f32 %v305, 0.6931472
    %v307 = vlog2.pop %v297
    %v308 = vmul.f32 %v307, 0.6931472
    %v309 = vlog2.pop %v298
    %v310 = vmul.f32 %v309, 0.6931472
    %v311 = vlog2.pop %v299
    %v312 = vmul.f32 %v311, 0.6931472
    %v313 = vlog2.pop %v300
    %v314 = vmul.f32 %v313, 0.6931472
    %v315 = vadd.f32 %v287, %v302
    %v316 = vadd.f32 %v288, %v304
    %v317 = vadd.f32 %v289, %v306
    %v318 = vadd.f32 %v290, %v308
    %v319 = vadd.f32 %v291, %v310
    %v320 = vadd.f32 %v292, %v312
    %v321 = vadd.f32 %v293, %v314
    %323 = vset.pattern.permute.xlu0 0
    %324 = vperm.xlu0 %323, %v315
    %v325 = vpop.permute.xlu0 %324
    %328 = vset.pattern.permute.xlu0 0
    %329 = vperm.xlu0 %328, %v316
    %v330 = vpop.permute.xlu0 %329
    %333 = vset.pattern.permute.xlu0 0
    %334 = vperm.xlu0 %333, %v317
    %v335 = vpop.permute.xlu0 %334
    %338 = vset.pattern.permute.xlu0 0
    %339 = vperm.xlu0 %338, %v318
    %v340 = vpop.permute.xlu0 %339
    %343 = vset.pattern.permute.xlu0 0
    %344 = vperm.xlu0 %343, %v319
    %v345 = vpop.permute.xlu0 %344
    %348 = vset.pattern.permute.xlu0 0
    %349 = vperm.xlu0 %348, %v320
    %v350 = vpop.permute.xlu0 %349
    %353 = vset.pattern.permute.xlu0 0
    %354 = vperm.xlu0 %353, %v321
    %v355 = vpop.permute.xlu0 %354
    %357 = vst [vmem:[%s4] sm:$0xff] %v325
    %358 = vst [vmem:[%s4 + $0x8] sm:$0xff] %v330
    %359 = vst [vmem:[%s4 + $0x10] sm:$0xff] %v335
    %360 = vst [vmem:[%s4 + $0x18] sm:$0xff] %v340
    %361 = vst [vmem:[%s4 + $0x20] sm:$0xff] %v345
    %362 = vst [vmem:[%s4 + $0x28] sm:$0xff] %v350
    %363 = vst [vmem:[%s4 + $0x30] sm:$0xff] %v355
  $region21: #{forward.10} parent=0 // pred_fallthru
    _
  // Predicated region
  $region22: #{forward.10} parent=0 // pred_check
    _
  $region23: #{forward.10} parent=0 // pred_check_branch
    %365 = sbr.rel (0) target = $region25
  $region24: #{forward.10} parent=0 // pred_region
    _
  $region25: #{forward.10} parent=0 // pred_fallthru
    _
  // Predicated region
  $region26: #{forward.10} parent=0 // pred_check
    _
  $region27: #{forward.10} parent=0 // pred_check_branch
    %367 = sbr.rel (0) target = $region29
  $region28: #{forward.10} parent=0 // pred_region
    _
  $region29: #{forward.10} parent=0 // pred_fallthru
    _
  // Predicated region
  $region30: #{forward.10} parent=0 // pred_check
    _
  $region31: #{forward.10} parent=0 // pred_check_branch
    %369 = sbr.rel (0) target = $region33
  $region32: #{forward.10} parent=0 // pred_region
    _
  $region33: #{forward.10} parent=0 // pred_fallthru
    _
  // Predicated region
  $region34: #{forward.10} parent=0 // pred_check
    _
  $region35: #{forward.10} parent=0 // pred_check_branch
    %371 = sbr.rel (0) target = $region37
  $region36: #{forward.10} parent=0 // pred_region
    _
  $region37: #{forward.10} parent=0 // pred_fallthru
    _

// kernel: forward.9
$region0: #{forward.9}
  #allocation0 [shape = 'u32[]', space=smem, size = 0x4, offset = 0x4, fixed_abs, tag = 'smem constant byte address 0x4 - core index']
  #allocation1 [shape = 'u32[72,128]{1,0:T(1,128)}', space=vmem, size = 0x9000, scoped, tag = 'internal scratch']
  #allocation2 [shape = 'f32[7,8,128]{2,1,0:T(8,128)}', space=vmem, size = 0x7000, scoped, tag = 'scratch operand']
  #allocation3 [shape = 'f32[8,32]{1,0:T(8,128)}', space=vmem, size = 0x1000, scoped, tag = 'scratch operand']
  #allocation4 [shape = 'f32[8,32]{1,0:T(8,128)}', space=vmem, size = 0x1000, scoped, tag = 'scratch operand']
  #allocation5 [shape = 'f32[8,32]{1,0:T(8,128)}', space=vmem, size = 0x1000, scoped, tag = 'scratch operand']
  %s0 = inlined_call_operand.vmem [shape: f32[7,8,32], index: 0, kind: input, shape index: {}]
  %s1 = inlined_call_operand.vmem [shape: f32[32,128], index: 1, kind: input, shape index: {}]
  %s2 = inlined_call_operand.vmem [shape: f32[32,128], index: 2, kind: input, shape index: {}]
  %s3 = inlined_call_operand.vmem [shape: f32[1,128], index: 3, kind: input, shape index: {}]
  %s4 = inlined_call_operand.vmem [shape: f32[32,128], index: 4, kind: input, shape index: {}]
  %s5 = inlined_call_operand.vmem [shape: f32[32,128], index: 5, kind: input, shape index: {}]
  %s6 = inlined_call_operand.vmem [shape: f32[1,128], index: 6, kind: input, shape index: {}]
  %s7 = inlined_call_operand.vmem [shape: f32[8,32], index: 7, kind: input, shape index: {}]
  %s8 = inlined_call_operand.vmem [shape: f32[8,32], index: 8, kind: input, shape index: {}]
  %s9 = inlined_call_operand.vmem [shape: f32[8,32], index: 9, kind: input, shape index: {}]
  %s10 = inlined_call_operand.vmem [shape: f32[7,8,32], index: 10, kind: output, shape index: {}]
  %s11 = sld [smem:[#allocation0]]
  $region54: #{forward.9} parent=0
    _
  %s13 = ssub.s32 1, %s11
  %s14 = scalar_select 0, %s13, %s11
  // Predicated region
  $region2: #{forward.9} parent=0 // pred_check
    _
  $region3: #{forward.9} parent=0 // pred_check_branch
    %16 = sbr.rel (0) target = $region5
  $region4: #{forward.9} parent=0 // pred_region
    _
  $region5: #{forward.9} parent=0 // pred_fallthru
    _
  // Predicated region
  $region6: #{forward.9} parent=0 // pred_check
    _
  $region7: #{forward.9} parent=0 // pred_check_branch
    %18 = sbr.rel (0) target = $region9
  $region8: #{forward.9} parent=0 // pred_region
    _
  $region9: #{forward.9} parent=0 // pred_fallthru
    _
  // Predicated region
  $region10: #{forward.9} parent=0 // pred_check
    _
  $region11: #{forward.9} parent=0 // pred_check_branch
    %20 = sbr.rel (0) target = $region13
  $region12: #{forward.9} parent=0 // pred_region
    _
  $region13: #{forward.9} parent=0 // pred_fallthru
    _
  // Predicated region
  $region14: #{forward.9} parent=0 // pred_check
    _
  $region15: #{forward.9} parent=0 // pred_check_branch
    %22 = sbr.rel (0) target = $region17
  $region16: #{forward.9} parent=0 // pred_region
    _
  $region17: #{forward.9} parent=0 // pred_fallthru
    _
  // Predicated region
  $region18: #{forward.9} parent=0 // pred_check
    _
  $region19: #{forward.9} parent=0 // pred_check_branch
    %24 = sbr.rel (0) target = $region21
  $region20: #{forward.9} parent=0 // pred_region
    _
  $region21: #{forward.9} parent=0 // pred_fallthru
    _
  // Predicated region
  $region22: #{forward.9} parent=0 // pred_check
    _
  $region23: #{forward.9} parent=0 // pred_check_branch
    %26 = sbr.rel (0) target = $region25
  $region24: #{forward.9} parent=0 // pred_region
    _
  $region25: #{forward.9} parent=0 // pred_fallthru
    _
  // Predicated region
  $region26: #{forward.9} parent=0 // pred_check
    _
  $region27: #{forward.9} parent=0 // pred_check_branch
    %28 = sbr.rel (0) target = $region29
  $region28: #{forward.9} parent=0 // pred_region
    _
  $region29: #{forward.9} parent=0 // pred_fallthru
    _
  // Predicated region
  $region30: #{forward.9} parent=0 // pred_check
    _
  $region31: #{forward.9} parent=0 // pred_check_branch
    %30 = sbr.rel (0) target = $region33
  $region32: #{forward.9} parent=0 // pred_region
    _
  $region33: #{forward.9} parent=0 // pred_fallthru
    _
  // Predicated region
  $region34: #{forward.9} parent=0 // pred_check
    _
  $region35: #{forward.9} parent=0 // pred_check_branch
    %32 = sbr.rel (0) target = $region37
  $region36: #{forward.9} parent=0 // pred_region
    _
  $region37: #{forward.9} parent=0 // pred_fallthru
    _
  // Predicated region
  $region38: #{forward.9} parent=0 // pred_check
    _
  $region39: #{forward.9} parent=0 // pred_check_branch
    %34 = sbr.rel (0) target = $region41
  $region40: #{forward.9} parent=0 // pred_region
    _
  $region41: #{forward.9} parent=0 // pred_fallthru
    _
  %p35 = scmp.eq.s32.totalorder 0, 0
  // Predicated region
  $region42: #{forward.9} parent=0 // pred_check
    %p36 = pneg %p35
  $region43: #{forward.9} parent=0 // pred_check_branch
    %38 = sbr.rel (%p36) target = $region45
  $region44: #{forward.9} parent=0 // pred_region
    %v39 = vld [vmem:[%s7] sm:$0xff]
    %vm40 = vcmask 261120
    %41 = vst.msk [vmem:[#allocation3] sm:$0xff] %vm40, %v39
    %v42 = vld [vmem:[%s8] sm:$0xff]
    %43 = vst.msk [vmem:[#allocation4] sm:$0xff] %vm40, %v42
    %v44 = vld [vmem:[%s9] sm:$0xff]
    %45 = vst.msk [vmem:[#allocation5] sm:$0xff] %vm40, %v44
  $region45: #{forward.9} parent=0 // pred_fallthru
    _
  %v46 = vld [vmem:[%s0] sm:$0xff]
  %v47 = vld [vmem:[%s0 + $0x8] sm:$0xff]
  %v48 = vld [vmem:[%s0 + $0x10] sm:$0xff]
  %v49 = vld [vmem:[%s0 + $0x18] sm:$0xff]
  %v50 = vld [vmem:[%s0 + $0x20] sm:$0xff]
  %v51 = vld [vmem:[%s0 + $0x28] sm:$0xff]
  %v52 = vld [vmem:[%s0 + $0x30] sm:$0xff]
  %v53 = vld [vmem:[%s1] sm:$0xff]
  %v54 = vld [vmem:[%s1 + $0x8] sm:$0xff]
  %v55 = vld [vmem:[%s1 + $0x10] sm:$0xff]
  %v56 = vld [vmem:[%s1 + $0x18] sm:$0xff]
  %v57 = vld [vmem:[%s3] sm:$0x1]
  %v59 = vperm.slane %v57, 0
  %vm61 = vcmask 261120
  %v63 = vsel %vm61, %v46, 0
  %v66 = vsel %vm61, %v47, 0
  %v69 = vsel %vm61, %v48, 0
  %v72 = vsel %vm61, %v49, 0
  %v75 = vsel %vm61, %v50, 0
  %v78 = vsel %vm61, %v51, 0
  %v81 = vsel %vm61, %v52, 0
  %83 = vmatpush.msra.mxu0 0.0
  %84 = vmatpush.msra.mxu0 0.0
  %85 = vmatpush.msra.mxu0 0.0
  %86 = vmatpush.msra.mxu0 0.0
  %87 = vmatpush.msra.mxu0 0.0
  %88 = vmatpush.msra.mxu0 0.0
  %89 = vmatpush.msra.mxu0 0.0
  %90 = vmatpush.msra.mxu0 0.0
  %91 = vmatpush.msra.mxu0 0.0
  %92 = vmatpush.msra.mxu0 0.0
  %93 = vmatpush.msra.mxu0 0.0
  %94 = vmatpush.msra.mxu0 0.0
  %95 = vmatpush.msra.mxu0 %v56
  %96 = vmatpush.msra.mxu0 %v55
  %97 = vmatpush.msra.mxu0 %v54
  %98 = vmatpush.msra.mxu0 %v53
  %99 = vmatmul.f32.gmra.mxu0 %v63
  %v100 = vpop.f32.mrf.mxu0
  %v101 = vadd.f32 %v59, %v100
  %102 = vmatmul.f32.gmra.mxu0 %v66
  %v103 = vpop.f32.mrf.mxu0
  %v104 = vadd.f32 %v59, %v103
  %105 = vmatmul.f32.gmra.mxu0 %v69
  %v106 = vpop.f32.mrf.mxu0
  %v107 = vadd.f32 %v59, %v106
  %108 = vmatmul.f32.gmra.mxu0 %v72
  %v109 = vpop.f32.mrf.mxu0
  %v110 = vadd.f32 %v59, %v109
  %111 = vmatmul.f32.gmra.mxu0 %v75
  %v112 = vpop.f32.mrf.mxu0
  %v113 = vadd.f32 %v59, %v112
  %114 = vmatmul.f32.gmra.mxu0 %v78
  %v115 = vpop.f32.mrf.mxu0
  %v116 = vadd.f32 %v59, %v115
  %117 = vmatmul.f32.gmra.mxu0 %v81
  %v118 = vpop.f32.mrf.mxu0
  %v119 = vadd.f32 %v59, %v118
  %120 = vdwg.mxu0
  %121 = vst [vmem:[#allocation2] sm:$0xff] %v101
  %122 = vst [vmem:[#allocation2 + $0x8] sm:$0xff] %v104
  %123 = vst [vmem:[#allocation2 + $0x10] sm:$0xff] %v107
  %124 = vst [vmem:[#allocation2 + $0x18] sm:$0xff] %v110
  %125 = vst [vmem:[#allocation2 + $0x20] sm:$0xff] %v113
  %126 = vst [vmem:[#allocation2 + $0x28] sm:$0xff] %v116
  %127 = vst [vmem:[#allocation2 + $0x30] sm:$0xff] %v119
  %v128 = vld [vmem:[%s2] sm:$0xff]
  %v129 = vld [vmem:[%s2 + $0x8] sm:$0xff]
  %v130 = vld [vmem:[%s2 + $0x10] sm:$0xff]
  %v131 = vld [vmem:[%s2 + $0x18] sm:$0xff]
  %v132 = vld [vmem:[%s4] sm:$0xff]
  %v133 = vld [vmem:[%s4 + $0x8] sm:$0xff]
  %v134 = vld [vmem:[%s4 + $0x10] sm:$0xff]
  %v135 = vld [vmem:[%s4 + $0x18] sm:$0xff]
  %v136 = vld [vmem:[%s5] sm:$0xff]
  %v137 = vld [vmem:[%s5 + $0x8] sm:$0xff]
  %v138 = vld [vmem:[%s5 + $0x10] sm:$0xff]
  %v139 = vld [vmem:[%s5 + $0x18] sm:$0xff]
  %v140 = vld [vmem:[%s6] sm:$0x1]
  %v142 = vperm.slane %v140, 0
  %v144 = vld [vmem:[#allocation3] sm:$0xff]
  %v145 = vld [vmem:[#allocation4] sm:$0xff]
  %v146 = vld [vmem:[#allocation5] sm:$0xff]
  %v147 = vld [vmem:[#allocation2] sm:$0xff]
  %v149 = vsel %vm61, %v144, 0
  %151 = vmatpush.msra.mxu0 0.0
  %152 = vmatpush.msra.mxu0 0.0
  %153 = vmatpush.msra.mxu0 0.0
  %154 = vmatpush.msra.mxu0 0.0
  %155 = vmatpush.msra.mxu0 0.0
  %156 = vmatpush.msra.mxu0 0.0
  %157 = vmatpush.msra.mxu0 0.0
  %158 = vmatpush.msra.mxu0 0.0
  %159 = vmatpush.msra.mxu0 0.0
  %160 = vmatpush.msra.mxu0 0.0
  %161 = vmatpush.msra.mxu0 0.0
  %162 = vmatpush.msra.mxu0 0.0
  %163 = vmatpush.msra.mxu0 %v131
  %164 = vmatpush.msra.mxu0 %v130
  %165 = vmatpush.msra.mxu0 %v129
  %166 = vmatpush.msra.mxu0 %v128
  %167 = vmatmul.f32.gmra.mxu0 %v149
  %v168 = vpop.f32.mrf.mxu0
  %v169 = vadd.f32 0.0, %v168
  %170 = vdwg.mxu0
  %v171 = vadd.f32 %v147, %v169
  %v172 = vxor.u32 %v171, 2147483648
  %v173 = vmul.f32 %v172, 1.442695
  %v174 = vpow.pop %v173
  %v175 = vadd.f32 %v174, 1.0
  %v176 = vrcp.pop %v175
  %v177 = vmul.f32 %v175, %v176
  %v178 = vsub.f32 1.0, %v177
  %v179 = vmul.f32 %v176, %v178
  %v180 = vadd.f32 %v176, %v179
  %vm181 = vweird.f32 %v175
  %vm182 = vweird.f32 %v176
  %vm183 = vmor %vm181, %vm182
  %v184 = vsel %vm183, %v176, %v180
  %v185 = vand.u32 2147483647, %v175
  %vm186 = vcmp.eq.f32.partialorder %v185, 8.507059e+37
  %v187 = vand.u32 %v175, 2147483648
  %v188 = vor.u32 1.1754944e-38, %v187
  %v189 = vsel %vm186, %v188, %v184
  %v190 = vmul.f32 1.0, %v189
  %v191 = vtanh.pop %v171
  %193 = vrot.lane.b32.xlu0 %v145, 32
  %v194 = vpop.permute.xlu0 %193
  %v196 = vmul.f32 %v190, %v194
  %198 = vrot.lane.b32.xlu0 %v191, 64
  %v199 = vpop.permute.xlu0 %198
  %v201 = vmul.f32 %v190, %v199
  %203 = vrot.lane.b32.xlu0 %v201, 32
  %v204 = vpop.permute.xlu0 %203
  %v206 = vadd.f32 %v196, %v204
  %v207 = vtanh.pop %v206
  %209 = vrot.lane.b32.xlu0 %v207, 64
  %v210 = vpop.permute.xlu0 %209
  %v212 = vmul.f32 %v190, %v210
  %v214 = vsel %vm61, %v146, 0
  %216 = vmatpush.msra.mxu0 0.0
  %217 = vmatpush.msra.mxu0 0.0
  %218 = vmatpush.msra.mxu0 0.0
  %219 = vmatpush.msra.mxu0 0.0
  %220 = vmatpush.msra.mxu0 0.0
  %221 = vmatpush.msra.mxu0 0.0
  %222 = vmatpush.msra.mxu0 0.0
  %223 = vmatpush.msra.mxu0 0.0
  %224 = vmatpush.msra.mxu0 0.0
  %225 = vmatpush.msra.mxu0 0.0
  %226 = vmatpush.msra.mxu0 0.0
  %227 = vmatpush.msra.mxu0 0.0
  %228 = vmatpush.msra.mxu0 %v139
  %229 = vmatpush.msra.mxu0 %v138
  %230 = vmatpush.msra.mxu0 %v137
  %231 = vmatpush.msra.mxu0 %v136
  %232 = vmatmul.f32.gmra.mxu0 %v214
  %v233 = vpop.f32.mrf.mxu0
  %v234 = vadd.f32 0.0, %v233
  %235 = vdwg.mxu0
  %237 = vrot.lane.b32.xlu0 %v212, 32
  %v238 = vpop.permute.xlu0 %237
  %v239 = vsel %vm61, %v238, 0
  %241 = vmatpush.msra.mxu0 0.0
  %242 = vmatpush.msra.mxu0 0.0
  %243 = vmatpush.msra.mxu0 0.0
  %244 = vmatpush.msra.mxu0 0.0
  %245 = vmatpush.msra.mxu0 0.0
  %246 = vmatpush.msra.mxu0 0.0
  %247 = vmatpush.msra.mxu0 0.0
  %248 = vmatpush.msra.mxu0 0.0
  %249 = vmatpush.msra.mxu0 0.0
  %250 = vmatpush.msra.mxu0 0.0
  %251 = vmatpush.msra.mxu0 0.0
  %252 = vmatpush.msra.mxu0 0.0
  %253 = vmatpush.msra.mxu0 %v135
  %254 = vmatpush.msra.mxu0 %v134
  %255 = vmatpush.msra.mxu0 %v133
  %256 = vmatpush.msra.mxu0 %v132
  %257 = vmatmul.f32.gmra.mxu0 %v239
  %v258 = vpop.f32.mrf.mxu0
  %v259 = vadd.f32 %v234, %v258
  %260 = vdwg.mxu0
  %v261 = vadd.f32 %v259, %v142
  %v262 = vxor.u32 %v261, 2147483648
  %v263 = vmul.f32 %v262, 1.442695
  %v264 = vpow.pop %v263
  %v265 = vadd.f32 %v264, 1.0
  %v266 = vrcp.pop %v265
  %v267 = vmul.f32 %v265, %v266
  %v268 = vsub.f32 1.0, %v267
  %v269 = vmul.f32 %v266, %v268
  %v270 = vadd.f32 %v266, %v269
  %vm271 = vweird.f32 %v265
  %vm272 = vweird.f32 %v266
  %vm273 = vmor %vm271, %vm272
  %v274 = vsel %vm273, %v266, %v270
  %v275 = vand.u32 2147483647, %v265
  %vm276 = vcmp.eq.f32.partialorder %v275, 8.507059e+37
  %v277 = vand.u32 %v265, 2147483648
  %v278 = vor.u32 1.1754944e-38, %v277
  %v279 = vsel %vm276, %v278, %v274
  %v280 = vmul.f32 1.0, %v279
  %v281 = vtanh.pop %v261
  %283 = vrot.lane.b32.xlu0 %v281, 64
  %v284 = vpop.permute.xlu0 %283
  %v286 = vmul.f32 %v280, %v284
  %v287 = vtanh.pop %v286
  %289 = vrot.lane.b32.xlu0 %v287, 96
  %v290 = vpop.permute.xlu0 %289
  %v292 = vmul.f32 %v280, %v290
  %294 = vrot.lane.b32.xlu0 %v292, 32
  %v295 = vpop.permute.xlu0 %294
  %297 = vst.msk [vmem:[%s10] sm:$0xff] %vm61, %v295
  %s298 = scalar_lea.vmem [#allocation2], 8
  %v299 = vld [vmem:[%s298] sm:$0xff]
  %300 = vmatpush.msra.mxu0 0.0
  %301 = vmatpush.msra.mxu0 0.0
  %302 = vmatpush.msra.mxu0 0.0
  %303 = vmatpush.msra.mxu0 0.0
  %304 = vmatpush.msra.mxu0 0.0
  %305 = vmatpush.msra.mxu0 0.0
  %306 = vmatpush.msra.mxu0 0.0
  %307 = vmatpush.msra.mxu0 0.0
  %308 = vmatpush.msra.mxu0 0.0
  %309 = vmatpush.msra.mxu0 0.0
  %310 = vmatpush.msra.mxu0 0.0
  %311 = vmatpush.msra.mxu0 0.0
  %312 = vmatpush.msra.mxu0 %v131
  %313 = vmatpush.msra.mxu0 %v130
  %314 = vmatpush.msra.mxu0 %v129
  %315 = vmatpush.msra.mxu0 %v128
  %316 = vmatmul.f32.gmra.mxu0 %v239
  %v317 = vpop.f32.mrf.mxu0
  %v318 = vadd.f32 0.0, %v317
  %319 = vdwg.mxu0
  %v320 = vadd.f32 %v299, %v318
  %v321 = vxor.u32 %v320, 2147483648
  %v322 = vmul.f32 %v321, 1.442695
  %v323 = vpow.pop %v322
  %v324 = vadd.f32 %v323, 1.0
  %v325 = vrcp.pop %v324
  %v326 = vmul.f32 %v324, %v325
  %v327 = vsub.f32 1.0, %v326
  %v328 = vmul.f32 %v325, %v327
  %v329 = vadd.f32 %v325, %v328
  %vm330 = vweird.f32 %v324
  %vm331 = vweird.f32 %v325
  %vm332 = vmor %vm330, %vm331
  %v333 = vsel %vm332, %v325, %v329
  %v334 = vand.u32 2147483647, %v324
  %vm335 = vcmp.eq.f32.partialorder %v334, 8.507059e+37
  %v336 = vand.u32 %v324, 2147483648
  %v337 = vor.u32 1.1754944e-38, %v336
  %v338 = vsel %vm335, %v337, %v333
  %v339 = vmul.f32 1.0, %v338
  %v340 = vtanh.pop %v320
  %v341 = vmul.f32 %v339, %v206
  %343 = vrot.lane.b32.xlu0 %v340, 64
  %v344 = vpop.permute.xlu0 %343
  %v346 = vmul.f32 %v339, %v344
  %348 = vrot.lane.b32.xlu0 %v346, 32
  %v349 = vpop.permute.xlu0 %348
  %v351 = vadd.f32 %v341, %v349
  %v352 = vtanh.pop %v351
  %354 = vrot.lane.b32.xlu0 %v352, 64
  %v355 = vpop.permute.xlu0 %354
  %v357 = vmul.f32 %v339, %v355
  %v358 = vsel %vm61, %v295, 0
  %360 = vmatpush.msra.mxu0 0.0
  %361 = vmatpush.msra.mxu0 0.0
  %362 = vmatpush.msra.mxu0 0.0
  %363 = vmatpush.msra.mxu0 0.0
  %364 = vmatpush.msra.mxu0 0.0
  %365 = vmatpush.msra.mxu0 0.0
  %366 = vmatpush.msra.mxu0 0.0
  %367 = vmatpush.msra.mxu0 0.0
  %368 = vmatpush.msra.mxu0 0.0
  %369 = vmatpush.msra.mxu0 0.0
  %370 = vmatpush.msra.mxu0 0.0
  %371 = vmatpush.msra.mxu0 0.0
  %372 = vmatpush.msra.mxu0 %v139
  %373 = vmatpush.msra.mxu0 %v138
  %374 = vmatpush.msra.mxu0 %v137
  %375 = vmatpush.msra.mxu0 %v136
  %376 = vmatmul.f32.gmra.mxu0 %v358
  %v377 = vpop.f32.mrf.mxu0
  %v378 = vadd.f32 0.0, %v377
  %379 = vdwg.mxu0
  %381 = vrot.lane.b32.xlu0 %v357, 32
  %v382 = vpop.permute.xlu0 %381
  %v383 = vsel %vm61, %v382, 0
  %385 = vmatpush.msra.mxu0 0.0
  %386 = vmatpush.msra.mxu0 0.0
  %387 = vmatpush.msra.mxu0 0.0
  %388 = vmatpush.msra.mxu0 0.0
  %389 = vmatpush.msra.mxu0 0.0
  %390 = vmatpush.msra.mxu0 0.0
  %391 = vmatpush.msra.mxu0 0.0
  %392 = vmatpush.msra.mxu0 0.0
  %393 = vmatpush.msra.mxu0 0.0
  %394 = vmatpush.msra.mxu0 0.0
  %395 = vmatpush.msra.mxu0 0.0
  %396 = vmatpush.msra.mxu0 0.0
  %397 = vmatpush.msra.mxu0 %v135
  %398 = vmatpush.msra.mxu0 %v134
  %399 = vmatpush.msra.mxu0 %v133
  %400 = vmatpush.msra.mxu0 %v132
  %401 = vmatmul.f32.gmra.mxu0 %v383
  %v402 = vpop.f32.mrf.mxu0
  %v403 = vadd.f32 %v378, %v402
  %404 = vdwg.mxu0
  %v405 = vadd.f32 %v403, %v142
  %v406 = vxor.u32 %v405, 2147483648
  %v407 = vmul.f32 %v406, 1.442695
  %v408 = vpow.pop %v407
  %v409 = vadd.f32 %v408, 1.0
  %v410 = vrcp.pop %v409
  %v411 = vmul.f32 %v409, %v410
  %v412 = vsub.f32 1.0, %v411
  %v413 = vmul.f32 %v410, %v412
  %v414 = vadd.f32 %v410, %v413
  %vm415 = vweird.f32 %v409
  %vm416 = vweird.f32 %v410
  %vm417 = vmor %vm415, %vm416
  %v418 = vsel %vm417, %v410, %v414
  %v419 = vand.u32 2147483647, %v409
  %vm420 = vcmp.eq.f32.partialorder %v419, 8.507059e+37
  %v421 = vand.u32 %v409, 2147483648
  %v422 = vor.u32 1.1754944e-38, %v421
  %v423 = vsel %vm420, %v422, %v418
  %v424 = vmul.f32 1.0, %v423
  %v425 = vtanh.pop %v405
  %427 = vrot.lane.b32.xlu0 %v425, 64
  %v428 = vpop.permute.xlu0 %427
  %v430 = vmul.f32 %v424, %v428
  %v431 = vtanh.pop %v430
  %433 = vrot.lane.b32.xlu0 %v431, 96
  %v434 = vpop.permute.xlu0 %433
  %v436 = vmul.f32 %v424, %v434
  %438 = vrot.lane.b32.xlu0 %v436, 32
  %v439 = vpop.permute.xlu0 %438
  %s441 = scalar_lea.vmem %s10, 8
  %442 = vst.msk [vmem:[%s441] sm:$0xff] %vm61, %v439
  %s443 = scalar_lea.vmem [#allocation2], 16
  %v444 = vld [vmem:[%s443] sm:$0xff]
  %445 = vmatpush.msra.mxu0 0.0
  %446 = vmatpush.msra.mxu0 0.0
  %447 = vmatpush.msra.mxu0 0.0
  %448 = vmatpush.msra.mxu0 0.0
  %449 = vmatpush.msra.mxu0 0.0
  %450 = vmatpush.msra.mxu0 0.0
  %451 = vmatpush.msra.mxu0 0.0
  %452 = vmatpush.msra.mxu0 0.0
  %453 = vmatpush.msra.mxu0 0.0
  %454 = vmatpush.msra.mxu0 0.0
  %455 = vmatpush.msra.mxu0 0.0
  %456 = vmatpush.msra.mxu0 0.0
  %457 = vmatpush.msra.mxu0 %v131
  %458 = vmatpush.msra.mxu0 %v130
  %459 = vmatpush.msra.mxu0 %v129
  %460 = vmatpush.msra.mxu0 %v128
  %461 = vmatmul.f32.gmra.mxu0 %v383
  %v462 = vpop.f32.mrf.mxu0
  %v463 = vadd.f32 0.0, %v462
  %464 = vdwg.mxu0
  %v465 = vadd.f32 %v444, %v463
  %v466 = vxor.u32 %v465, 2147483648
  %v467 = vmul.f32 %v466, 1.442695
  %v468 = vpow.pop %v467
  %v469 = vadd.f32 %v468, 1.0
  %v470 = vrcp.pop %v469
  %v471 = vmul.f32 %v469, %v470
  %v472 = vsub.f32 1.0, %v471
  %v473 = vmul.f32 %v470, %v472
  %v474 = vadd.f32 %v470, %v473
  %vm475 = vweird.f32 %v469
  %vm476 = vweird.f32 %v470
  %vm477 = vmor %vm475, %vm476
  %v478 = vsel %vm477, %v470, %v474
  %v479 = vand.u32 2147483647, %v469
  %vm480 = vcmp.eq.f32.partialorder %v479, 8.507059e+37
  %v481 = vand.u32 %v469, 2147483648
  %v482 = vor.u32 1.1754944e-38, %v481
  %v483 = vsel %vm480, %v482, %v478
  %v484 = vmul.f32 1.0, %v483
  %v485 = vtanh.pop %v465
  %v486 = vmul.f32 %v484, %v351
  %488 = vrot.lane.b32.xlu0 %v485, 64
  %v489 = vpop.permute.xlu0 %488
  %v491 = vmul.f32 %v484, %v489
  %493 = vrot.lane.b32.xlu0 %v491, 32
  %v494 = vpop.permute.xlu0 %493
  %v496 = vadd.f32 %v486, %v494
  %v497 = vtanh.pop %v496
  %499 = vrot.lane.b32.xlu0 %v497, 64
  %v500 = vpop.permute.xlu0 %499
  %v502 = vmul.f32 %v484, %v500
  %v503 = vsel %vm61, %v439, 0
  %505 = vmatpush.msra.mxu0 0.0
  %506 = vmatpush.msra.mxu0 0.0
  %507 = vmatpush.msra.mxu0 0.0
  %508 = vmatpush.msra.mxu0 0.0
  %509 = vmatpush.msra.mxu0 0.0
  %510 = vmatpush.msra.mxu0 0.0
  %511 = vmatpush.msra.mxu0 0.0
  %512 = vmatpush.msra.mxu0 0.0
  %513 = vmatpush.msra.mxu0 0.0
  %514 = vmatpush.msra.mxu0 0.0
  %515 = vmatpush.msra.mxu0 0.0
  %516 = vmatpush.msra.mxu0 0.0
  %517 = vmatpush.msra.mxu0 %v139
  %518 = vmatpush.msra.mxu0 %v138
  %519 = vmatpush.msra.mxu0 %v137
  %520 = vmatpush.msra.mxu0 %v136
  %521 = vmatmul.f32.gmra.mxu0 %v503
  %v522 = vpop.f32.mrf.mxu0
  %v523 = vadd.f32 0.0, %v522
  %524 = vdwg.mxu0
  %526 = vrot.lane.b32.xlu0 %v502, 32
  %v527 = vpop.permute.xlu0 %526
  %v528 = vsel %vm61, %v527, 0
  %530 = vmatpush.msra.mxu0 0.0
  %531 = vmatpush.msra.mxu0 0.0
  %532 = vmatpush.msra.mxu0 0.0
  %533 = vmatpush.msra.mxu0 0.0
  %534 = vmatpush.msra.mxu0 0.0
  %535 = vmatpush.msra.mxu0 0.0
  %536 = vmatpush.msra.mxu0 0.0
  %537 = vmatpush.msra.mxu0 0.0
  %538 = vmatpush.msra.mxu0 0.0
  %539 = vmatpush.msra.mxu0 0.0
  %540 = vmatpush.msra.mxu0 0.0
  %541 = vmatpush.msra.mxu0 0.0
  %542 = vmatpush.msra.mxu0 %v135
  %543 = vmatpush.msra.mxu0 %v134
  %544 = vmatpush.msra.mxu0 %v133
  %545 = vmatpush.msra.mxu0 %v132
  %546 = vmatmul.f32.gmra.mxu0 %v528
  %v547 = vpop.f32.mrf.mxu0
  %v548 = vadd.f32 %v523, %v547
  %549 = vdwg.mxu0
  %v550 = vadd.f32 %v548, %v142
  %v551 = vxor.u32 %v550, 2147483648
  %v552 = vmul.f32 %v551, 1.442695
  %v553 = vpow.pop %v552
  %v554 = vadd.f32 %v553, 1.0
  %v555 = vrcp.pop %v554
  %v556 = vmul.f32 %v554, %v555
  %v557 = vsub.f32 1.0, %v556
  %v558 = vmul.f32 %v555, %v557
  %v559 = vadd.f32 %v555, %v558
  %vm560 = vweird.f32 %v554
  %vm561 = vweird.f32 %v555
  %vm562 = vmor %vm560, %vm561
  %v563 = vsel %vm562, %v555, %v559
  %v564 = vand.u32 2147483647, %v554
  %vm565 = vcmp.eq.f32.partialorder %v564, 8.507059e+37
  %v566 = vand.u32 %v554, 2147483648
  %v567 = vor.u32 1.1754944e-38, %v566
  %v568 = vsel %vm565, %v567, %v563
  %v569 = vmul.f32 1.0, %v568
  %v570 = vtanh.pop %v550
  %572 = vrot.lane.b32.xlu0 %v570, 64
  %v573 = vpop.permute.xlu0 %572
  %v575 = vmul.f32 %v569, %v573
  %v576 = vtanh.pop %v575
  %578 = vrot.lane.b32.xlu0 %v576, 96
  %v579 = vpop.permute.xlu0 %578
  %v581 = vmul.f32 %v569, %v579
  %583 = vrot.lane.b32.xlu0 %v581, 32
  %v584 = vpop.permute.xlu0 %583
  %s586 = scalar_lea.vmem %s10, 16
  %587 = vst.msk [vmem:[%s586] sm:$0xff] %vm61, %v584
  %s588 = scalar_lea.vmem [#allocation2], 24
  %v589 = vld [vmem:[%s588] sm:$0xff]
  %590 = vmatpush.msra.mxu0 0.0
  %591 = vmatpush.msra.mxu0 0.0
  %592 = vmatpush.msra.mxu0 0.0
  %593 = vmatpush.msra.mxu0 0.0
  %594 = vmatpush.msra.mxu0 0.0
  %595 = vmatpush.msra.mxu0 0.0
  %596 = vmatpush.msra.mxu0 0.0
  %597 = vmatpush.msra.mxu0 0.0
  %598 = vmatpush.msra.mxu0 0.0
  %599 = vmatpush.msra.mxu0 0.0
  %600 = vmatpush.msra.mxu0 0.0
  %601 = vmatpush.msra.mxu0 0.0
  %602 = vmatpush.msra.mxu0 %v131
  %603 = vmatpush.msra.mxu0 %v130
  %604 = vmatpush.msra.mxu0 %v129
  %605 = vmatpush.msra.mxu0 %v128
  %606 = vmatmul.f32.gmra.mxu0 %v528
  %v607 = vpop.f32.mrf.mxu0
  %v608 = vadd.f32 0.0, %v607
  %609 = vdwg.mxu0
  %v610 = vadd.f32 %v589, %v608
  %v611 = vxor.u32 %v610, 2147483648
  %v612 = vmul.f32 %v611, 1.442695
  %v613 = vpow.pop %v612
  %v614 = vadd.f32 %v613, 1.0
  %v615 = vrcp.pop %v614
  %v616 = vmul.f32 %v614, %v615
  %v617 = vsub.f32 1.0, %v616
  %v618 = vmul.f32 %v615, %v617
  %v619 = vadd.f32 %v615, %v618
  %vm620 = vweird.f32 %v614
  %vm621 = vweird.f32 %v615
  %vm622 = vmor %vm620, %vm621
  %v623 = vsel %vm622, %v615, %v619
  %v624 = vand.u32 2147483647, %v614
  %vm625 = vcmp.eq.f32.partialorder %v624, 8.507059e+37
  %v626 = vand.u32 %v614, 2147483648
  %v627 = vor.u32 1.1754944e-38, %v626
  %v628 = vsel %vm625, %v627, %v623
  %v629 = vmul.f32 1.0, %v628
  %v630 = vtanh.pop %v610
  %v631 = vmul.f32 %v629, %v496
  %633 = vrot.lane.b32.xlu0 %v630, 64
  %v634 = vpop.permute.xlu0 %633
  %v636 = vmul.f32 %v629, %v634
  %638 = vrot.lane.b32.xlu0 %v636, 32
  %v639 = vpop.permute.xlu0 %638
  %v641 = vadd.f32 %v631, %v639
  %v642 = vtanh.pop %v641
  %644 = vrot.lane.b32.xlu0 %v642, 64
  %v645 = vpop.permute.xlu0 %644
  %v647 = vmul.f32 %v629, %v645
  %v648 = vsel %vm61, %v584, 0
  %650 = vmatpush.msra.mxu0 0.0
  %651 = vmatpush.msra.mxu0 0.0
  %652 = vmatpush.msra.mxu0 0.0
  %653 = vmatpush.msra.mxu0 0.0
  %654 = vmatpush.msra.mxu0 0.0
  %655 = vmatpush.msra.mxu0 0.0
  %656 = vmatpush.msra.mxu0 0.0
  %657 = vmatpush.msra.mxu0 0.0
  %658 = vmatpush.msra.mxu0 0.0
  %659 = vmatpush.msra.mxu0 0.0
  %660 = vmatpush.msra.mxu0 0.0
  %661 = vmatpush.msra.mxu0 0.0
  %662 = vmatpush.msra.mxu0 %v139
  %663 = vmatpush.msra.mxu0 %v138
  %664 = vmatpush.msra.mxu0 %v137
  %665 = vmatpush.msra.mxu0 %v136
  %666 = vmatmul.f32.gmra.mxu0 %v648
  %v667 = vpop.f32.mrf.mxu0
  %v668 = vadd.f32 0.0, %v667
  %669 = vdwg.mxu0
  %671 = vrot.lane.b32.xlu0 %v647, 32
  %v672 = vpop.permute.xlu0 %671
  %v673 = vsel %vm61, %v672, 0
  %675 = vmatpush.msra.mxu0 0.0
  %676 = vmatpush.msra.mxu0 0.0
  %677 = vmatpush.msra.mxu0 0.0
  %678 = vmatpush.msra.mxu0 0.0
  %679 = vmatpush.msra.mxu0 0.0
  %680 = vmatpush.msra.mxu0 0.0
  %681 = vmatpush.msra.mxu0 0.0
  %682 = vmatpush.msra.mxu0 0.0
  %683 = vmatpush.msra.mxu0 0.0
  %684 = vmatpush.msra.mxu0 0.0
  %685 = vmatpush.msra.mxu0 0.0
  %686 = vmatpush.msra.mxu0 0.0
  %687 = vmatpush.msra.mxu0 %v135
  %688 = vmatpush.msra.mxu0 %v134
  %689 = vmatpush.msra.mxu0 %v133
  %690 = vmatpush.msra.mxu0 %v132
  %691 = vmatmul.f32.gmra.mxu0 %v673
  %v692 = vpop.f32.mrf.mxu0
  %v693 = vadd.f32 %v668, %v692
  %694 = vdwg.mxu0
  %v695 = vadd.f32 %v693, %v142
  %v696 = vxor.u32 %v695, 2147483648
  %v697 = vmul.f32 %v696, 1.442695
  %v698 = vpow.pop %v697
  %v699 = vadd.f32 %v698, 1.0
  %v700 = vrcp.pop %v699
  %v701 = vmul.f32 %v699, %v700
  %v702 = vsub.f32 1.0, %v701
  %v703 = vmul.f32 %v700, %v702
  %v704 = vadd.f32 %v700, %v703
  %vm705 = vweird.f32 %v699
  %vm706 = vweird.f32 %v700
  %vm707 = vmor %vm705, %vm706
  %v708 = vsel %vm707, %v700, %v704
  %v709 = vand.u32 2147483647, %v699
  %vm710 = vcmp.eq.f32.partialorder %v709, 8.507059e+37
  %v711 = vand.u32 %v699, 2147483648
  %v712 = vor.u32 1.1754944e-38, %v711
  %v713 = vsel %vm710, %v712, %v708
  %v714 = vmul.f32 1.0, %v713
  %v715 = vtanh.pop %v695
  %717 = vrot.lane.b32.xlu0 %v715, 64
  %v718 = vpop.permute.xlu0 %717
  %v720 = vmul.f32 %v714, %v718
  %v721 = vtanh.pop %v720
  %723 = vrot.lane.b32.xlu0 %v721, 96
  %v724 = vpop.permute.xlu0 %723
  %v726 = vmul.f32 %v714, %v724
  %728 = vrot.lane.b32.xlu0 %v726, 32
  %v729 = vpop.permute.xlu0 %728
  %s731 = scalar_lea.vmem %s10, 24
  %732 = vst.msk [vmem:[%s731] sm:$0xff] %vm61, %v729
  %s733 = scalar_lea.vmem [#allocation2], 32
  %v734 = vld [vmem:[%s733] sm:$0xff]
  %735 = vmatpush.msra.mxu0 0.0
  %736 = vmatpush.msra.mxu0 0.0
  %737 = vmatpush.msra.mxu0 0.0
  %738 = vmatpush.msra.mxu0 0.0
  %739 = vmatpush.msra.mxu0 0.0
  %740 = vmatpush.msra.mxu0 0.0
  %741 = vmatpush.msra.mxu0 0.0
  %742 = vmatpush.msra.mxu0 0.0
  %743 = vmatpush.msra.mxu0 0.0
  %744 = vmatpush.msra.mxu0 0.0
  %745 = vmatpush.msra.mxu0 0.0
  %746 = vmatpush.msra.mxu0 0.0
  %747 = vmatpush.msra.mxu0 %v131
  %748 = vmatpush.msra.mxu0 %v130
  %749 = vmatpush.msra.mxu0 %v129
  %750 = vmatpush.msra.mxu0 %v128
  %751 = vmatmul.f32.gmra.mxu0 %v673
  %v752 = vpop.f32.mrf.mxu0
  %v753 = vadd.f32 0.0, %v752
  %754 = vdwg.mxu0
  %v755 = vadd.f32 %v734, %v753
  %v756 = vxor.u32 %v755, 2147483648
  %v757 = vmul.f32 %v756, 1.442695
  %v758 = vpow.pop %v757
  %v759 = vadd.f32 %v758, 1.0
  %v760 = vrcp.pop %v759
  %v761 = vmul.f32 %v759, %v760
  %v762 = vsub.f32 1.0, %v761
  %v763 = vmul.f32 %v760, %v762
  %v764 = vadd.f32 %v760, %v763
  %vm765 = vweird.f32 %v759
  %vm766 = vweird.f32 %v760
  %vm767 = vmor %vm765, %vm766
  %v768 = vsel %vm767, %v760, %v764
  %v769 = vand.u32 2147483647, %v759
  %vm770 = vcmp.eq.f32.partialorder %v769, 8.507059e+37
  %v771 = vand.u32 %v759, 2147483648
  %v772 = vor.u32 1.1754944e-38, %v771
  %v773 = vsel %vm770, %v772, %v768
  %v774 = vmul.f32 1.0, %v773
  %v775 = vtanh.pop %v755
  %v776 = vmul.f32 %v774, %v641
  %778 = vrot.lane.b32.xlu0 %v775, 64
  %v779 = vpop.permute.xlu0 %778
  %v781 = vmul.f32 %v774, %v779
  %783 = vrot.lane.b32.xlu0 %v781, 32
  %v784 = vpop.permute.xlu0 %783
  %v786 = vadd.f32 %v776, %v784
  %v787 = vtanh.pop %v786
  %789 = vrot.lane.b32.xlu0 %v787, 64
  %v790 = vpop.permute.xlu0 %789
  %v792 = vmul.f32 %v774, %v790
  %v793 = vsel %vm61, %v729, 0
  %795 = vmatpush.msra.mxu0 0.0
  %796 = vmatpush.msra.mxu0 0.0
  %797 = vmatpush.msra.mxu0 0.0
  %798 = vmatpush.msra.mxu0 0.0
  %799 = vmatpush.msra.mxu0 0.0
  %800 = vmatpush.msra.mxu0 0.0
  %801 = vmatpush.msra.mxu0 0.0
  %802 = vmatpush.msra.mxu0 0.0
  %803 = vmatpush.msra.mxu0 0.0
  %804 = vmatpush.msra.mxu0 0.0
  %805 = vmatpush.msra.mxu0 0.0
  %806 = vmatpush.msra.mxu0 0.0
  %807 = vmatpush.msra.mxu0 %v139
  %808 = vmatpush.msra.mxu0 %v138
  %809 = vmatpush.msra.mxu0 %v137
  %810 = vmatpush.msra.mxu0 %v136
  %811 = vmatmul.f32.gmra.mxu0 %v793
  %v812 = vpop.f32.mrf.mxu0
  %v813 = vadd.f32 0.0, %v812
  %814 = vdwg.mxu0
  %816 = vrot.lane.b32.xlu0 %v792, 32
  %v817 = vpop.permute.xlu0 %816
  %v818 = vsel %vm61, %v817, 0
  %820 = vmatpush.msra.mxu0 0.0
  %821 = vmatpush.msra.mxu0 0.0
  %822 = vmatpush.msra.mxu0 0.0
  %823 = vmatpush.msra.mxu0 0.0
  %824 = vmatpush.msra.mxu0 0.0
  %825 = vmatpush.msra.mxu0 0.0
  %826 = vmatpush.msra.mxu0 0.0
  %827 = vmatpush.msra.mxu0 0.0
  %828 = vmatpush.msra.mxu0 0.0
  %829 = vmatpush.msra.mxu0 0.0
  %830 = vmatpush.msra.mxu0 0.0
  %831 = vmatpush.msra.mxu0 0.0
  %832 = vmatpush.msra.mxu0 %v135
  %833 = vmatpush.msra.mxu0 %v134
  %834 = vmatpush.msra.mxu0 %v133
  %835 = vmatpush.msra.mxu0 %v132
  %836 = vmatmul.f32.gmra.mxu0 %v818
  %v837 = vpop.f32.mrf.mxu0
  %v838 = vadd.f32 %v813, %v837
  %839 = vdwg.mxu0
  %v840 = vadd.f32 %v838, %v142
  %v841 = vxor.u32 %v840, 2147483648
  %v842 = vmul.f32 %v841, 1.442695
  %v843 = vpow.pop %v842
  %v844 = vadd.f32 %v843, 1.0
  %v845 = vrcp.pop %v844
  %v846 = vmul.f32 %v844, %v845
  %v847 = vsub.f32 1.0, %v846
  %v848 = vmul.f32 %v845, %v847
  %v849 = vadd.f32 %v845, %v848
  %vm850 = vweird.f32 %v844
  %vm851 = vweird.f32 %v845
  %vm852 = vmor %vm850, %vm851
  %v853 = vsel %vm852, %v845, %v849
  %v854 = vand.u32 2147483647, %v844
  %vm855 = vcmp.eq.f32.partialorder %v854, 8.507059e+37
  %v856 = vand.u32 %v844, 2147483648
  %v857 = vor.u32 1.1754944e-38, %v856
  %v858 = vsel %vm855, %v857, %v853
  %v859 = vmul.f32 1.0, %v858
  %v860 = vtanh.pop %v840
  %862 = vrot.lane.b32.xlu0 %v860, 64
  %v863 = vpop.permute.xlu0 %862
  %v865 = vmul.f32 %v859, %v863
  %v866 = vtanh.pop %v865
  %868 = vrot.lane.b32.xlu0 %v866, 96
  %v869 = vpop.permute.xlu0 %868
  %v871 = vmul.f32 %v859, %v869
  %873 = vrot.lane.b32.xlu0 %v871, 32
  %v874 = vpop.permute.xlu0 %873
  %s876 = scalar_lea.vmem %s10, 32
  %877 = vst.msk [vmem:[%s876] sm:$0xff] %vm61, %v874
  %s878 = scalar_lea.vmem [#allocation2], 40
  %v879 = vld [vmem:[%s878] sm:$0xff]
  %880 = vmatpush.msra.mxu0 0.0
  %881 = vmatpush.msra.mxu0 0.0
  %882 = vmatpush.msra.mxu0 0.0
  %883 = vmatpush.msra.mxu0 0.0
  %884 = vmatpush.msra.mxu0 0.0
  %885 = vmatpush.msra.mxu0 0.0
  %886 = vmatpush.msra.mxu0 0.0
  %887 = vmatpush.msra.mxu0 0.0
  %888 = vmatpush.msra.mxu0 0.0
  %889 = vmatpush.msra.mxu0 0.0
  %890 = vmatpush.msra.mxu0 0.0
  %891 = vmatpush.msra.mxu0 0.0
  %892 = vmatpush.msra.mxu0 %v131
  %893 = vmatpush.msra.mxu0 %v130
  %894 = vmatpush.msra.mxu0 %v129
  %895 = vmatpush.msra.mxu0 %v128
  %896 = vmatmul.f32.gmra.mxu0 %v818
  %v897 = vpop.f32.mrf.mxu0
  %v898 = vadd.f32 0.0, %v897
  %899 = vdwg.mxu0
  %v900 = vadd.f32 %v879, %v898
  %v901 = vxor.u32 %v900, 2147483648
  %v902 = vmul.f32 %v901, 1.442695
  %v903 = vpow.pop %v902
  %v904 = vadd.f32 %v903, 1.0
  %v905 = vrcp.pop %v904
  %v906 = vmul.f32 %v904, %v905
  %v907 = vsub.f32 1.0, %v906
  %v908 = vmul.f32 %v905, %v907
  %v909 = vadd.f32 %v905, %v908
  %vm910 = vweird.f32 %v904
  %vm911 = vweird.f32 %v905
  %vm912 = vmor %vm910, %vm911
  %v913 = vsel %vm912, %v905, %v909
  %v914 = vand.u32 2147483647, %v904
  %vm915 = vcmp.eq.f32.partialorder %v914, 8.507059e+37
  %v916 = vand.u32 %v904, 2147483648
  %v917 = vor.u32 1.1754944e-38, %v916
  %v918 = vsel %vm915, %v917, %v913
  %v919 = vmul.f32 1.0, %v918
  %v920 = vtanh.pop %v900
  %v921 = vmul.f32 %v919, %v786
  %923 = vrot.lane.b32.xlu0 %v920, 64
  %v924 = vpop.permute.xlu0 %923
  %v926 = vmul.f32 %v919, %v924
  %928 = vrot.lane.b32.xlu0 %v926, 32
  %v929 = vpop.permute.xlu0 %928
  %v931 = vadd.f32 %v921, %v929
  %v932 = vtanh.pop %v931
  %934 = vrot.lane.b32.xlu0 %v932, 64
  %v935 = vpop.permute.xlu0 %934
  %v937 = vmul.f32 %v919, %v935
  %v938 = vsel %vm61, %v874, 0
  %940 = vmatpush.msra.mxu0 0.0
  %941 = vmatpush.msra.mxu0 0.0
  %942 = vmatpush.msra.mxu0 0.0
  %943 = vmatpush.msra.mxu0 0.0
  %944 = vmatpush.msra.mxu0 0.0
  %945 = vmatpush.msra.mxu0 0.0
  %946 = vmatpush.msra.mxu0 0.0
  %947 = vmatpush.msra.mxu0 0.0
  %948 = vmatpush.msra.mxu0 0.0
  %949 = vmatpush.msra.mxu0 0.0
  %950 = vmatpush.msra.mxu0 0.0
  %951 = vmatpush.msra.mxu0 0.0
  %952 = vmatpush.msra.mxu0 %v139
  %953 = vmatpush.msra.mxu0 %v138
  %954 = vmatpush.msra.mxu0 %v137
  %955 = vmatpush.msra.mxu0 %v136
  %956 = vmatmul.f32.gmra.mxu0 %v938
  %v957 = vpop.f32.mrf.mxu0
  %v958 = vadd.f32 0.0, %v957
  %959 = vdwg.mxu0
  %961 = vrot.lane.b32.xlu0 %v937, 32
  %v962 = vpop.permute.xlu0 %961
  %v963 = vsel %vm61, %v962, 0
  %965 = vmatpush.msra.mxu0 0.0
  %966 = vmatpush.msra.mxu0 0.0
  %967 = vmatpush.msra.mxu0 0.0
  %968 = vmatpush.msra.mxu0 0.0
  %969 = vmatpush.msra.mxu0 0.0
  %970 = vmatpush.msra.mxu0 0.0
  %971 = vmatpush.msra.mxu0 0.0
  %972 = vmatpush.msra.mxu0 0.0
  %973 = vmatpush.msra.mxu0 0.0
  %974 = vmatpush.msra.mxu0 0.0
  %975 = vmatpush.msra.mxu0 0.0
  %976 = vmatpush.msra.mxu0 0.0
  %977 = vmatpush.msra.mxu0 %v135
  %978 = vmatpush.msra.mxu0 %v134
  %979 = vmatpush.msra.mxu0 %v133
  %980 = vmatpush.msra.mxu0 %v132
  %981 = vmatmul.f32.gmra.mxu0 %v963
  %v982 = vpop.f32.mrf.mxu0
  %v983 = vadd.f32 %v958, %v982
  %984 = vdwg.mxu0
  %v985 = vadd.f32 %v983, %v142
  %v986 = vxor.u32 %v985, 2147483648
  %v987 = vmul.f32 %v986, 1.442695
  %v988 = vpow.pop %v987
  %v989 = vadd.f32 %v988, 1.0
  %v990 = vrcp.pop %v989
  %v991 = vmul.f32 %v989, %v990
  %v992 = vsub.f32 1.0, %v991
  %v993 = vmul.f32 %v990, %v992
  %v994 = vadd.f32 %v990, %v993
  %vm995 = vweird.f32 %v989
  %vm996 = vweird.f32 %v990
  %vm997 = vmor %vm995, %vm996
  %v998 = vsel %vm997, %v990, %v994
  %v999 = vand.u32 2147483647, %v989
  %vm1000 = vcmp.eq.f32.partialorder %v999, 8.507059e+37
  %v1001 = vand.u32 %v989, 2147483648
  %v1002 = vor.u32 1.1754944e-38, %v1001
  %v1003 = vsel %vm1000, %v1002, %v998
  %v1004 = vmul.f32 1.0, %v1003
  %v1005 = vtanh.pop %v985
  %1007 = vrot.lane.b32.xlu0 %v1005, 64
  %v1008 = vpop.permute.xlu0 %1007
  %v1010 = vmul.f32 %v1004, %v1008
  %v1011 = vtanh.pop %v1010
  %1013 = vrot.lane.b32.xlu0 %v1011, 96
  %v1014 = vpop.permute.xlu0 %1013
  %v1016 = vmul.f32 %v1004, %v1014
  %1018 = vrot.lane.b32.xlu0 %v1016, 32
  %v1019 = vpop.permute.xlu0 %1018
  %s1021 = scalar_lea.vmem %s10, 40
  %1022 = vst.msk [vmem:[%s1021] sm:$0xff] %vm61, %v1019
  %s1023 = scalar_lea.vmem [#allocation2], 48
  %v1024 = vld [vmem:[%s1023] sm:$0xff]
  %1025 = vmatpush.msra.mxu0 0.0
  %1026 = vmatpush.msra.mxu0 0.0
  %1027 = vmatpush.msra.mxu0 0.0
  %1028 = vmatpush.msra.mxu0 0.0
  %1029 = vmatpush.msra.mxu0 0.0
  %1030 = vmatpush.msra.mxu0 0.0
  %1031 = vmatpush.msra.mxu0 0.0
  %1032 = vmatpush.msra.mxu0 0.0
  %1033 = vmatpush.msra.mxu0 0.0
  %1034 = vmatpush.msra.mxu0 0.0
  %1035 = vmatpush.msra.mxu0 0.0
  %1036 = vmatpush.msra.mxu0 0.0
  %1037 = vmatpush.msra.mxu0 %v131
  %1038 = vmatpush.msra.mxu0 %v130
  %1039 = vmatpush.msra.mxu0 %v129
  %1040 = vmatpush.msra.mxu0 %v128
  %1041 = vmatmul.f32.gmra.mxu0 %v963
  %v1042 = vpop.f32.mrf.mxu0
  %v1043 = vadd.f32 0.0, %v1042
  %1044 = vdwg.mxu0
  %v1045 = vadd.f32 %v1024, %v1043
  %v1046 = vxor.u32 %v1045, 2147483648
  %v1047 = vmul.f32 %v1046, 1.442695
  %v1048 = vpow.pop %v1047
  %v1049 = vadd.f32 %v1048, 1.0
  %v1050 = vrcp.pop %v1049
  %v1051 = vmul.f32 %v1049, %v1050
  %v1052 = vsub.f32 1.0, %v1051
  %v1053 = vmul.f32 %v1050, %v1052
  %v1054 = vadd.f32 %v1050, %v1053
  %vm1055 = vweird.f32 %v1049
  %vm1056 = vweird.f32 %v1050
  %vm1057 = vmor %vm1055, %vm1056
  %v1058 = vsel %vm1057, %v1050, %v1054
  %v1059 = vand.u32 2147483647, %v1049
  %vm1060 = vcmp.eq.f32.partialorder %v1059, 8.507059e+37
  %v1061 = vand.u32 %v1049, 2147483648
  %v1062 = vor.u32 1.1754944e-38, %v1061
  %v1063 = vsel %vm1060, %v1062, %v1058
  %v1064 = vmul.f32 1.0, %v1063
  %v1065 = vtanh.pop %v1045
  %v1066 = vmul.f32 %v1064, %v931
  %1068 = vrot.lane.b32.xlu0 %v1065, 64
  %v1069 = vpop.permute.xlu0 %1068
  %v1071 = vmul.f32 %v1064, %v1069
  %1073 = vrot.lane.b32.xlu0 %v1071, 32
  %v1074 = vpop.permute.xlu0 %1073
  %v1076 = vadd.f32 %v1066, %v1074
  %v1077 = vtanh.pop %v1076
  %1079 = vrot.lane.b32.xlu0 %v1077, 64
  %v1080 = vpop.permute.xlu0 %1079
  %v1082 = vmul.f32 %v1064, %v1080
  %v1083 = vsel %vm61, %v1019, 0
  %1085 = vmatpush.msra.mxu0 0.0
  %1086 = vmatpush.msra.mxu0 0.0
  %1087 = vmatpush.msra.mxu0 0.0
  %1088 = vmatpush.msra.mxu0 0.0
  %1089 = vmatpush.msra.mxu0 0.0
  %1090 = vmatpush.msra.mxu0 0.0
  %1091 = vmatpush.msra.mxu0 0.0
  %1092 = vmatpush.msra.mxu0 0.0
  %1093 = vmatpush.msra.mxu0 0.0
  %1094 = vmatpush.msra.mxu0 0.0
  %1095 = vmatpush.msra.mxu0 0.0
  %1096 = vmatpush.msra.mxu0 0.0
  %1097 = vmatpush.msra.mxu0 %v139
  %1098 = vmatpush.msra.mxu0 %v138
  %1099 = vmatpush.msra.mxu0 %v137
  %1100 = vmatpush.msra.mxu0 %v136
  %1101 = vmatmul.f32.gmra.mxu0 %v1083
  %v1102 = vpop.f32.mrf.mxu0
  %v1103 = vadd.f32 0.0, %v1102
  %1104 = vdwg.mxu0
  %1106 = vrot.lane.b32.xlu0 %v1082, 32
  %v1107 = vpop.permute.xlu0 %1106
  %v1108 = vsel %vm61, %v1107, 0
  %1110 = vmatpush.msra.mxu0 0.0
  %1111 = vmatpush.msra.mxu0 0.0
  %1112 = vmatpush.msra.mxu0 0.0
  %1113 = vmatpush.msra.mxu0 0.0
  %1114 = vmatpush.msra.mxu0 0.0
  %1115 = vmatpush.msra.mxu0 0.0
  %1116 = vmatpush.msra.mxu0 0.0
  %1117 = vmatpush.msra.mxu0 0.0
  %1118 = vmatpush.msra.mxu0 0.0
  %1119 = vmatpush.msra.mxu0 0.0
  %1120 = vmatpush.msra.mxu0 0.0
  %1121 = vmatpush.msra.mxu0 0.0
  %1122 = vmatpush.msra.mxu0 %v135
  %1123 = vmatpush.msra.mxu0 %v134
  %1124 = vmatpush.msra.mxu0 %v133
  %1125 = vmatpush.msra.mxu0 %v132
  %1126 = vmatmul.f32.gmra.mxu0 %v1108
  %v1127 = vpop.f32.mrf.mxu0
  %v1128 = vadd.f32 %v1103, %v1127
  %1129 = vdwg.mxu0
  %v1130 = vadd.f32 %v1128, %v142
  %v1131 = vxor.u32 %v1130, 2147483648
  %v1132 = vmul.f32 %v1131, 1.442695
  %v1133 = vpow.pop %v1132
  %v1134 = vadd.f32 %v1133, 1.0
  %v1135 = vrcp.pop %v1134
  %v1136 = vmul.f32 %v1134, %v1135
  %v1137 = vsub.f32 1.0, %v1136
  %v1138 = vmul.f32 %v1135, %v1137
  %v1139 = vadd.f32 %v1135, %v1138
  %vm1140 = vweird.f32 %v1134
  %vm1141 = vweird.f32 %v1135
  %vm1142 = vmor %vm1140, %vm1141
  %v1143 = vsel %vm1142, %v1135, %v1139
  %v1144 = vand.u32 2147483647, %v1134
  %vm1145 = vcmp.eq.f32.partialorder %v1144, 8.507059e+37
  %v1146 = vand.u32 %v1134, 2147483648
  %v1147 = vor.u32 1.1754944e-38, %v1146
  %v1148 = vsel %vm1145, %v1147, %v1143
  %v1149 = vmul.f32 1.0, %v1148
  %v1150 = vtanh.pop %v1130
  %1152 = vrot.lane.b32.xlu0 %v1150, 64
  %v1153 = vpop.permute.xlu0 %1152
  %v1155 = vmul.f32 %v1149, %v1153
  %v1156 = vtanh.pop %v1155
  %1158 = vrot.lane.b32.xlu0 %v1156, 96
  %v1159 = vpop.permute.xlu0 %1158
  %v1161 = vmul.f32 %v1149, %v1159
  %1163 = vrot.lane.b32.xlu0 %v1161, 32
  %v1164 = vpop.permute.xlu0 %1163
  %s1166 = scalar_lea.vmem %s10, 48
  %1167 = vst.msk [vmem:[%s1166] sm:$0xff] %vm61, %v1164
  %1169 = vst.msk [vmem:[#allocation3] sm:$0xff] %vm61, %v1107
  %1171 = vrot.lane.b32.xlu0 %v1076, 96
  %v1172 = vpop.permute.xlu0 %1171
  %1174 = vst.msk [vmem:[#allocation4] sm:$0xff] %vm61, %v1172
  %1175 = vst.msk [vmem:[#allocation5] sm:$0xff] %vm61, %v1164
  // Predicated region
  $region46: #{forward.9} parent=0 // pred_check
    _
  $region47: #{forward.9} parent=0 // pred_check_branch
    %1177 = sbr.rel (0) target = $region49
  $region48: #{forward.9} parent=0 // pred_region
    _
  $region49: #{forward.9} parent=0 // pred_fallthru
    _
  // Predicated region
  $region50: #{forward.9} parent=0 // pred_check
    _
  $region51: #{forward.9} parent=0 // pred_check_branch
    %1179 = sbr.rel (0) target = $region53
  $region52: #{forward.9} parent=0 // pred_region
    _
  $region53: #{forward.9} parent=0 // pred_fallthru
    _

</llo_original>
